<compile_context>
chip_gen: v7x
topology: tpu7x:2x2x1
jax: 0.10.0
libtpu: 0.0.40
codegen_flags: <defaults>
</compile_context>

<pallas_src>
import jax
import jax.numpy as jnp
from jax import lax
from jax.experimental import pallas as pl
from jax.experimental.pallas import tpu as pltpu


def _make_fused_kernel(H, W, NB, C, cpad, c0, c1, c2):
    """Fused MiniUNet kernel for NB images packed along the lane axis."""
    HW = H * W
    NHW = NB * HW
    TAPS = tuple((dy, dx) for dy in (-1, 0, 1) for dx in (-1, 0, 1))
    # Row offsets of the packed bias vector.
    o0, o1, o2, o3 = 0, c0, c0 + c1, c0 + c1 + c2

    def kernel(x_ref, mask_ref, w0_ref, w1_ref, w2_ref, w3_ref, b_ref,
               o_ref, col0_ref, col_ref):
        # x_ref:    (C, NHW)        input, channel-major, lane-dense
        # mask_ref: (9, NHW)        precomputed per-tap border masks (f32)
        # w0_ref:   (c0, 9*cpad)    enc0 padded im2col weights
        # w1_ref:   (c1, 9*c0)      enc2 im2col weights
        # w2_ref:   (c2, 9*c1)      dec0 im2col weights
        # w3_ref:   (1, c2)         dec2 1x1 weights
        # b_ref:    (pad8(c0+c1+c2+1), 1) packed biases
        # o_ref:    (1, NHW)        output, lane-dense
        # col0_ref: (9*cpad, NHW)   enc0 im2col scratch (padded taps)
        # col_ref:  (9*c1, NHW)     shared im2col scratch (enc2 uses 9*c0 rows)

        def shifted(a, t):
            """Tap-shifted activation with zeroed out-of-image positions."""
            dy, dx = TAPS[t]
            if dy == 0 and dx == 0:
                return a
            rolled = pltpu.roll(a, shift=(-(dy * W + dx)) % NHW, axis=1)
            # Precomputed mask (period HW along lanes) zeroes image borders
            # AND every lane that rolled across a packed-image boundary.
            return rolled * mask_ref[t:t + 1, :]

        def mxu(w, col):
            return lax.dot_general(
                w, col, dimension_numbers=(((1,), (0,)), ((), ())),
                preferred_element_type=jnp.float32)

        # ---- encoder[0]: C -> c0, one padded-K im2col matmul (K = 9*cpad) ---
        # Pad rows multiply zero weight columns; zero the scratch every step
        # so stale VMEM (possibly NaN/Inf) can never leak in (megacore-safe).
        col0_ref[...] = jnp.zeros_like(col0_ref)
        x0 = x_ref[...]
        for t in range(9):
            col0_ref[t * cpad:t * cpad + C, :] = shifted(x0, t)
        a = jnp.maximum(
            mxu(w0_ref[...], col0_ref[...]) + b_ref[o0:o0 + c0, :], 0.0)

        # ---- encoder[2]: c0 -> c1, one deep matmul (K = 9*c0) ---------------
        for t in range(9):
            col_ref[t * c0:(t + 1) * c0, :] = shifted(a, t)
        a = jnp.maximum(
            mxu(w1_ref[...], col_ref[0:9 * c0, :]) + b_ref[o1:o1 + c1, :], 0.0)

        # ---- decoder[0]: c1 -> c2, one deep matmul (K = 9*c1) ---------------
        # TODO(synk): on v7x the 9 per-tap matmuls with MRB accumulation would
        # skip this col writeback; on v5e K-chunking / bf16 staging relieves
        # the single vector-store slot.
        for t in range(9):
            col_ref[t * c1:(t + 1) * c1, :] = shifted(a, t)
        a = jnp.maximum(
            mxu(w2_ref[...], col_ref[...]) + b_ref[o2:o2 + c2, :], 0.0)

        # ---- decoder[2]: 1x1 conv c2 -> 1 (no ReLU), fused store epilogue ---
        o_ref[...] = (mxu(w3_ref[...], a) + b_ref[o3:o3 + 1, :]).astype(o_ref.dtype)

    return kernel


def _choose_nb(B, HW):
    """Images packed per grid step (widens the matmul N dimension)."""
    # ~648 f32 scratch rows per packed image. Keep scratch well under every
    # generation's scoped-VMEM default and keep >= 2 grid steps (when B >= 2)
    # so the "parallel" grid axis splits across v7x's two TensorCores.
    scratch_per_img = (576 + 72) * HW * 4
    max_nb = max(1, (8 * 2 ** 20) // scratch_per_img)
    best = 1
    for nb in range(1, B + 1):
        if B % nb == 0 and nb <= max_nb and B // nb >= min(B, 2):
            best = nb
    return best


def _prep3x3(w):
    """(Cout,Cin,3,3) -> im2col weight (Cout, 9*Cin), tap-major then channel."""
    cout, cin = w.shape[0], w.shape[1]
    return jnp.transpose(w, (0, 2, 3, 1)).reshape(cout, 9 * cin)


@jax.jit
def mini_unet_forward(x_nchw, params):
    """Forward pass matching MiniUNet. Input/output NCHW like PyTorch."""
    B, C, H, W = x_nchw.shape
    HW = H * W

    w0, b0 = params["enc0"]
    w1, b1 = params["enc2"]
    w2, b2 = params["dec0"]
    w3, b3 = params["dec2"]
    c0, c1, c2 = w0.shape[0], w1.shape[0], w2.shape[0]      # 32, 64, 32
    cpad = ((C + 7) // 8) * 8                               # 8 (aligned tap rows)

    NB = _choose_nb(B, HW)
    NHW = NB * HW
    grid = (B // NB,)

    # Channel-major, lane-dense input layout (one small XLA transpose; all
    # per-layer activations then stay (C, N) in VMEM).
    x2d = jnp.transpose(x_nchw, (1, 0, 2, 3)).reshape(C, B * HW)

    # enc0 weights padded to K = 9*cpad: tap-major, C real rows + zero pad rows.
    w0_t = jnp.transpose(w0, (2, 3, 0, 1)).reshape(9, c0, C)
    w0_mat = jnp.transpose(jnp.pad(w0_t, ((0, 0), (0, 0), (0, cpad - C))),
                           (1, 0, 2)).reshape(c0, 9 * cpad)
    w1_mat = _prep3x3(w1)
    w2_mat = _prep3x3(w2)
    w3_mat = w3.reshape(1, c2)

    # All biases packed into one sublane-aligned column vector.
    b_rows = c0 + c1 + c2 + 1
    b_pack = jnp.concatenate(
        [b0, b1, b2, b3, jnp.zeros(((-b_rows) % 8,), jnp.float32)]).reshape(-1, 1)

    # Precomputed per-tap border masks, tiled with period HW along the lanes.
    pix = jnp.arange(HW)
    yy, xx = pix // W, pix % W
    rows = []
    for dy in (-1, 0, 1):
        for dx in (-1, 0, 1):
            rows.append(((yy + dy >= 0) & (yy + dy < H) &
                         (xx + dx >= 0) & (xx + dx < W)).astype(jnp.float32))
    mask = jnp.tile(jnp.stack(rows), (1, NB))               # (9, NHW)

    kernel = _make_fused_kernel(H, W, NB, C, cpad, c0, c1, c2)

    # Explicit VMEM budget: col scratches + double-buffered x/out/mask + weights.
    est = ((9 * cpad + 9 * c1) * NHW * 4
           + 2 * (C + 1 + 9) * NHW * 4
           + 2 * 4 * (w0_mat.size + w1_mat.size + w2_mat.size
                      + w3_mat.size + b_pack.size))
    vmem_limit = int(min(max(2 * est, 16 * 2 ** 20), 56 * 2 ** 20))

    out2d = pl.pallas_call(
        kernel,
        out_shape=jax.ShapeDtypeStruct((1, B * HW), jnp.float32),
        grid=grid,
        in_specs=[
            pl.BlockSpec((C, NHW), lambda i: (0, i)),
            pl.BlockSpec((9, NHW), lambda i: (0, 0)),
            pl.BlockSpec(w0_mat.shape, lambda i: (0, 0)),
            pl.BlockSpec(w1_mat.shape, lambda i: (0, 0)),
            pl.BlockSpec(w2_mat.shape, lambda i: (0, 0)),
            pl.BlockSpec(w3_mat.shape, lambda i: (0, 0)),
            pl.BlockSpec(b_pack.shape, lambda i: (0, 0)),
        ],
        out_specs=pl.BlockSpec((1, NHW), lambda i: (0, i)),
        scratch_shapes=[
            pltpu.VMEM((9 * cpad, NHW), jnp.float32),   # enc0 padded im2col
            pltpu.VMEM((9 * c1, NHW), jnp.float32),     # shared enc2/dec0 im2col
        ],
        compiler_params=pltpu.CompilerParams(
            dimension_semantics=("parallel",),
            vmem_limit_bytes=vmem_limit),
    )(x2d, mask, w0_mat, w1_mat, w2_mat, w3_mat, b_pack)

    return out2d.reshape(B, 1, H, W)   # free metadata reshape


def init_params(key):
    """Deterministic parameter init (PyTorch Conv2d shapes: (Cout,Cin,kH,kW))."""
    def conv_init(key, cout, cin, k):
        kw, kb = jax.random.split(key)
        fan_in = cin * k * k
        bound = 1.0 / jnp.sqrt(fan_in)
        w = jax.random.uniform(kw, (cout, cin, k, k), jnp.float32, -bound, bound)
        b = jax.random.uniform(kb, (cout,), jnp.float32, -bound, bound)
        return w, b

    k1, k2, k3, k4 = jax.random.split(key, 4)
    return {
        "enc0": conv_init(k1, 32, 3, 3),
        "enc2": conv_init(k2, 64, 32, 3),
        "dec0": conv_init(k3, 32, 64, 3),
        "dec2": conv_init(k4, 1, 32, 1),
    }


def _conv_ref(x_nchw, w, b, relu):
    """Pure-JAX reference conv for correctness checking."""
    out = lax.conv_general_dilated(
        x_nchw, w, window_strides=(1, 1), padding="SAME",
        dimension_numbers=("NCHW", "OIHW", "NCHW"))
    out = out + b[None, :, None, None]
    return jnp.maximum(out, 0.0) if relu else out


def _forward_ref(x_nchw, params):
    x = _conv_ref(x_nchw, params["enc0"][0], params["enc0"][1], True)
    x = _conv_ref(x, params["enc2"][0], params["enc2"][1], True)
    x = _conv_ref(x, params["dec0"][0], params["dec0"][1], True)
    x = _conv_ref(x, params["dec2"][0], params["dec2"][1], False)
    return x


if __name__ == "__main__":
    key = jax.random.PRNGKey(0)
    k_params, k_x = jax.random.split(key)

    params = init_params(k_params)
    x = jax.random.normal(k_x, (2, 3, 16, 16), jnp.float32)  # NCHW, like PyTorch

    out = jax.block_until_ready(mini_unet_forward(x, params))
    assert out.shape == (2, 1, 16, 16), out.shape

    ref = jax.block_until_ready(_forward_ref(x, params))
    assert jnp.allclose(out, ref, atol=1e-4, rtol=1e-4), float(
        jnp.max(jnp.abs(out - ref)))

    print("KERNEL_OK")
</pallas_src>

<mosaic_0001>
module attributes {stable_mosaic.version = 11 : i64} {
  func.func @kernel(%arg0: i32, %arg1: memref<3x256xf32, #tpu.memory_space<vmem>>, %arg2: memref<9x256xf32, #tpu.memory_space<vmem>>, %arg3: memref<32x72xf32, #tpu.memory_space<vmem>>, %arg4: memref<64x288xf32, #tpu.memory_space<vmem>>, %arg5: memref<32x576xf32, #tpu.memory_space<vmem>>, %arg6: memref<1x32xf32, #tpu.memory_space<vmem>>, %arg7: memref<136x1xf32, #tpu.memory_space<vmem>>, %arg8: memref<1x256xf32, #tpu.memory_space<vmem>>, %arg9: memref<72x256xf32, #tpu.memory_space<vmem>>, %arg10: memref<576x256xf32, #tpu.memory_space<vmem>>) attributes {dimension_semantics = [#tpu.dimension_semantics<parallel>], iteration_bounds = array<i64: 2>, scalar_prefetch = 0 : i64, scratch_operands = 2 : i64, tpu.core_type = #tpu.core_type<tc>, window_params = [{transform_indices = @transform_0, window_bounds = array<i64: 3, 256>}, {pipeline_mode = #tpu.pipeline_mode<synchronous>, transform_indices = @transform_1, window_bounds = array<i64: 9, 256>}, {pipeline_mode = #tpu.pipeline_mode<synchronous>, transform_indices = @transform_2, window_bounds = array<i64: 32, 72>}, {pipeline_mode = #tpu.pipeline_mode<synchronous>, transform_indices = @transform_3, window_bounds = array<i64: 64, 288>}, {pipeline_mode = #tpu.pipeline_mode<synchronous>, transform_indices = @transform_4, window_bounds = array<i64: 32, 576>}, {pipeline_mode = #tpu.pipeline_mode<synchronous>, transform_indices = @transform_5, window_bounds = array<i64: 1, 32>}, {pipeline_mode = #tpu.pipeline_mode<synchronous>, transform_indices = @transform_6, window_bounds = array<i64: 136, 1>}, {transform_indices = @transform_7, window_bounds = array<i64: 1, 256>}]} {
    %cst = arith.constant 0.000000e+00 : f32
    %0 = vector.broadcast %cst : f32 to vector<72x256xf32>
    %c0 = arith.constant 0 : index
    %c0_0 = arith.constant 0 : index
    %1 = vector.load %arg9[%c0, %c0_0] : memref<72x256xf32, #tpu.memory_space<vmem>>, vector<72x256xf32>
    tpu.vector_store %arg9[%c0, %c0_0], %0 {strides = array<i32>} : memref<72x256xf32, #tpu.memory_space<vmem>>, vector<72x256xf32>,
    %c0_1 = arith.constant 0 : index
    %c0_2 = arith.constant 0 : index
    %2 = vector.load %arg1[%c0_1, %c0_2] : memref<3x256xf32, #tpu.memory_space<vmem>>, vector<3x256xf32>
    %c17_i32 = arith.constant 17 : i32
    %3 = tpu.dynamic_rotate %2 by %c17_i32 dim 1 : vector<3x256xf32>, i32 -> vector<3x256xf32>
    %c0_3 = arith.constant 0 : index
    %c0_4 = arith.constant 0 : index
    %4 = vector.load %arg2[%c0_3, %c0_4] : memref<9x256xf32, #tpu.memory_space<vmem>>, vector<1x256xf32>
    %5 = vector.broadcast %4 : vector<1x256xf32> to vector<3x256xf32>
    %6 = arith.mulf %3, %5 : vector<3x256xf32>
    %c0_5 = arith.constant 0 : index
    %c0_6 = arith.constant 0 : index
    %7 = vector.load %arg9[%c0_5, %c0_6] : memref<72x256xf32, #tpu.memory_space<vmem>>, vector<3x256xf32>
    tpu.vector_store %arg9[%c0_5, %c0_6], %6 {strides = array<i32>} : memref<72x256xf32, #tpu.memory_space<vmem>>, vector<3x256xf32>,
    %c16_i32 = arith.constant 16 : i32
    %8 = tpu.dynamic_rotate %2 by %c16_i32 dim 1 : vector<3x256xf32>, i32 -> vector<3x256xf32>
    %c1 = arith.constant 1 : index
    %c0_7 = arith.constant 0 : index
    %9 = vector.load %arg2[%c1, %c0_7] : memref<9x256xf32, #tpu.memory_space<vmem>>, vector<1x256xf32>
    %10 = vector.broadcast %9 : vector<1x256xf32> to vector<3x256xf32>
    %11 = arith.mulf %8, %10 : vector<3x256xf32>
    %c8 = arith.constant 8 : index
    %c0_8 = arith.constant 0 : index
    %12 = vector.load %arg9[%c8, %c0_8] : memref<72x256xf32, #tpu.memory_space<vmem>>, vector<3x256xf32>
    tpu.vector_store %arg9[%c8, %c0_8], %11 {strides = array<i32>} : memref<72x256xf32, #tpu.memory_space<vmem>>, vector<3x256xf32>,
    %c15_i32 = arith.constant 15 : i32
    %13 = tpu.dynamic_rotate %2 by %c15_i32 dim 1 : vector<3x256xf32>, i32 -> vector<3x256xf32>
    %c2 = arith.constant 2 : index
    %c0_9 = arith.constant 0 : index
    %14 = vector.load %arg2[%c2, %c0_9] : memref<9x256xf32, #tpu.memory_space<vmem>>, vector<1x256xf32>
    %15 = vector.broadcast %14 : vector<1x256xf32> to vector<3x256xf32>
    %16 = arith.mulf %13, %15 : vector<3x256xf32>
    %c16 = arith.constant 16 : index
    %c0_10 = arith.constant 0 : index
    %17 = vector.load %arg9[%c16, %c0_10] : memref<72x256xf32, #tpu.memory_space<vmem>>, vector<3x256xf32>
    tpu.vector_store %arg9[%c16, %c0_10], %16 {strides = array<i32>} : memref<72x256xf32, #tpu.memory_space<vmem>>, vector<3x256xf32>,
    %c1_i32 = arith.constant 1 : i32
    %18 = tpu.dynamic_rotate %2 by %c1_i32 dim 1 : vector<3x256xf32>, i32 -> vector<3x256xf32>
    %c3 = arith.constant 3 : index
    %c0_11 = arith.constant 0 : index
    %19 = vector.load %arg2[%c3, %c0_11] : memref<9x256xf32, #tpu.memory_space<vmem>>, vector<1x256xf32>
    %20 = vector.broadcast %19 : vector<1x256xf32> to vector<3x256xf32>
    %21 = arith.mulf %18, %20 : vector<3x256xf32>
    %c24 = arith.constant 24 : index
    %c0_12 = arith.constant 0 : index
    %22 = vector.load %arg9[%c24, %c0_12] : memref<72x256xf32, #tpu.memory_space<vmem>>, vector<3x256xf32>
    tpu.vector_store %arg9[%c24, %c0_12], %21 {strides = array<i32>} : memref<72x256xf32, #tpu.memory_space<vmem>>, vector<3x256xf32>,
    %c32 = arith.constant 32 : index
    %c0_13 = arith.constant 0 : index
    %23 = vector.load %arg9[%c32, %c0_13] : memref<72x256xf32, #tpu.memory_space<vmem>>, vector<3x256xf32>
    tpu.vector_store %arg9[%c32, %c0_13], %2 {strides = array<i32>} : memref<72x256xf32, #tpu.memory_space<vmem>>, vector<3x256xf32>,
    %c255_i32 = arith.constant 255 : i32
    %24 = tpu.dynamic_rotate %2 by %c255_i32 dim 1 : vector<3x256xf32>, i32 -> vector<3x256xf32>
    %c5 = arith.constant 5 : index
    %c0_14 = arith.constant 0 : index
    %25 = vector.load %arg2[%c5, %c0_14] : memref<9x256xf32, #tpu.memory_space<vmem>>, vector<1x256xf32>
    %26 = vector.broadcast %25 : vector<1x256xf32> to vector<3x256xf32>
    %27 = arith.mulf %24, %26 : vector<3x256xf32>
    %c40 = arith.constant 40 : index
    %c0_15 = arith.constant 0 : index
    %28 = vector.load %arg9[%c40, %c0_15] : memref<72x256xf32, #tpu.memory_space<vmem>>, vector<3x256xf32>
    tpu.vector_store %arg9[%c40, %c0_15], %27 {strides = array<i32>} : memref<72x256xf32, #tpu.memory_space<vmem>>, vector<3x256xf32>,
    %c241_i32 = arith.constant 241 : i32
    %29 = tpu.dynamic_rotate %2 by %c241_i32 dim 1 : vector<3x256xf32>, i32 -> vector<3x256xf32>
    %c6 = arith.constant 6 : index
    %c0_16 = arith.constant 0 : index
    %30 = vector.load %arg2[%c6, %c0_16] : memref<9x256xf32, #tpu.memory_space<vmem>>, vector<1x256xf32>
    %31 = vector.broadcast %30 : vector<1x256xf32> to vector<3x256xf32>
    %32 = arith.mulf %29, %31 : vector<3x256xf32>
    %c48 = arith.constant 48 : index
    %c0_17 = arith.constant 0 : index
    %33 = vector.load %arg9[%c48, %c0_17] : memref<72x256xf32, #tpu.memory_space<vmem>>, vector<3x256xf32>
    tpu.vector_store %arg9[%c48, %c0_17], %32 {strides = array<i32>} : memref<72x256xf32, #tpu.memory_space<vmem>>, vector<3x256xf32>,
    %c240_i32 = arith.constant 240 : i32
    %34 = tpu.dynamic_rotate %2 by %c240_i32 dim 1 : vector<3x256xf32>, i32 -> vector<3x256xf32>
    %c7 = arith.constant 7 : index
    %c0_18 = arith.constant 0 : index
    %35 = vector.load %arg2[%c7, %c0_18] : memref<9x256xf32, #tpu.memory_space<vmem>>, vector<1x256xf32>
    %36 = vector.broadcast %35 : vector<1x256xf32> to vector<3x256xf32>
    %37 = arith.mulf %34, %36 : vector<3x256xf32>
    %c56 = arith.constant 56 : index
    %c0_19 = arith.constant 0 : index
    %38 = vector.load %arg9[%c56, %c0_19] : memref<72x256xf32, #tpu.memory_space<vmem>>, vector<3x256xf32>
    tpu.vector_store %arg9[%c56, %c0_19], %37 {strides = array<i32>} : memref<72x256xf32, #tpu.memory_space<vmem>>, vector<3x256xf32>,
    %c239_i32 = arith.constant 239 : i32
    %39 = tpu.dynamic_rotate %2 by %c239_i32 dim 1 : vector<3x256xf32>, i32 -> vector<3x256xf32>
    %c8_20 = arith.constant 8 : index
    %c0_21 = arith.constant 0 : index
    %40 = vector.load %arg2[%c8_20, %c0_21] : memref<9x256xf32, #tpu.memory_space<vmem>>, vector<1x256xf32>
    %41 = vector.broadcast %40 : vector<1x256xf32> to vector<3x256xf32>
    %42 = arith.mulf %39, %41 : vector<3x256xf32>
    %c64 = arith.constant 64 : index
    %c0_22 = arith.constant 0 : index
    %43 = vector.load %arg9[%c64, %c0_22] : memref<72x256xf32, #tpu.memory_space<vmem>>, vector<3x256xf32>
    tpu.vector_store %arg9[%c64, %c0_22], %42 {strides = array<i32>} : memref<72x256xf32, #tpu.memory_space<vmem>>, vector<3x256xf32>,
    %c0_23 = arith.constant 0 : index
    %c0_24 = arith.constant 0 : index
    %44 = vector.load %arg3[%c0_23, %c0_24] : memref<32x72xf32, #tpu.memory_space<vmem>>, vector<32x72xf32>
    %c0_25 = arith.constant 0 : index
    %c0_26 = arith.constant 0 : index
    %45 = vector.load %arg9[%c0_25, %c0_26] : memref<72x256xf32, #tpu.memory_space<vmem>>, vector<72x256xf32>
    %cst_27 = arith.constant dense<0.000000e+00> : vector<32x256xf32>
    %46 = tpu.matmul %44, %45, %cst_27 {dimension_numbers = #tpu.dot_dimension_numbers<[1], [0], [0], [1], [0, 0, 1, 1], [], []>} : vector<32x72xf32>, vector<72x256xf32>, vector<32x256xf32> -> vector<32x256xf32>
    %c0_28 = arith.constant 0 : index
    %c0_29 = arith.constant 0 : index
    %47 = vector.load %arg7[%c0_28, %c0_29] : memref<136x1xf32, #tpu.memory_space<vmem>>, vector<32x1xf32>
    %48 = vector.broadcast %47 : vector<32x1xf32> to vector<32x256xf32>
    %49 = arith.addf %46, %48 : vector<32x256xf32>
    %cst_30 = arith.constant 0.000000e+00 : f32
    %50 = vector.broadcast %cst_30 : f32 to vector<32x256xf32>
    %51 = arith.maximumf %49, %50 : vector<32x256xf32>
    %c17_i32_31 = arith.constant 17 : i32
    %52 = tpu.dynamic_rotate %51 by %c17_i32_31 dim 1 : vector<32x256xf32>, i32 -> vector<32x256xf32>
    %c0_32 = arith.constant 0 : index
    %c0_33 = arith.constant 0 : index
    %53 = vector.load %arg2[%c0_32, %c0_33] : memref<9x256xf32, #tpu.memory_space<vmem>>, vector<1x256xf32>
    %54 = vector.broadcast %53 : vector<1x256xf32> to vector<32x256xf32>
    %55 = arith.mulf %52, %54 : vector<32x256xf32>
    %c0_34 = arith.constant 0 : index
    %c0_35 = arith.constant 0 : index
    %56 = vector.load %arg10[%c0_34, %c0_35] : memref<576x256xf32, #tpu.memory_space<vmem>>, vector<32x256xf32>
    tpu.vector_store %arg10[%c0_34, %c0_35], %55 {strides = array<i32>} : memref<576x256xf32, #tpu.memory_space<vmem>>, vector<32x256xf32>,
    %c16_i32_36 = arith.constant 16 : i32
    %57 = tpu.dynamic_rotate %51 by %c16_i32_36 dim 1 : vector<32x256xf32>, i32 -> vector<32x256xf32>
    %c1_37 = arith.constant 1 : index
    %c0_38 = arith.constant 0 : index
    %58 = vector.load %arg2[%c1_37, %c0_38] : memref<9x256xf32, #tpu.memory_space<vmem>>, vector<1x256xf32>
    %59 = vector.broadcast %58 : vector<1x256xf32> to vector<32x256xf32>
    %60 = arith.mulf %57, %59 : vector<32x256xf32>
    %c32_39 = arith.constant 32 : index
    %c0_40 = arith.constant 0 : index
    %61 = vector.load %arg10[%c32_39, %c0_40] : memref<576x256xf32, #tpu.memory_space<vmem>>, vector<32x256xf32>
    tpu.vector_store %arg10[%c32_39, %c0_40], %60 {strides = array<i32>} : memref<576x256xf32, #tpu.memory_space<vmem>>, vector<32x256xf32>,
    %c15_i32_41 = arith.constant 15 : i32
    %62 = tpu.dynamic_rotate %51 by %c15_i32_41 dim 1 : vector<32x256xf32>, i32 -> vector<32x256xf32>
    %c2_42 = arith.constant 2 : index
    %c0_43 = arith.constant 0 : index
    %63 = vector.load %arg2[%c2_42, %c0_43] : memref<9x256xf32, #tpu.memory_space<vmem>>, vector<1x256xf32>
    %64 = vector.broadcast %63 : vector<1x256xf32> to vector<32x256xf32>
    %65 = arith.mulf %62, %64 : vector<32x256xf32>
    %c64_44 = arith.constant 64 : index
    %c0_45 = arith.constant 0 : index
    %66 = vector.load %arg10[%c64_44, %c0_45] : memref<576x256xf32, #tpu.memory_space<vmem>>, vector<32x256xf32>
    tpu.vector_store %arg10[%c64_44, %c0_45], %65 {strides = array<i32>} : memref<576x256xf32, #tpu.memory_space<vmem>>, vector<32x256xf32>,
    %c1_i32_46 = arith.constant 1 : i32
    %67 = tpu.dynamic_rotate %51 by %c1_i32_46 dim 1 : vector<32x256xf32>, i32 -> vector<32x256xf32>
    %c3_47 = arith.constant 3 : index
    %c0_48 = arith.constant 0 : index
    %68 = vector.load %arg2[%c3_47, %c0_48] : memref<9x256xf32, #tpu.memory_space<vmem>>, vector<1x256xf32>
    %69 = vector.broadcast %68 : vector<1x256xf32> to vector<32x256xf32>
    %70 = arith.mulf %67, %69 : vector<32x256xf32>
    %c96 = arith.constant 96 : index
    %c0_49 = arith.constant 0 : index
    %71 = vector.load %arg10[%c96, %c0_49] : memref<576x256xf32, #tpu.memory_space<vmem>>, vector<32x256xf32>
    tpu.vector_store %arg10[%c96, %c0_49], %70 {strides = array<i32>} : memref<576x256xf32, #tpu.memory_space<vmem>>, vector<32x256xf32>,
    %c128 = arith.constant 128 : index
    %c0_50 = arith.constant 0 : index
    %72 = vector.load %arg10[%c128, %c0_50] : memref<576x256xf32, #tpu.memory_space<vmem>>, vector<32x256xf32>
    tpu.vector_store %arg10[%c128, %c0_50], %51 {strides = array<i32>} : memref<576x256xf32, #tpu.memory_space<vmem>>, vector<32x256xf32>,
    %c255_i32_51 = arith.constant 255 : i32
    %73 = tpu.dynamic_rotate %51 by %c255_i32_51 dim 1 : vector<32x256xf32>, i32 -> vector<32x256xf32>
    %c5_52 = arith.constant 5 : index
    %c0_53 = arith.constant 0 : index
    %74 = vector.load %arg2[%c5_52, %c0_53] : memref<9x256xf32, #tpu.memory_space<vmem>>, vector<1x256xf32>
    %75 = vector.broadcast %74 : vector<1x256xf32> to vector<32x256xf32>
    %76 = arith.mulf %73, %75 : vector<32x256xf32>
    %c160 = arith.constant 160 : index
    %c0_54 = arith.constant 0 : index
    %77 = vector.load %arg10[%c160, %c0_54] : memref<576x256xf32, #tpu.memory_space<vmem>>, vector<32x256xf32>
    tpu.vector_store %arg10[%c160, %c0_54], %76 {strides = array<i32>} : memref<576x256xf32, #tpu.memory_space<vmem>>, vector<32x256xf32>,
    %c241_i32_55 = arith.constant 241 : i32
    %78 = tpu.dynamic_rotate %51 by %c241_i32_55 dim 1 : vector<32x256xf32>, i32 -> vector<32x256xf32>
    %c6_56 = arith.constant 6 : index
    %c0_57 = arith.constant 0 : index
    %79 = vector.load %arg2[%c6_56, %c0_57] : memref<9x256xf32, #tpu.memory_space<vmem>>, vector<1x256xf32>
    %80 = vector.broadcast %79 : vector<1x256xf32> to vector<32x256xf32>
    %81 = arith.mulf %78, %80 : vector<32x256xf32>
    %c192 = arith.constant 192 : index
    %c0_58 = arith.constant 0 : index
    %82 = vector.load %arg10[%c192, %c0_58] : memref<576x256xf32, #tpu.memory_space<vmem>>, vector<32x256xf32>
    tpu.vector_store %arg10[%c192, %c0_58], %81 {strides = array<i32>} : memref<576x256xf32, #tpu.memory_space<vmem>>, vector<32x256xf32>,
    %c240_i32_59 = arith.constant 240 : i32
    %83 = tpu.dynamic_rotate %51 by %c240_i32_59 dim 1 : vector<32x256xf32>, i32 -> vector<32x256xf32>
    %c7_60 = arith.constant 7 : index
    %c0_61 = arith.constant 0 : index
    %84 = vector.load %arg2[%c7_60, %c0_61] : memref<9x256xf32, #tpu.memory_space<vmem>>, vector<1x256xf32>
    %85 = vector.broadcast %84 : vector<1x256xf32> to vector<32x256xf32>
    %86 = arith.mulf %83, %85 : vector<32x256xf32>
    %c224 = arith.constant 224 : index
    %c0_62 = arith.constant 0 : index
    %87 = vector.load %arg10[%c224, %c0_62] : memref<576x256xf32, #tpu.memory_space<vmem>>, vector<32x256xf32>
    tpu.vector_store %arg10[%c224, %c0_62], %86 {strides = array<i32>} : memref<576x256xf32, #tpu.memory_space<vmem>>, vector<32x256xf32>,
    %c239_i32_63 = arith.constant 239 : i32
    %88 = tpu.dynamic_rotate %51 by %c239_i32_63 dim 1 : vector<32x256xf32>, i32 -> vector<32x256xf32>
    %c8_64 = arith.constant 8 : index
    %c0_65 = arith.constant 0 : index
    %89 = vector.load %arg2[%c8_64, %c0_65] : memref<9x256xf32, #tpu.memory_space<vmem>>, vector<1x256xf32>
    %90 = vector.broadcast %89 : vector<1x256xf32> to vector<32x256xf32>
    %91 = arith.mulf %88, %90 : vector<32x256xf32>
    %c256 = arith.constant 256 : index
    %c0_66 = arith.constant 0 : index
    %92 = vector.load %arg10[%c256, %c0_66] : memref<576x256xf32, #tpu.memory_space<vmem>>, vector<32x256xf32>
    tpu.vector_store %arg10[%c256, %c0_66], %91 {strides = array<i32>} : memref<576x256xf32, #tpu.memory_space<vmem>>, vector<32x256xf32>,
    %c0_67 = arith.constant 0 : index
    %c0_68 = arith.constant 0 : index
    %93 = vector.load %arg4[%c0_67, %c0_68] : memref<64x288xf32, #tpu.memory_space<vmem>>, vector<64x288xf32>
    %c0_69 = arith.constant 0 : index
    %c0_70 = arith.constant 0 : index
    %94 = vector.load %arg10[%c0_69, %c0_70] : memref<576x256xf32, #tpu.memory_space<vmem>>, vector<288x256xf32>
    %cst_71 = arith.constant dense<0.000000e+00> : vector<64x256xf32>
    %95 = tpu.matmul %93, %94, %cst_71 {dimension_numbers = #tpu.dot_dimension_numbers<[1], [0], [0], [1], [0, 0, 1, 1], [], []>} : vector<64x288xf32>, vector<288x256xf32>, vector<64x256xf32> -> vector<64x256xf32>
    %c32_72 = arith.constant 32 : index
    %c0_73 = arith.constant 0 : index
    %96 = vector.load %arg7[%c32_72, %c0_73] : memref<136x1xf32, #tpu.memory_space<vmem>>, vector<64x1xf32>
    %97 = vector.broadcast %96 : vector<64x1xf32> to vector<64x256xf32>
    %98 = arith.addf %95, %97 : vector<64x256xf32>
    %cst_74 = arith.constant 0.000000e+00 : f32
    %99 = vector.broadcast %cst_74 : f32 to vector<64x256xf32>
    %100 = arith.maximumf %98, %99 : vector<64x256xf32>
    %c17_i32_75 = arith.constant 17 : i32
    %101 = tpu.dynamic_rotate %100 by %c17_i32_75 dim 1 : vector<64x256xf32>, i32 -> vector<64x256xf32>
    %c0_76 = arith.constant 0 : index
    %c0_77 = arith.constant 0 : index
    %102 = vector.load %arg2[%c0_76, %c0_77] : memref<9x256xf32, #tpu.memory_space<vmem>>, vector<1x256xf32>
    %103 = vector.broadcast %102 : vector<1x256xf32> to vector<64x256xf32>
    %104 = arith.mulf %101, %103 : vector<64x256xf32>
    %c0_78 = arith.constant 0 : index
    %c0_79 = arith.constant 0 : index
    %105 = vector.load %arg10[%c0_78, %c0_79] : memref<576x256xf32, #tpu.memory_space<vmem>>, vector<64x256xf32>
    tpu.vector_store %arg10[%c0_78, %c0_79], %104 {strides = array<i32>} : memref<576x256xf32, #tpu.memory_space<vmem>>, vector<64x256xf32>,
    %c16_i32_80 = arith.constant 16 : i32
    %106 = tpu.dynamic_rotate %100 by %c16_i32_80 dim 1 : vector<64x256xf32>, i32 -> vector<64x256xf32>
    %c1_81 = arith.constant 1 : index
    %c0_82 = arith.constant 0 : index
    %107 = vector.load %arg2[%c1_81, %c0_82] : memref<9x256xf32, #tpu.memory_space<vmem>>, vector<1x256xf32>
    %108 = vector.broadcast %107 : vector<1x256xf32> to vector<64x256xf32>
    %109 = arith.mulf %106, %108 : vector<64x256xf32>
    %c64_83 = arith.constant 64 : index
    %c0_84 = arith.constant 0 : index
    %110 = vector.load %arg10[%c64_83, %c0_84] : memref<576x256xf32, #tpu.memory_space<vmem>>, vector<64x256xf32>
    tpu.vector_store %arg10[%c64_83, %c0_84], %109 {strides = array<i32>} : memref<576x256xf32, #tpu.memory_space<vmem>>, vector<64x256xf32>,
    %c15_i32_85 = arith.constant 15 : i32
    %111 = tpu.dynamic_rotate %100 by %c15_i32_85 dim 1 : vector<64x256xf32>, i32 -> vector<64x256xf32>
    %c2_86 = arith.constant 2 : index
    %c0_87 = arith.constant 0 : index
    %112 = vector.load %arg2[%c2_86, %c0_87] : memref<9x256xf32, #tpu.memory_space<vmem>>, vector<1x256xf32>
    %113 = vector.broadcast %112 : vector<1x256xf32> to vector<64x256xf32>
    %114 = arith.mulf %111, %113 : vector<64x256xf32>
    %c128_88 = arith.constant 128 : index
    %c0_89 = arith.constant 0 : index
    %115 = vector.load %arg10[%c128_88, %c0_89] : memref<576x256xf32, #tpu.memory_space<vmem>>, vector<64x256xf32>
    tpu.vector_store %arg10[%c128_88, %c0_89], %114 {strides = array<i32>} : memref<576x256xf32, #tpu.memory_space<vmem>>, vector<64x256xf32>,
    %c1_i32_90 = arith.constant 1 : i32
    %116 = tpu.dynamic_rotate %100 by %c1_i32_90 dim 1 : vector<64x256xf32>, i32 -> vector<64x256xf32>
    %c3_91 = arith.constant 3 : index
    %c0_92 = arith.constant 0 : index
    %117 = vector.load %arg2[%c3_91, %c0_92] : memref<9x256xf32, #tpu.memory_space<vmem>>, vector<1x256xf32>
    %118 = vector.broadcast %117 : vector<1x256xf32> to vector<64x256xf32>
    %119 = arith.mulf %116, %118 : vector<64x256xf32>
    %c192_93 = arith.constant 192 : index
    %c0_94 = arith.constant 0 : index
    %120 = vector.load %arg10[%c192_93, %c0_94] : memref<576x256xf32, #tpu.memory_space<vmem>>, vector<64x256xf32>
    tpu.vector_store %arg10[%c192_93, %c0_94], %119 {strides = array<i32>} : memref<576x256xf32, #tpu.memory_space<vmem>>, vector<64x256xf32>,
    %c256_95 = arith.constant 256 : index
    %c0_96 = arith.constant 0 : index
    %121 = vector.load %arg10[%c256_95, %c0_96] : memref<576x256xf32, #tpu.memory_space<vmem>>, vector<64x256xf32>
    tpu.vector_store %arg10[%c256_95, %c0_96], %100 {strides = array<i32>} : memref<576x256xf32, #tpu.memory_space<vmem>>, vector<64x256xf32>,
    %c255_i32_97 = arith.constant 255 : i32
    %122 = tpu.dynamic_rotate %100 by %c255_i32_97 dim 1 : vector<64x256xf32>, i32 -> vector<64x256xf32>
    %c5_98 = arith.constant 5 : index
    %c0_99 = arith.constant 0 : index
    %123 = vector.load %arg2[%c5_98, %c0_99] : memref<9x256xf32, #tpu.memory_space<vmem>>, vector<1x256xf32>
    %124 = vector.broadcast %123 : vector<1x256xf32> to vector<64x256xf32>
    %125 = arith.mulf %122, %124 : vector<64x256xf32>
    %c320 = arith.constant 320 : index
    %c0_100 = arith.constant 0 : index
    %126 = vector.load %arg10[%c320, %c0_100] : memref<576x256xf32, #tpu.memory_space<vmem>>, vector<64x256xf32>
    tpu.vector_store %arg10[%c320, %c0_100], %125 {strides = array<i32>} : memref<576x256xf32, #tpu.memory_space<vmem>>, vector<64x256xf32>,
    %c241_i32_101 = arith.constant 241 : i32
    %127 = tpu.dynamic_rotate %100 by %c241_i32_101 dim 1 : vector<64x256xf32>, i32 -> vector<64x256xf32>
    %c6_102 = arith.constant 6 : index
    %c0_103 = arith.constant 0 : index
    %128 = vector.load %arg2[%c6_102, %c0_103] : memref<9x256xf32, #tpu.memory_space<vmem>>, vector<1x256xf32>
    %129 = vector.broadcast %128 : vector<1x256xf32> to vector<64x256xf32>
    %130 = arith.mulf %127, %129 : vector<64x256xf32>
    %c384 = arith.constant 384 : index
    %c0_104 = arith.constant 0 : index
    %131 = vector.load %arg10[%c384, %c0_104] : memref<576x256xf32, #tpu.memory_space<vmem>>, vector<64x256xf32>
    tpu.vector_store %arg10[%c384, %c0_104], %130 {strides = array<i32>} : memref<576x256xf32, #tpu.memory_space<vmem>>, vector<64x256xf32>,
    %c240_i32_105 = arith.constant 240 : i32
    %132 = tpu.dynamic_rotate %100 by %c240_i32_105 dim 1 : vector<64x256xf32>, i32 -> vector<64x256xf32>
    %c7_106 = arith.constant 7 : index
    %c0_107 = arith.constant 0 : index
    %133 = vector.load %arg2[%c7_106, %c0_107] : memref<9x256xf32, #tpu.memory_space<vmem>>, vector<1x256xf32>
    %134 = vector.broadcast %133 : vector<1x256xf32> to vector<64x256xf32>
    %135 = arith.mulf %132, %134 : vector<64x256xf32>
    %c448 = arith.constant 448 : index
    %c0_108 = arith.constant 0 : index
    %136 = vector.load %arg10[%c448, %c0_108] : memref<576x256xf32, #tpu.memory_space<vmem>>, vector<64x256xf32>
    tpu.vector_store %arg10[%c448, %c0_108], %135 {strides = array<i32>} : memref<576x256xf32, #tpu.memory_space<vmem>>, vector<64x256xf32>,
    %c239_i32_109 = arith.constant 239 : i32
    %137 = tpu.dynamic_rotate %100 by %c239_i32_109 dim 1 : vector<64x256xf32>, i32 -> vector<64x256xf32>
    %c8_110 = arith.constant 8 : index
    %c0_111 = arith.constant 0 : index
    %138 = vector.load %arg2[%c8_110, %c0_111] : memref<9x256xf32, #tpu.memory_space<vmem>>, vector<1x256xf32>
    %139 = vector.broadcast %138 : vector<1x256xf32> to vector<64x256xf32>
    %140 = arith.mulf %137, %139 : vector<64x256xf32>
    %c512 = arith.constant 512 : index
    %c0_112 = arith.constant 0 : index
    %141 = vector.load %arg10[%c512, %c0_112] : memref<576x256xf32, #tpu.memory_space<vmem>>, vector<64x256xf32>
    tpu.vector_store %arg10[%c512, %c0_112], %140 {strides = array<i32>} : memref<576x256xf32, #tpu.memory_space<vmem>>, vector<64x256xf32>,
    %c0_113 = arith.constant 0 : index
    %c0_114 = arith.constant 0 : index
    %142 = vector.load %arg5[%c0_113, %c0_114] : memref<32x576xf32, #tpu.memory_space<vmem>>, vector<32x576xf32>
    %c0_115 = arith.constant 0 : index
    %c0_116 = arith.constant 0 : index
    %143 = vector.load %arg10[%c0_115, %c0_116] : memref<576x256xf32, #tpu.memory_space<vmem>>, vector<576x256xf32>
    %cst_117 = arith.constant dense<0.000000e+00> : vector<32x256xf32>
    %144 = tpu.matmul %142, %143, %cst_117 {dimension_numbers = #tpu.dot_dimension_numbers<[1], [0], [0], [1], [0, 0, 1, 1], [], []>} : vector<32x576xf32>, vector<576x256xf32>, vector<32x256xf32> -> vector<32x256xf32>
    %c96_118 = arith.constant 96 : index
    %c0_119 = arith.constant 0 : index
    %145 = vector.load %arg7[%c96_118, %c0_119] : memref<136x1xf32, #tpu.memory_space<vmem>>, vector<32x1xf32>
    %146 = vector.broadcast %145 : vector<32x1xf32> to vector<32x256xf32>
    %147 = arith.addf %144, %146 : vector<32x256xf32>
    %cst_120 = arith.constant 0.000000e+00 : f32
    %148 = vector.broadcast %cst_120 : f32 to vector<32x256xf32>
    %149 = arith.maximumf %147, %148 : vector<32x256xf32>
    %c0_121 = arith.constant 0 : index
    %c0_122 = arith.constant 0 : index
    %150 = vector.load %arg6[%c0_121, %c0_122] : memref<1x32xf32, #tpu.memory_space<vmem>>, vector<1x32xf32>
    %cst_123 = arith.constant dense<0.000000e+00> : vector<1x256xf32>
    %151 = tpu.matmul %150, %149, %cst_123 {dimension_numbers = #tpu.dot_dimension_numbers<[1], [0], [0], [1], [0, 0, 1, 1], [], []>} : vector<1x32xf32>, vector<32x256xf32>, vector<1x256xf32> -> vector<1x256xf32>
    %c128_124 = arith.constant 128 : index
    %c0_125 = arith.constant 0 : index
    %152 = vector.load %arg7[%c128_124, %c0_125] : memref<136x1xf32, #tpu.memory_space<vmem>>, vector<1x1xf32>
    %153 = vector.broadcast %152 : vector<1x1xf32> to vector<1x256xf32>
    %154 = arith.addf %151, %153 : vector<1x256xf32>
    %c0_126 = arith.constant 0 : index
    %c0_127 = arith.constant 0 : index
    %155 = vector.load %arg8[%c0_126, %c0_127] : memref<1x256xf32, #tpu.memory_space<vmem>>, vector<1x256xf32>
    tpu.vector_store %arg8[%c0_126, %c0_127], %154 {strides = array<i32>} : memref<1x256xf32, #tpu.memory_space<vmem>>, vector<1x256xf32>,
    return
  }
  func.func @transform_0(%arg0: i32) -> (i32, i32) {
    %c0_i32 = arith.constant 0 : i32
    %c0_i32_0 = arith.constant 0 : i32
    return %c0_i32, %arg0 : i32, i32
  }
  func.func @transform_1(%arg0: i32) -> (i32, i32) {
    %c0_i32 = arith.constant 0 : i32
    %c0_i32_0 = arith.constant 0 : i32
    %c0_i32_1 = arith.constant 0 : i32
    return %c0_i32, %c0_i32_0 : i32, i32
  }
  func.func @transform_2(%arg0: i32) -> (i32, i32) {
    %c0_i32 = arith.constant 0 : i32
    %c0_i32_0 = arith.constant 0 : i32
    %c0_i32_1 = arith.constant 0 : i32
    return %c0_i32, %c0_i32_0 : i32, i32
  }
  func.func @transform_3(%arg0: i32) -> (i32, i32) {
    %c0_i32 = arith.constant 0 : i32
    %c0_i32_0 = arith.constant 0 : i32
    %c0_i32_1 = arith.constant 0 : i32
    return %c0_i32, %c0_i32_0 : i32, i32
  }
  func.func @transform_4(%arg0: i32) -> (i32, i32) {
    %c0_i32 = arith.constant 0 : i32
    %c0_i32_0 = arith.constant 0 : i32
    %c0_i32_1 = arith.constant 0 : i32
    return %c0_i32, %c0_i32_0 : i32, i32
  }
  func.func @transform_5(%arg0: i32) -> (i32, i32) {
    %c0_i32 = arith.constant 0 : i32
    %c0_i32_0 = arith.constant 0 : i32
    %c0_i32_1 = arith.constant 0 : i32
    return %c0_i32, %c0_i32_0 : i32, i32
  }
  func.func @transform_6(%arg0: i32) -> (i32, i32) {
    %c0_i32 = arith.constant 0 : i32
    %c0_i32_0 = arith.constant 0 : i32
    %c0_i32_1 = arith.constant 0 : i32
    return %c0_i32, %c0_i32_0 : i32, i32
  }
  func.func @transform_7(%arg0: i32) -> (i32, i32) {
    %c0_i32 = arith.constant 0 : i32
    %c0_i32_0 = arith.constant 0 : i32
    return %c0_i32, %arg0 : i32, i32
  }
}

</mosaic_0001>

<llo_original>
// kernel: mini_unet_forward.1
$region0: #{mini_unet_forward.1}
  #allocation0 [shape = 'u32[]', space=smem, size = 0x4, offset = 0x4, fixed_abs, tag = 'smem constant byte address 0x4 - core index']
  #allocation1 [shape = 'u32[144,128]{1,0:T(1,128)}', space=vmem, size = 0x12000, scoped, tag = 'internal scratch']
  #allocation2 [shape = 'f32[72,256]{1,0:T(8,128)}', space=vmem, size = 0x12000, scoped, tag = 'scratch operand']
  #allocation3 [shape = 'f32[576,256]{1,0:T(8,128)}', space=vmem, size = 0x90000, scoped, tag = 'scratch operand']
  %s0 = inlined_call_operand.vmem [shape: f32[3,512], index: 0, kind: input, shape index: {}]
  %s1 = inlined_call_operand.vmem [shape: f32[9,256], index: 1, kind: input, shape index: {}]
  %s2 = inlined_call_operand.vmem [shape: f32[32,72], index: 2, kind: input, shape index: {}]
  %s3 = inlined_call_operand.vmem [shape: f32[64,288], index: 3, kind: input, shape index: {}]
  %s4 = inlined_call_operand.vmem [shape: f32[32,576], index: 4, kind: input, shape index: {}]
  %s5 = inlined_call_operand.vmem [shape: f32[1,32], index: 5, kind: input, shape index: {}]
  %s6 = inlined_call_operand.vmem [shape: f32[136,1], index: 6, kind: input, shape index: {}]
  %s7 = inlined_call_operand.vmem [shape: f32[1,512], index: 7, kind: output, shape index: {}]
  %s8 = sld [smem:[#allocation0]]
  $region61: #{mini_unet_forward.1} parent=0
    _
  %s10 = ssub.s32 1, %s8
  %s11 = scalar_select 0, %s10, %s8
  loop: start=0, step=1, limit=4
  $region2: #{mini_unet_forward.1} parent=0 // loop_pre_header
    _
  $region3: #{mini_unet_forward.1} parent=0 // loop_header
    %s13 = sphi 0, %s17
    %p14 = scmp.ge.s32.totalorder %s13, 4
    %s23 = sphi 0, %s25
    %s26 = sphi 0, %s23
    %s27 = sphi 0, %s26
    %s43 = sphi 0, %s27
    %s47 = sphi 0, %s47
    %s49 = sphi 0, %s47
    %s50 = sphi 0, %s49
    %s64 = sphi 0, %s50
    %s68 = sphi 0, %s68
    %s70 = sphi 0, %s68
    %s71 = sphi 0, %s70
    %s85 = sphi 0, %s71
    %s89 = sphi 0, %s89
    %s91 = sphi 0, %s89
    %s92 = sphi 0, %s91
    %s106 = sphi 0, %s92
    %s110 = sphi 0, %s110
    %s112 = sphi 0, %s110
    %s113 = sphi 0, %s112
    %s127 = sphi 0, %s113
    %s131 = sphi 0, %s131
    %s133 = sphi 0, %s131
    %s134 = sphi 0, %s133
    %s148 = sphi 0, %s134
    %s152 = sphi 0, %s152
    %s154 = sphi 0, %s152
    %s155 = sphi 0, %s154
    %s169 = sphi 0, %s155
    %s175 = sphi 0, %s177
    %s178 = sphi 0, %s175
    %s179 = sphi 0, %s178
    %s195 = sphi 0, %s179
  $region4: #{mini_unet_forward.1} parent=0 // loop_header_branch
    %16 = sbr.rel (%p14) target = $region8
  $region5: #{mini_unet_forward.1} parent=0 // loop_body
    %s18 = ssub.s32 %s13, 1
    %s19 = ssub.s32 %s13, 2
    %s20 = sadd.s32 %s13, 1
    %s21 = ssub.s32 %s13, %s20
    %p22 = scmp.eq.s32.totalorder %s21, 0
    %s24 = sadd.s32 %s23, 1
    %s25 = scalar_select %p22, %s23, %s24
    %p28 = pneg %p22
    %p29 = scmp.eq.s32.totalorder %s13, 1
    %p30 = por %p28, %p29
    %p31 = scmp.ne.s32.totalorder %s23, %s26
    %p32 = scmp.eq.s32.totalorder %s13, 0
    %p33 = por %p31, %p32
    %p34 = scmp.ne.s32.totalorder %s23, %s26
    %p35 = scmp.eq.s32.totalorder %s18, 1
    %p36 = por %p34, %p35
    %p37 = scmp.ne.s32.totalorder %s26, %s27
    %p38 = scmp.eq.s32.totalorder %s18, 0
    %p39 = por %p37, %p38
    %p40 = scmp.ne.s32.totalorder %s26, %s27
    %p41 = scmp.eq.s32.totalorder %s19, 1
    %p42 = por %p40, %p41
    %p44 = scmp.ne.s32.totalorder %s27, %s43
    %p45 = scmp.eq.s32.totalorder %s19, 0
    %p46 = por %p44, %p45
    %s48 = sadd.s32 %s47, 1
    %p51 = scmp.eq.s32.totalorder %s13, 1
    %p52 = scmp.ne.s32.totalorder %s47, %s49
    %p53 = scmp.eq.s32.totalorder %s13, 0
    %p54 = por %p52, %p53
    %p55 = scmp.ne.s32.totalorder %s47, %s49
    %p56 = scmp.eq.s32.totalorder %s18, 1
    %p57 = por %p55, %p56
    %p58 = scmp.ne.s32.totalorder %s49, %s50
    %p59 = scmp.eq.s32.totalorder %s18, 0
    %p60 = por %p58, %p59
    %p61 = scmp.ne.s32.totalorder %s49, %s50
    %p62 = scmp.eq.s32.totalorder %s19, 1
    %p63 = por %p61, %p62
    %p65 = scmp.ne.s32.totalorder %s50, %s64
    %p66 = scmp.eq.s32.totalorder %s19, 0
    %p67 = por %p65, %p66
    %s69 = sadd.s32 %s68, 1
    %p72 = scmp.eq.s32.totalorder %s13, 1
    %p73 = scmp.ne.s32.totalorder %s68, %s70
    %p74 = scmp.eq.s32.totalorder %s13, 0
    %p75 = por %p73, %p74
    %p76 = scmp.ne.s32.totalorder %s68, %s70
    %p77 = scmp.eq.s32.totalorder %s18, 1
    %p78 = por %p76, %p77
    %p79 = scmp.ne.s32.totalorder %s70, %s71
    %p80 = scmp.eq.s32.totalorder %s18, 0
    %p81 = por %p79, %p80
    %p82 = scmp.ne.s32.totalorder %s70, %s71
    %p83 = scmp.eq.s32.totalorder %s19, 1
    %p84 = por %p82, %p83
    %p86 = scmp.ne.s32.totalorder %s71, %s85
    %p87 = scmp.eq.s32.totalorder %s19, 0
    %p88 = por %p86, %p87
    %s90 = sadd.s32 %s89, 1
    %p93 = scmp.eq.s32.totalorder %s13, 1
    %p94 = scmp.ne.s32.totalorder %s89, %s91
    %p95 = scmp.eq.s32.totalorder %s13, 0
    %p96 = por %p94, %p95
    %p97 = scmp.ne.s32.totalorder %s89, %s91
    %p98 = scmp.eq.s32.totalorder %s18, 1
    %p99 = por %p97, %p98
    %p100 = scmp.ne.s32.totalorder %s91, %s92
    %p101 = scmp.eq.s32.totalorder %s18, 0
    %p102 = por %p100, %p101
    %p103 = scmp.ne.s32.totalorder %s91, %s92
    %p104 = scmp.eq.s32.totalorder %s19, 1
    %p105 = por %p103, %p104
    %p107 = scmp.ne.s32.totalorder %s92, %s106
    %p108 = scmp.eq.s32.totalorder %s19, 0
    %p109 = por %p107, %p108
    %s111 = sadd.s32 %s110, 1
    %p114 = scmp.eq.s32.totalorder %s13, 1
    %p115 = scmp.ne.s32.totalorder %s110, %s112
    %p116 = scmp.eq.s32.totalorder %s13, 0
    %p117 = por %p115, %p116
    %p118 = scmp.ne.s32.totalorder %s110, %s112
    %p119 = scmp.eq.s32.totalorder %s18, 1
    %p120 = por %p118, %p119
    %p121 = scmp.ne.s32.totalorder %s112, %s113
    %p122 = scmp.eq.s32.totalorder %s18, 0
    %p123 = por %p121, %p122
    %p124 = scmp.ne.s32.totalorder %s112, %s113
    %p125 = scmp.eq.s32.totalorder %s19, 1
    %p126 = por %p124, %p125
    %p128 = scmp.ne.s32.totalorder %s113, %s127
    %p129 = scmp.eq.s32.totalorder %s19, 0
    %p130 = por %p128, %p129
    %s132 = sadd.s32 %s131, 1
    %p135 = scmp.eq.s32.totalorder %s13, 1
    %p136 = scmp.ne.s32.totalorder %s131, %s133
    %p137 = scmp.eq.s32.totalorder %s13, 0
    %p138 = por %p136, %p137
    %p139 = scmp.ne.s32.totalorder %s131, %s133
    %p140 = scmp.eq.s32.totalorder %s18, 1
    %p141 = por %p139, %p140
    %p142 = scmp.ne.s32.totalorder %s133, %s134
    %p143 = scmp.eq.s32.totalorder %s18, 0
    %p144 = por %p142, %p143
    %p145 = scmp.ne.s32.totalorder %s133, %s134
    %p146 = scmp.eq.s32.totalorder %s19, 1
    %p147 = por %p145, %p146
    %p149 = scmp.ne.s32.totalorder %s134, %s148
    %p150 = scmp.eq.s32.totalorder %s19, 0
    %p151 = por %p149, %p150
    %s153 = sadd.s32 %s152, 1
    %p156 = scmp.eq.s32.totalorder %s13, 1
    %p157 = scmp.ne.s32.totalorder %s152, %s154
    %p158 = scmp.eq.s32.totalorder %s13, 0
    %p159 = por %p157, %p158
    %p160 = scmp.ne.s32.totalorder %s152, %s154
    %p161 = scmp.eq.s32.totalorder %s18, 1
    %p162 = por %p160, %p161
    %p163 = scmp.ne.s32.totalorder %s154, %s155
    %p164 = scmp.eq.s32.totalorder %s18, 0
    %p165 = por %p163, %p164
    %p166 = scmp.ne.s32.totalorder %s154, %s155
    %p167 = scmp.eq.s32.totalorder %s19, 1
    %p168 = por %p166, %p167
    %p170 = scmp.ne.s32.totalorder %s155, %s169
    %p171 = scmp.eq.s32.totalorder %s19, 0
    %p172 = por %p170, %p171
    %s173 = ssub.s32 %s13, %s20
    %p174 = scmp.eq.s32.totalorder %s173, 0
    %s176 = sadd.s32 %s175, 1
    %s177 = scalar_select %p174, %s175, %s176
    %p180 = pneg %p174
    %p181 = scmp.eq.s32.totalorder %s13, 1
    %p182 = por %p180, %p181
    %p183 = scmp.ne.s32.totalorder %s175, %s178
    %p184 = scmp.eq.s32.totalorder %s13, 0
    %p185 = por %p183, %p184
    %p186 = scmp.ne.s32.totalorder %s175, %s178
    %p187 = scmp.eq.s32.totalorder %s18, 1
    %p188 = por %p186, %p187
    %p189 = scmp.ne.s32.totalorder %s178, %s179
    %p190 = scmp.eq.s32.totalorder %s18, 0
    %p191 = por %p189, %p190
    %p192 = scmp.ne.s32.totalorder %s178, %s179
    %p193 = scmp.eq.s32.totalorder %s19, 1
    %p194 = por %p192, %p193
    %p196 = scmp.ne.s32.totalorder %s179, %s195
    %p197 = scmp.eq.s32.totalorder %s19, 0
    %p198 = por %p196, %p197
    %p199 = scmp.le.s32.totalorder 1, %s13
    %p200 = scmp.lt.s32.totalorder %s13, 3
    %p201 = pnand %p199, %p200
    %p202 = pneg %p201
    // Predicated region
    $region9: #{mini_unet_forward.1} parent=5 // pred_check
      _
    $region10: #{mini_unet_forward.1} parent=5 // pred_check_branch
      %204 = sbr.rel (%p201) target = $region12
    $region11: #{mini_unet_forward.1} parent=5 // pred_region
      %s205 = ssub.s32 %s13, 1
      // Predicated region
      $region13: #{mini_unet_forward.1} parent=11 // pred_check
        %p206 = pneg %p60
      $region14: #{mini_unet_forward.1} parent=11 // pred_check_branch
        %208 = sbr.rel (%p206) target = $region16
      $region15: #{mini_unet_forward.1} parent=11 // pred_region
        _
      $region16: #{mini_unet_forward.1} parent=11 // pred_fallthru
        _
      // Predicated region
      $region17: #{mini_unet_forward.1} parent=11 // pred_check
        %p209 = pneg %p81
      $region18: #{mini_unet_forward.1} parent=11 // pred_check_branch
        %211 = sbr.rel (%p209) target = $region20
      $region19: #{mini_unet_forward.1} parent=11 // pred_region
        _
      $region20: #{mini_unet_forward.1} parent=11 // pred_fallthru
        _
      // Predicated region
      $region21: #{mini_unet_forward.1} parent=11 // pred_check
        %p212 = pneg %p102
      $region22: #{mini_unet_forward.1} parent=11 // pred_check_branch
        %214 = sbr.rel (%p212) target = $region24
      $region23: #{mini_unet_forward.1} parent=11 // pred_region
        _
      $region24: #{mini_unet_forward.1} parent=11 // pred_fallthru
        _
      // Predicated region
      $region25: #{mini_unet_forward.1} parent=11 // pred_check
        %p215 = pneg %p123
      $region26: #{mini_unet_forward.1} parent=11 // pred_check_branch
        %217 = sbr.rel (%p215) target = $region28
      $region27: #{mini_unet_forward.1} parent=11 // pred_region
        _
      $region28: #{mini_unet_forward.1} parent=11 // pred_fallthru
        _
      // Predicated region
      $region29: #{mini_unet_forward.1} parent=11 // pred_check
        %p218 = pneg %p144
      $region30: #{mini_unet_forward.1} parent=11 // pred_check_branch
        %220 = sbr.rel (%p218) target = $region32
      $region31: #{mini_unet_forward.1} parent=11 // pred_region
        _
      $region32: #{mini_unet_forward.1} parent=11 // pred_fallthru
        _
      // Predicated region
      $region33: #{mini_unet_forward.1} parent=11 // pred_check
        %p221 = pneg %p165
      $region34: #{mini_unet_forward.1} parent=11 // pred_check_branch
        %223 = sbr.rel (%p221) target = $region36
      $region35: #{mini_unet_forward.1} parent=11 // pred_region
        _
      $region36: #{mini_unet_forward.1} parent=11 // pred_fallthru
        _
    $region12: #{mini_unet_forward.1} parent=5 // pred_fallthru
      _
    %p224 = scmp.lt.s32.totalorder %s13, 2
    // Predicated region
    $region37: #{mini_unet_forward.1} parent=5 // pred_check
      %p225 = pneg %p224
    $region38: #{mini_unet_forward.1} parent=5 // pred_check_branch
      %227 = sbr.rel (%p225) target = $region40
    $region39: #{mini_unet_forward.1} parent=5 // pred_region
      // Predicated region
      $region41: #{mini_unet_forward.1} parent=39 // pred_check
        %p228 = pneg %p33
      $region42: #{mini_unet_forward.1} parent=39 // pred_check_branch
        %230 = sbr.rel (%p228) target = $region44
      $region43: #{mini_unet_forward.1} parent=39 // pred_region
        %s231 = smul.u32 2, %s13
        %p232 = scmp.lt.s32.totalorder %s231, 3
        %s233 = scalar_select %p232, %s231, 3
        %s234 = smul.addr %s233, 4
        %s235 = scalar_lea.vmem %s0, %s234
        %s236 = smul.u32 2, %s13
      $region44: #{mini_unet_forward.1} parent=39 // pred_fallthru
        _
    $region40: #{mini_unet_forward.1} parent=5 // pred_fallthru
      _
    %p237 = scmp.le.s32.totalorder 1, %s13
    %p238 = scmp.lt.s32.totalorder %s13, 3
    %p239 = pnand %p237, %p238
    %p240 = pneg %p239
    // Predicated region
    $region45: #{mini_unet_forward.1} parent=5 // pred_check
      _
    $region46: #{mini_unet_forward.1} parent=5 // pred_check_branch
      %242 = sbr.rel (%p239) target = $region48
    $region47: #{mini_unet_forward.1} parent=5 // pred_region
      %s243 = ssub.s32 %s13, 1
      %s244 = smul.u32 2, %s18
      %p245 = scmp.lt.s32.totalorder %s244, 3
      %s246 = scalar_select %p245, %s244, 3
      %s247 = smul.addr %s246, 4
      %s248 = scalar_lea.vmem %s0, %s247
      %p249 = pneg %p39
      %p250 = pneg %p36
      %p251 = pneg %p60
      %p252 = pneg %p57
      %p253 = pneg %p81
      %p254 = pneg %p78
      %p255 = pneg %p102
      %p256 = pneg %p99
      %p257 = pneg %p123
      %p258 = pneg %p120
      %p259 = pneg %p144
      %p260 = pneg %p141
      %p261 = pneg %p165
      %p262 = pneg %p162
      %p263 = pneg %p191
      %p264 = pneg %p188
      %s265 = smul.u32 2, %s18
      %p266 = scmp.lt.s32.totalorder %s265, 3
      %s267 = scalar_select %p266, %s265, 3
      %s268 = scalar_lea.vmem %s7, %s267
      %s269 = smul.u32 2, %s18
      %p270 = scmp.lt.s32.totalorder %s269, 3
      %s271 = scalar_select %p270, %s269, 3
      %s272 = smul.addr %s271, 4
      %s273 = scalar_lea.vmem %s0, %s272
      %s274 = smul.u32 2, %s18
      %s275 = smul.u32 2, %s18
      %p276 = scmp.lt.s32.totalorder %s275, 3
      %s277 = scalar_select %p276, %s275, 3
      %s278 = scalar_lea.vmem %s7, %s277
      %s279 = smul.u32 2, %s18
      %280 = vst [vmem:[#allocation2] sm:$0xff] 0.0
      %281 = vst [vmem:[#allocation2 + $0x8] sm:$0xff] 0.0
      %282 = vst [vmem:[#allocation2 + $0x10] sm:$0xff] 0.0
      %283 = vst [vmem:[#allocation2 + $0x18] sm:$0xff] 0.0
      %284 = vst [vmem:[#allocation2 + $0x20] sm:$0xff] 0.0
      %285 = vst [vmem:[#allocation2 + $0x28] sm:$0xff] 0.0
      %286 = vst [vmem:[#allocation2 + $0x30] sm:$0xff] 0.0
      %287 = vst [vmem:[#allocation2 + $0x38] sm:$0xff] 0.0
      %288 = vst [vmem:[#allocation2 + $0x40] sm:$0xff] 0.0
      %289 = vst [vmem:[#allocation2 + $0x48] sm:$0xff] 0.0
      %290 = vst [vmem:[#allocation2 + $0x50] sm:$0xff] 0.0
      %291 = vst [vmem:[#allocation2 + $0x58] sm:$0xff] 0.0
      %292 = vst [vmem:[#allocation2 + $0x60] sm:$0xff] 0.0
      %293 = vst [vmem:[#allocation2 + $0x68] sm:$0xff] 0.0
      %294 = vst [vmem:[#allocation2 + $0x70] sm:$0xff] 0.0
      %295 = vst [vmem:[#allocation2 + $0x78] sm:$0xff] 0.0
      %296 = vst [vmem:[#allocation2 + $0x80] sm:$0xff] 0.0
      %297 = vst [vmem:[#allocation2 + $0x88] sm:$0xff] 0.0
      %v298 = vld [vmem:[%s273] sm:$0x77]
      %v300 = vcombine.high %v298, %v298
      %302 = vrot.lane.b32.xlu0 %v298, 17
      %v303 = vpop.permute.xlu0 %302
      %304 = vrot.lane.b32.xlu0 %v300, 17
      %v305 = vpop.permute.xlu0 %304
      %v306 = vlaneseq
      %v307 = vand.u32 %v306, 127
      %vm308 = vcmp.lt.s32.totalorder %v307, 17
      %v309 = vsel %vm308, %v303, %v305
      %v310 = vsel %vm308, %v305, %v303
      %v311 = vld [vmem:[%s1] ss:$8 sm:$0x3]
      %v313 = vlaneseq
      %v314 = vshrl.u32 %v313, 7
      %v315 = vsub.s32 0, %v314
      %v316 = vrot.slane %v311, %v315
      %v317 = vlaneseq
      %v318 = vshrl.u32 %v317, 7
      %v319 = vsub.s32 1, %v318
      %v320 = vrot.slane %v311, %v319
      %v323 = vmul.f32 %v310, %v316
      %v324 = vmul.f32 %v309, %v320
      %325 = vst [vmem:[#allocation2] sm:$0x7] %v323
      %326 = vst [vmem:[#allocation2 + $0x8] sm:$0x7] %v324
      %327 = vrot.lane.b32.xlu0 %v298, 16
      %v328 = vpop.permute.xlu0 %327
      %329 = vrot.lane.b32.xlu0 %v300, 16
      %v330 = vpop.permute.xlu0 %329
      %vm331 = vcmp.lt.s32.totalorder %v307, 16
      %v332 = vsel %vm331, %v328, %v330
      %v333 = vsel %vm331, %v330, %v328
      %s334 = scalar_lea.vmem %s1, 1
      %v335 = vld [vmem:[%s334] ss:$8 sm:$0x3]
      %v337 = vlaneseq
      %v338 = vshrl.u32 %v337, 7
      %v339 = vsub.s32 0, %v338
      %v340 = vrot.slane %v335, %v339
      %v341 = vlaneseq
      %v342 = vshrl.u32 %v341, 7
      %v343 = vsub.s32 1, %v342
      %v344 = vrot.slane %v335, %v343
      %v347 = vmul.f32 %v333, %v340
      %v348 = vmul.f32 %v332, %v344
      %349 = vst [vmem:[#allocation2 + $0x10] sm:$0x7] %v347
      %350 = vst [vmem:[#allocation2 + $0x18] sm:$0x7] %v348
      %351 = vrot.lane.b32.xlu0 %v298, 15
      %v352 = vpop.permute.xlu0 %351
      %353 = vrot.lane.b32.xlu0 %v300, 15
      %v354 = vpop.permute.xlu0 %353
      %vm355 = vcmp.lt.s32.totalorder %v307, 15
      %v356 = vsel %vm355, %v352, %v354
      %v357 = vsel %vm355, %v354, %v352
      %s358 = scalar_lea.vmem %s1, 2
      %v359 = vld [vmem:[%s358] ss:$8 sm:$0x3]
      %v361 = vlaneseq
      %v362 = vshrl.u32 %v361, 7
      %v363 = vsub.s32 0, %v362
      %v364 = vrot.slane %v359, %v363
      %v365 = vlaneseq
      %v366 = vshrl.u32 %v365, 7
      %v367 = vsub.s32 1, %v366
      %v368 = vrot.slane %v359, %v367
      %v371 = vmul.f32 %v357, %v364
      %v372 = vmul.f32 %v356, %v368
      %373 = vst [vmem:[#allocation2 + $0x20] sm:$0x7] %v371
      %374 = vst [vmem:[#allocation2 + $0x28] sm:$0x7] %v372
      %375 = vrot.lane.b32.xlu0 %v298, 1
      %v376 = vpop.permute.xlu0 %375
      %377 = vrot.lane.b32.xlu0 %v300, 1
      %v378 = vpop.permute.xlu0 %377
      %vm379 = vcmp.lt.s32.totalorder %v307, 1
      %v380 = vsel %vm379, %v376, %v378
      %v381 = vsel %vm379, %v378, %v376
      %s382 = scalar_lea.vmem %s1, 3
      %v383 = vld [vmem:[%s382] ss:$8 sm:$0x3]
      %v385 = vlaneseq
      %v386 = vshrl.u32 %v385, 7
      %v387 = vsub.s32 0, %v386
      %v388 = vrot.slane %v383, %v387
      %v389 = vlaneseq
      %v390 = vshrl.u32 %v389, 7
      %v391 = vsub.s32 1, %v390
      %v392 = vrot.slane %v383, %v391
      %v395 = vmul.f32 %v381, %v388
      %v396 = vmul.f32 %v380, %v392
      %397 = vst [vmem:[#allocation2 + $0x30] sm:$0x7] %v395
      %398 = vst [vmem:[#allocation2 + $0x38] sm:$0x7] %v396
      %399 = vst [vmem:[#allocation2 + $0x40] sm:$0x7] %v298
      %400 = vst [vmem:[#allocation2 + $0x48] sm:$0x7] %v300
      %401 = vrot.lane.b32.xlu0 %v298, 127
      %v402 = vpop.permute.xlu0 %401
      %403 = vrot.lane.b32.xlu0 %v300, 127
      %v404 = vpop.permute.xlu0 %403
      %vm405 = vcmp.lt.s32.totalorder %v307, 127
      %v406 = vsel %vm405, %v402, %v404
      %v407 = vsel %vm405, %v404, %v402
      %s408 = scalar_lea.vmem %s1, 5
      %v409 = vld [vmem:[%s408] ss:$8 sm:$0x3]
      %v411 = vlaneseq
      %v412 = vshrl.u32 %v411, 7
      %v413 = vsub.s32 0, %v412
      %v414 = vrot.slane %v409, %v413
      %v415 = vlaneseq
      %v416 = vshrl.u32 %v415, 7
      %v417 = vsub.s32 1, %v416
      %v418 = vrot.slane %v409, %v417
      %v421 = vmul.f32 %v406, %v414
      %v422 = vmul.f32 %v407, %v418
      %423 = vst [vmem:[#allocation2 + $0x50] sm:$0x7] %v421
      %424 = vst [vmem:[#allocation2 + $0x58] sm:$0x7] %v422
      %425 = vrot.lane.b32.xlu0 %v298, 113
      %v426 = vpop.permute.xlu0 %425
      %427 = vrot.lane.b32.xlu0 %v300, 113
      %v428 = vpop.permute.xlu0 %427
      %vm429 = vcmp.lt.s32.totalorder %v307, 113
      %v430 = vsel %vm429, %v426, %v428
      %v431 = vsel %vm429, %v428, %v426
      %s432 = scalar_lea.vmem %s1, 6
      %v433 = vld [vmem:[%s432] ss:$8 sm:$0x3]
      %v435 = vlaneseq
      %v436 = vshrl.u32 %v435, 7
      %v437 = vsub.s32 0, %v436
      %v438 = vrot.slane %v433, %v437
      %v439 = vlaneseq
      %v440 = vshrl.u32 %v439, 7
      %v441 = vsub.s32 1, %v440
      %v442 = vrot.slane %v433, %v441
      %v445 = vmul.f32 %v430, %v438
      %v446 = vmul.f32 %v431, %v442
      %447 = vst [vmem:[#allocation2 + $0x60] sm:$0x7] %v445
      %448 = vst [vmem:[#allocation2 + $0x68] sm:$0x7] %v446
      %449 = vrot.lane.b32.xlu0 %v298, 112
      %v450 = vpop.permute.xlu0 %449
      %451 = vrot.lane.b32.xlu0 %v300, 112
      %v452 = vpop.permute.xlu0 %451
      %vm453 = vcmp.lt.s32.totalorder %v307, 112
      %v454 = vsel %vm453, %v450, %v452
      %v455 = vsel %vm453, %v452, %v450
      %s456 = scalar_lea.vmem %s1, 7
      %v457 = vld [vmem:[%s456] ss:$8 sm:$0x3]
      %v459 = vlaneseq
      %v460 = vshrl.u32 %v459, 7
      %v461 = vsub.s32 0, %v460
      %v462 = vrot.slane %v457, %v461
      %v463 = vlaneseq
      %v464 = vshrl.u32 %v463, 7
      %v465 = vsub.s32 1, %v464
      %v466 = vrot.slane %v457, %v465
      %v469 = vmul.f32 %v454, %v462
      %v470 = vmul.f32 %v455, %v466
      %471 = vst [vmem:[#allocation2 + $0x70] sm:$0x7] %v469
      %472 = vst [vmem:[#allocation2 + $0x78] sm:$0x7] %v470
      %473 = vrot.lane.b32.xlu0 %v298, 111
      %v474 = vpop.permute.xlu0 %473
      %475 = vrot.lane.b32.xlu0 %v300, 111
      %v476 = vpop.permute.xlu0 %475
      %vm477 = vcmp.lt.s32.totalorder %v307, 111
      %v478 = vsel %vm477, %v474, %v476
      %v479 = vsel %vm477, %v476, %v474
      %s480 = scalar_lea.vmem %s1, 16
      %v481 = vld [vmem:[%s480] ss:$8 sm:$0x3]
      %v483 = vlaneseq
      %v484 = vshrl.u32 %v483, 7
      %v485 = vsub.s32 0, %v484
      %v486 = vrot.slane %v481, %v485
      %v487 = vlaneseq
      %v488 = vshrl.u32 %v487, 7
      %v489 = vsub.s32 1, %v488
      %v490 = vrot.slane %v481, %v489
      %v493 = vmul.f32 %v478, %v486
      %v494 = vmul.f32 %v479, %v490
      %495 = vst [vmem:[#allocation2 + $0x80] sm:$0x7] %v493
      %496 = vst [vmem:[#allocation2 + $0x88] sm:$0x7] %v494
      %v497 = vld [vmem:[%s2] sm:$0xff]
      %v498 = vld [vmem:[%s2 + $0x8] sm:$0xff]
      %v499 = vld [vmem:[%s2 + $0x10] sm:$0xff]
      %v500 = vld [vmem:[%s2 + $0x18] sm:$0xff]
      %v501 = vld [vmem:[#allocation2] sm:$0xff]
      %v502 = vld [vmem:[#allocation2 + $0x8] sm:$0xff]
      %v503 = vld [vmem:[#allocation2 + $0x10] sm:$0xff]
      %v504 = vld [vmem:[#allocation2 + $0x18] sm:$0xff]
      %v505 = vld [vmem:[#allocation2 + $0x20] sm:$0xff]
      %v506 = vld [vmem:[#allocation2 + $0x28] sm:$0xff]
      %v507 = vld [vmem:[#allocation2 + $0x30] sm:$0xff]
      %v508 = vld [vmem:[#allocation2 + $0x38] sm:$0xff]
      %v509 = vld [vmem:[#allocation2 + $0x40] sm:$0xff]
      %v510 = vld [vmem:[#allocation2 + $0x48] sm:$0xff]
      %v511 = vld [vmem:[#allocation2 + $0x50] sm:$0xff]
      %v512 = vld [vmem:[#allocation2 + $0x58] sm:$0xff]
      %v513 = vld [vmem:[#allocation2 + $0x60] sm:$0xff]
      %v514 = vld [vmem:[#allocation2 + $0x68] sm:$0xff]
      %v515 = vld [vmem:[#allocation2 + $0x70] sm:$0xff]
      %v516 = vld [vmem:[#allocation2 + $0x78] sm:$0xff]
      %v517 = vld [vmem:[#allocation2 + $0x80] sm:$0xff]
      %v518 = vld [vmem:[#allocation2 + $0x88] sm:$0xff]
      %v519 = vld [vmem:[%s6] sm:$0xff]
      %v520 = vld [vmem:[%s6 + $0x8] sm:$0xff]
      %v521 = vld [vmem:[%s6 + $0x10] sm:$0xff]
      %v522 = vld [vmem:[%s6 + $0x18] sm:$0xff]
      %524 = vset.pattern.permute.xlu0 0
      %525 = vperm.xlu0 %524, %v519
      %v526 = vpop.permute.xlu0 %525
      %529 = vset.pattern.permute.xlu0 0
      %530 = vperm.xlu0 %529, %v520
      %v531 = vpop.permute.xlu0 %530
      %534 = vset.pattern.permute.xlu0 0
      %535 = vperm.xlu0 %534, %v521
      %v536 = vpop.permute.xlu0 %535
      %539 = vset.pattern.permute.xlu0 0
      %540 = vperm.xlu0 %539, %v522
      %v541 = vpop.permute.xlu0 %540
      %vm543 = vcmask 588800
      %v545 = vsel %vm543, %v497, 0
      %v548 = vsel %vm543, %v498, 0
      %v551 = vsel %vm543, %v499, 0
      %v554 = vsel %vm543, %v500, 0
      %556 = vmatprep.subr.mxu0 %v502
      %557 = vmatpush1.msra.mxu0 %v501
      %558 = vmatprep.subr.mxu0 %v504
      %559 = vmatpush1.msra.mxu0 %v503
      %560 = vmatprep.subr.mxu0 %v506
      %561 = vmatpush1.msra.mxu0 %v505
      %562 = vmatprep.subr.mxu0 %v508
      %563 = vmatpush1.msra.mxu0 %v507
      %564 = vmatprep.subr.mxu0 %v510
      %565 = vmatpush1.msra.mxu0 %v509
      %566 = vmatprep.subr.mxu0 %v512
      %567 = vmatpush1.msra.mxu0 %v511
      %568 = vmatprep.subr.mxu0 %v514
      %569 = vmatpush1.msra.mxu0 %v513
      %570 = vmatprep.subr.mxu0 %v516
      %571 = vmatpush1.msra.mxu0 %v515
      %572 = vmatprep.subr.mxu0 %v518
      %573 = vmatpush1.msra.mxu0 %v517
      %574 = vmatprep.subr.mxu0 0.0
      %575 = vmatpush1.msra.mxu0 0.0
      %576 = vmatprep.subr.mxu0 0.0
      %577 = vmatpush1.msra.mxu0 0.0
      %578 = vmatprep.subr.mxu0 0.0
      %579 = vmatpush1.msra.mxu0 0.0
      %580 = vmatprep.subr.mxu0 0.0
      %581 = vmatpush1.msra.mxu0 0.0
      %582 = vmatprep.subr.mxu0 0.0
      %583 = vmatpush1.msra.mxu0 0.0
      %584 = vmatprep.subr.mxu0 0.0
      %585 = vmatpush1.msra.mxu0 0.0
      %586 = vmatprep.subr.mxu0 0.0
      %587 = vmatpush1.msra.mxu0 0.0
      %588 = vmatprep.subr.mxu0 0.0
      %589 = vmatpush1.msra.mxu0 0.0
      %590 = vmatprep.subr.mxu0 0.0
      %591 = vmatpush1.msra.mxu0 0.0
      %592 = vmatprep.subr.mxu0 0.0
      %593 = vmatpush1.msra.mxu0 0.0
      %594 = vmatprep.subr.mxu0 0.0
      %595 = vmatpush1.msra.mxu0 0.0
      %596 = vmatprep.subr.mxu0 0.0
      %597 = vmatpush1.msra.mxu0 0.0
      %598 = vmatprep.subr.mxu0 0.0
      %599 = vmatpush1.msra.mxu0 0.0
      %600 = vmatprep.subr.mxu0 0.0
      %601 = vmatpush1.msra.mxu0 0.0
      %602 = vmatprep.subr.mxu0 0.0
      %603 = vmatpush1.msra.mxu0 0.0
      %604 = vmatprep.subr.mxu0 0.0
      %605 = vmatpush1.msra.mxu0 0.0
      %606 = vmatprep.subr.mxu0 0.0
      %607 = vmatpush1.msra.mxu0 0.0
      %608 = vmatprep.subr.mxu0 0.0
      %609 = vmatpush1.msra.mxu0 0.0
      %610 = vmatprep.subr.mxu0 0.0
      %611 = vmatpush1.msra.mxu0 0.0
      %612 = vmatprep.subr.mxu0 0.0
      %613 = vmatpush1.msra.mxu0 0.0
      %614 = vmatprep.subr.mxu0 0.0
      %615 = vmatpush1.msra.mxu0 0.0
      %616 = vmatprep.subr.mxu0 0.0
      %617 = vmatpush1.msra.mxu0 0.0
      %618 = vmatprep.subr.mxu0 0.0
      %619 = vmatpush1.msra.mxu0 0.0
      %620 = vmatprep.mubr.f32.mxu0 0.0
      %621 = vmatmul.mubr.f32.gmra.mrb[0].mxu0 %v545
      %v622 = vpop.f32.mrb[0].mxu0
      %v623 = vadd.f32 %v526, %v622
      %v624 = vpop.f32.mrb[0].mxu0
      %v625 = vadd.f32 %v526, %v624
      %626 = vmatprep.mubr.f32.mxu0 0.0
      %627 = vmatmul.mubr.f32.gmra.mrb[0].mxu0 %v548
      %v628 = vpop.f32.mrb[0].mxu0
      %v629 = vadd.f32 %v531, %v628
      %v630 = vpop.f32.mrb[0].mxu0
      %v631 = vadd.f32 %v531, %v630
      %632 = vmatprep.mubr.f32.mxu0 0.0
      %633 = vmatmul.mubr.f32.gmra.mrb[0].mxu0 %v551
      %v634 = vpop.f32.mrb[0].mxu0
      %v635 = vadd.f32 %v536, %v634
      %v636 = vpop.f32.mrb[0].mxu0
      %v637 = vadd.f32 %v536, %v636
      %638 = vmatprep.mubr.f32.mxu0 0.0
      %639 = vmatmul.mubr.f32.gmra.mrb[0].mxu0 %v554
      %v640 = vpop.f32.mrb[0].mxu0
      %v641 = vadd.f32 %v541, %v640
      %v642 = vpop.f32.mrb[0].mxu0
      %v643 = vadd.f32 %v541, %v642
      %644 = vdwg.mxu0
      %v645 = vmax.f32 %v623, 0.0
      %v646 = vmax.f32 %v625, 0.0
      %v647 = vmax.f32 %v629, 0.0
      %v648 = vmax.f32 %v631, 0.0
      %v649 = vmax.f32 %v635, 0.0
      %v650 = vmax.f32 %v637, 0.0
      %v651 = vmax.f32 %v641, 0.0
      %v652 = vmax.f32 %v643, 0.0
      %653 = vrot.lane.b32.xlu0 %v645, 17
      %v654 = vpop.permute.xlu0 %653
      %655 = vrot.lane.b32.xlu0 %v647, 17
      %v656 = vpop.permute.xlu0 %655
      %657 = vrot.lane.b32.xlu0 %v649, 17
      %v658 = vpop.permute.xlu0 %657
      %659 = vrot.lane.b32.xlu0 %v651, 17
      %v660 = vpop.permute.xlu0 %659
      %661 = vrot.lane.b32.xlu0 %v646, 17
      %v662 = vpop.permute.xlu0 %661
      %663 = vrot.lane.b32.xlu0 %v648, 17
      %v664 = vpop.permute.xlu0 %663
      %665 = vrot.lane.b32.xlu0 %v650, 17
      %v666 = vpop.permute.xlu0 %665
      %667 = vrot.lane.b32.xlu0 %v652, 17
      %v668 = vpop.permute.xlu0 %667
      %v669 = vsel %vm308, %v654, %v662
      %v670 = vsel %vm308, %v656, %v664
      %v671 = vsel %vm308, %v658, %v666
      %v672 = vsel %vm308, %v660, %v668
      %v673 = vsel %vm308, %v662, %v654
      %v674 = vsel %vm308, %v664, %v656
      %v675 = vsel %vm308, %v666, %v658
      %v676 = vsel %vm308, %v668, %v660
      %v677 = vld [vmem:[%s1] ss:$8 sm:$0x3]
      %v679 = vlaneseq
      %v680 = vshrl.u32 %v679, 7
      %v681 = vsub.s32 0, %v680
      %v682 = vrot.slane %v677, %v681
      %v683 = vlaneseq
      %v684 = vshrl.u32 %v683, 7
      %v685 = vsub.s32 1, %v684
      %v686 = vrot.slane %v677, %v685
      %v689 = vmul.f32 %v673, %v682
      %v690 = vmul.f32 %v669, %v686
      %v691 = vmul.f32 %v674, %v682
      %v692 = vmul.f32 %v670, %v686
      %v693 = vmul.f32 %v675, %v682
      %v694 = vmul.f32 %v671, %v686
      %v695 = vmul.f32 %v676, %v682
      %v696 = vmul.f32 %v672, %v686
      %697 = vst [vmem:[#allocation3] sm:$0xff] %v689
      %698 = vst [vmem:[#allocation3 + $0x8] sm:$0xff] %v690
      %699 = vst [vmem:[#allocation3 + $0x10] sm:$0xff] %v691
      %700 = vst [vmem:[#allocation3 + $0x18] sm:$0xff] %v692
      %701 = vst [vmem:[#allocation3 + $0x20] sm:$0xff] %v693
      %702 = vst [vmem:[#allocation3 + $0x28] sm:$0xff] %v694
      %703 = vst [vmem:[#allocation3 + $0x30] sm:$0xff] %v695
      %704 = vst [vmem:[#allocation3 + $0x38] sm:$0xff] %v696
      %705 = vrot.lane.b32.xlu0 %v645, 16
      %v706 = vpop.permute.xlu0 %705
      %707 = vrot.lane.b32.xlu0 %v647, 16
      %v708 = vpop.permute.xlu0 %707
      %709 = vrot.lane.b32.xlu0 %v649, 16
      %v710 = vpop.permute.xlu0 %709
      %711 = vrot.lane.b32.xlu0 %v651, 16
      %v712 = vpop.permute.xlu0 %711
      %713 = vrot.lane.b32.xlu0 %v646, 16
      %v714 = vpop.permute.xlu0 %713
      %715 = vrot.lane.b32.xlu0 %v648, 16
      %v716 = vpop.permute.xlu0 %715
      %717 = vrot.lane.b32.xlu0 %v650, 16
      %v718 = vpop.permute.xlu0 %717
      %719 = vrot.lane.b32.xlu0 %v652, 16
      %v720 = vpop.permute.xlu0 %719
      %v721 = vsel %vm331, %v706, %v714
      %v722 = vsel %vm331, %v708, %v716
      %v723 = vsel %vm331, %v710, %v718
      %v724 = vsel %vm331, %v712, %v720
      %v725 = vsel %vm331, %v714, %v706
      %v726 = vsel %vm331, %v716, %v708
      %v727 = vsel %vm331, %v718, %v710
      %v728 = vsel %vm331, %v720, %v712
      %v729 = vld [vmem:[%s334] ss:$8 sm:$0x3]
      %v731 = vlaneseq
      %v732 = vshrl.u32 %v731, 7
      %v733 = vsub.s32 0, %v732
      %v734 = vrot.slane %v729, %v733
      %v735 = vlaneseq
      %v736 = vshrl.u32 %v735, 7
      %v737 = vsub.s32 1, %v736
      %v738 = vrot.slane %v729, %v737
      %v741 = vmul.f32 %v725, %v734
      %v742 = vmul.f32 %v721, %v738
      %v743 = vmul.f32 %v726, %v734
      %v744 = vmul.f32 %v722, %v738
      %v745 = vmul.f32 %v727, %v734
      %v746 = vmul.f32 %v723, %v738
      %v747 = vmul.f32 %v728, %v734
      %v748 = vmul.f32 %v724, %v738
      %749 = vst [vmem:[#allocation3 + $0x40] sm:$0xff] %v741
      %750 = vst [vmem:[#allocation3 + $0x48] sm:$0xff] %v742
      %751 = vst [vmem:[#allocation3 + $0x50] sm:$0xff] %v743
      %752 = vst [vmem:[#allocation3 + $0x58] sm:$0xff] %v744
      %753 = vst [vmem:[#allocation3 + $0x60] sm:$0xff] %v745
      %754 = vst [vmem:[#allocation3 + $0x68] sm:$0xff] %v746
      %755 = vst [vmem:[#allocation3 + $0x70] sm:$0xff] %v747
      %756 = vst [vmem:[#allocation3 + $0x78] sm:$0xff] %v748
      %757 = vrot.lane.b32.xlu0 %v645, 15
      %v758 = vpop.permute.xlu0 %757
      %759 = vrot.lane.b32.xlu0 %v647, 15
      %v760 = vpop.permute.xlu0 %759
      %761 = vrot.lane.b32.xlu0 %v649, 15
      %v762 = vpop.permute.xlu0 %761
      %763 = vrot.lane.b32.xlu0 %v651, 15
      %v764 = vpop.permute.xlu0 %763
      %765 = vrot.lane.b32.xlu0 %v646, 15
      %v766 = vpop.permute.xlu0 %765
      %767 = vrot.lane.b32.xlu0 %v648, 15
      %v768 = vpop.permute.xlu0 %767
      %769 = vrot.lane.b32.xlu0 %v650, 15
      %v770 = vpop.permute.xlu0 %769
      %771 = vrot.lane.b32.xlu0 %v652, 15
      %v772 = vpop.permute.xlu0 %771
      %v773 = vsel %vm355, %v758, %v766
      %v774 = vsel %vm355, %v760, %v768
      %v775 = vsel %vm355, %v762, %v770
      %v776 = vsel %vm355, %v764, %v772
      %v777 = vsel %vm355, %v766, %v758
      %v778 = vsel %vm355, %v768, %v760
      %v779 = vsel %vm355, %v770, %v762
      %v780 = vsel %vm355, %v772, %v764
      %v781 = vld [vmem:[%s358] ss:$8 sm:$0x3]
      %v783 = vlaneseq
      %v784 = vshrl.u32 %v783, 7
      %v785 = vsub.s32 0, %v784
      %v786 = vrot.slane %v781, %v785
      %v787 = vlaneseq
      %v788 = vshrl.u32 %v787, 7
      %v789 = vsub.s32 1, %v788
      %v790 = vrot.slane %v781, %v789
      %v793 = vmul.f32 %v777, %v786
      %v794 = vmul.f32 %v773, %v790
      %v795 = vmul.f32 %v778, %v786
      %v796 = vmul.f32 %v774, %v790
      %v797 = vmul.f32 %v779, %v786
      %v798 = vmul.f32 %v775, %v790
      %v799 = vmul.f32 %v780, %v786
      %v800 = vmul.f32 %v776, %v790
      %801 = vst [vmem:[#allocation3 + $0x80] sm:$0xff] %v793
      %802 = vst [vmem:[#allocation3 + $0x88] sm:$0xff] %v794
      %803 = vst [vmem:[#allocation3 + $0x90] sm:$0xff] %v795
      %804 = vst [vmem:[#allocation3 + $0x98] sm:$0xff] %v796
      %805 = vst [vmem:[#allocation3 + $0xa0] sm:$0xff] %v797
      %806 = vst [vmem:[#allocation3 + $0xa8] sm:$0xff] %v798
      %807 = vst [vmem:[#allocation3 + $0xb0] sm:$0xff] %v799
      %808 = vst [vmem:[#allocation3 + $0xb8] sm:$0xff] %v800
      %809 = vrot.lane.b32.xlu0 %v645, 1
      %v810 = vpop.permute.xlu0 %809
      %811 = vrot.lane.b32.xlu0 %v647, 1
      %v812 = vpop.permute.xlu0 %811
      %813 = vrot.lane.b32.xlu0 %v649, 1
      %v814 = vpop.permute.xlu0 %813
      %815 = vrot.lane.b32.xlu0 %v651, 1
      %v816 = vpop.permute.xlu0 %815
      %817 = vrot.lane.b32.xlu0 %v646, 1
      %v818 = vpop.permute.xlu0 %817
      %819 = vrot.lane.b32.xlu0 %v648, 1
      %v820 = vpop.permute.xlu0 %819
      %821 = vrot.lane.b32.xlu0 %v650, 1
      %v822 = vpop.permute.xlu0 %821
      %823 = vrot.lane.b32.xlu0 %v652, 1
      %v824 = vpop.permute.xlu0 %823
      %v825 = vsel %vm379, %v810, %v818
      %v826 = vsel %vm379, %v812, %v820
      %v827 = vsel %vm379, %v814, %v822
      %v828 = vsel %vm379, %v816, %v824
      %v829 = vsel %vm379, %v818, %v810
      %v830 = vsel %vm379, %v820, %v812
      %v831 = vsel %vm379, %v822, %v814
      %v832 = vsel %vm379, %v824, %v816
      %v833 = vld [vmem:[%s382] ss:$8 sm:$0x3]
      %v835 = vlaneseq
      %v836 = vshrl.u32 %v835, 7
      %v837 = vsub.s32 0, %v836
      %v838 = vrot.slane %v833, %v837
      %v839 = vlaneseq
      %v840 = vshrl.u32 %v839, 7
      %v841 = vsub.s32 1, %v840
      %v842 = vrot.slane %v833, %v841
      %v845 = vmul.f32 %v829, %v838
      %v846 = vmul.f32 %v825, %v842
      %v847 = vmul.f32 %v830, %v838
      %v848 = vmul.f32 %v826, %v842
      %v849 = vmul.f32 %v831, %v838
      %v850 = vmul.f32 %v827, %v842
      %v851 = vmul.f32 %v832, %v838
      %v852 = vmul.f32 %v828, %v842
      %853 = vst [vmem:[#allocation3 + $0xc0] sm:$0xff] %v845
      %854 = vst [vmem:[#allocation3 + $0xc8] sm:$0xff] %v846
      %855 = vst [vmem:[#allocation3 + $0xd0] sm:$0xff] %v847
      %856 = vst [vmem:[#allocation3 + $0xd8] sm:$0xff] %v848
      %857 = vst [vmem:[#allocation3 + $0xe0] sm:$0xff] %v849
      %858 = vst [vmem:[#allocation3 + $0xe8] sm:$0xff] %v850
      %859 = vst [vmem:[#allocation3 + $0xf0] sm:$0xff] %v851
      %860 = vst [vmem:[#allocation3 + $0xf8] sm:$0xff] %v852
      %861 = vst [vmem:[#allocation3 + $0x100] sm:$0xff] %v645
      %862 = vst [vmem:[#allocation3 + $0x108] sm:$0xff] %v646
      %863 = vst [vmem:[#allocation3 + $0x110] sm:$0xff] %v647
      %864 = vst [vmem:[#allocation3 + $0x118] sm:$0xff] %v648
      %865 = vst [vmem:[#allocation3 + $0x120] sm:$0xff] %v649
      %866 = vst [vmem:[#allocation3 + $0x128] sm:$0xff] %v650
      %867 = vst [vmem:[#allocation3 + $0x130] sm:$0xff] %v651
      %868 = vst [vmem:[#allocation3 + $0x138] sm:$0xff] %v652
      %869 = vrot.lane.b32.xlu0 %v645, 127
      %v870 = vpop.permute.xlu0 %869
      %871 = vrot.lane.b32.xlu0 %v647, 127
      %v872 = vpop.permute.xlu0 %871
      %873 = vrot.lane.b32.xlu0 %v649, 127
      %v874 = vpop.permute.xlu0 %873
      %875 = vrot.lane.b32.xlu0 %v651, 127
      %v876 = vpop.permute.xlu0 %875
      %877 = vrot.lane.b32.xlu0 %v646, 127
      %v878 = vpop.permute.xlu0 %877
      %879 = vrot.lane.b32.xlu0 %v648, 127
      %v880 = vpop.permute.xlu0 %879
      %881 = vrot.lane.b32.xlu0 %v650, 127
      %v882 = vpop.permute.xlu0 %881
      %883 = vrot.lane.b32.xlu0 %v652, 127
      %v884 = vpop.permute.xlu0 %883
      %v885 = vsel %vm405, %v870, %v878
      %v886 = vsel %vm405, %v872, %v880
      %v887 = vsel %vm405, %v874, %v882
      %v888 = vsel %vm405, %v876, %v884
      %v889 = vsel %vm405, %v878, %v870
      %v890 = vsel %vm405, %v880, %v872
      %v891 = vsel %vm405, %v882, %v874
      %v892 = vsel %vm405, %v884, %v876
      %v893 = vld [vmem:[%s408] ss:$8 sm:$0x3]
      %v895 = vlaneseq
      %v896 = vshrl.u32 %v895, 7
      %v897 = vsub.s32 0, %v896
      %v898 = vrot.slane %v893, %v897
      %v899 = vlaneseq
      %v900 = vshrl.u32 %v899, 7
      %v901 = vsub.s32 1, %v900
      %v902 = vrot.slane %v893, %v901
      %v905 = vmul.f32 %v885, %v898
      %v906 = vmul.f32 %v889, %v902
      %v907 = vmul.f32 %v886, %v898
      %v908 = vmul.f32 %v890, %v902
      %v909 = vmul.f32 %v887, %v898
      %v910 = vmul.f32 %v891, %v902
      %v911 = vmul.f32 %v888, %v898
      %v912 = vmul.f32 %v892, %v902
      %913 = vst [vmem:[#allocation3 + $0x140] sm:$0xff] %v905
      %914 = vst [vmem:[#allocation3 + $0x148] sm:$0xff] %v906
      %915 = vst [vmem:[#allocation3 + $0x150] sm:$0xff] %v907
      %916 = vst [vmem:[#allocation3 + $0x158] sm:$0xff] %v908
      %917 = vst [vmem:[#allocation3 + $0x160] sm:$0xff] %v909
      %918 = vst [vmem:[#allocation3 + $0x168] sm:$0xff] %v910
      %919 = vst [vmem:[#allocation3 + $0x170] sm:$0xff] %v911
      %920 = vst [vmem:[#allocation3 + $0x178] sm:$0xff] %v912
      %921 = vrot.lane.b32.xlu0 %v645, 113
      %v922 = vpop.permute.xlu0 %921
      %923 = vrot.lane.b32.xlu0 %v647, 113
      %v924 = vpop.permute.xlu0 %923
      %925 = vrot.lane.b32.xlu0 %v649, 113
      %v926 = vpop.permute.xlu0 %925
      %927 = vrot.lane.b32.xlu0 %v651, 113
      %v928 = vpop.permute.xlu0 %927
      %929 = vrot.lane.b32.xlu0 %v646, 113
      %v930 = vpop.permute.xlu0 %929
      %931 = vrot.lane.b32.xlu0 %v648, 113
      %v932 = vpop.permute.xlu0 %931
      %933 = vrot.lane.b32.xlu0 %v650, 113
      %v934 = vpop.permute.xlu0 %933
      %935 = vrot.lane.b32.xlu0 %v652, 113
      %v936 = vpop.permute.xlu0 %935
      %v937 = vsel %vm429, %v922, %v930
      %v938 = vsel %vm429, %v924, %v932
      %v939 = vsel %vm429, %v926, %v934
      %v940 = vsel %vm429, %v928, %v936
      %v941 = vsel %vm429, %v930, %v922
      %v942 = vsel %vm429, %v932, %v924
      %v943 = vsel %vm429, %v934, %v926
      %v944 = vsel %vm429, %v936, %v928
      %v945 = vld [vmem:[%s432] ss:$8 sm:$0x3]
      %v947 = vlaneseq
      %v948 = vshrl.u32 %v947, 7
      %v949 = vsub.s32 0, %v948
      %v950 = vrot.slane %v945, %v949
      %v951 = vlaneseq
      %v952 = vshrl.u32 %v951, 7
      %v953 = vsub.s32 1, %v952
      %v954 = vrot.slane %v945, %v953
      %v957 = vmul.f32 %v937, %v950
      %v958 = vmul.f32 %v941, %v954
      %v959 = vmul.f32 %v938, %v950
      %v960 = vmul.f32 %v942, %v954
      %v961 = vmul.f32 %v939, %v950
      %v962 = vmul.f32 %v943, %v954
      %v963 = vmul.f32 %v940, %v950
      %v964 = vmul.f32 %v944, %v954
      %965 = vst [vmem:[#allocation3 + $0x180] sm:$0xff] %v957
      %966 = vst [vmem:[#allocation3 + $0x188] sm:$0xff] %v958
      %967 = vst [vmem:[#allocation3 + $0x190] sm:$0xff] %v959
      %968 = vst [vmem:[#allocation3 + $0x198] sm:$0xff] %v960
      %969 = vst [vmem:[#allocation3 + $0x1a0] sm:$0xff] %v961
      %970 = vst [vmem:[#allocation3 + $0x1a8] sm:$0xff] %v962
      %971 = vst [vmem:[#allocation3 + $0x1b0] sm:$0xff] %v963
      %972 = vst [vmem:[#allocation3 + $0x1b8] sm:$0xff] %v964
      %973 = vrot.lane.b32.xlu0 %v645, 112
      %v974 = vpop.permute.xlu0 %973
      %975 = vrot.lane.b32.xlu0 %v647, 112
      %v976 = vpop.permute.xlu0 %975
      %977 = vrot.lane.b32.xlu0 %v649, 112
      %v978 = vpop.permute.xlu0 %977
      %979 = vrot.lane.b32.xlu0 %v651, 112
      %v980 = vpop.permute.xlu0 %979
      %981 = vrot.lane.b32.xlu0 %v646, 112
      %v982 = vpop.permute.xlu0 %981
      %983 = vrot.lane.b32.xlu0 %v648, 112
      %v984 = vpop.permute.xlu0 %983
      %985 = vrot.lane.b32.xlu0 %v650, 112
      %v986 = vpop.permute.xlu0 %985
      %987 = vrot.lane.b32.xlu0 %v652, 112
      %v988 = vpop.permute.xlu0 %987
      %v989 = vsel %vm453, %v974, %v982
      %v990 = vsel %vm453, %v976, %v984
      %v991 = vsel %vm453, %v978, %v986
      %v992 = vsel %vm453, %v980, %v988
      %v993 = vsel %vm453, %v982, %v974
      %v994 = vsel %vm453, %v984, %v976
      %v995 = vsel %vm453, %v986, %v978
      %v996 = vsel %vm453, %v988, %v980
      %v997 = vld [vmem:[%s456] ss:$8 sm:$0x3]
      %v999 = vlaneseq
      %v1000 = vshrl.u32 %v999, 7
      %v1001 = vsub.s32 0, %v1000
      %v1002 = vrot.slane %v997, %v1001
      %v1003 = vlaneseq
      %v1004 = vshrl.u32 %v1003, 7
      %v1005 = vsub.s32 1, %v1004
      %v1006 = vrot.slane %v997, %v1005
      %v1009 = vmul.f32 %v989, %v1002
      %v1010 = vmul.f32 %v993, %v1006
      %v1011 = vmul.f32 %v990, %v1002
      %v1012 = vmul.f32 %v994, %v1006
      %v1013 = vmul.f32 %v991, %v1002
      %v1014 = vmul.f32 %v995, %v1006
      %v1015 = vmul.f32 %v992, %v1002
      %v1016 = vmul.f32 %v996, %v1006
      %1017 = vst [vmem:[#allocation3 + $0x1c0] sm:$0xff] %v1009
      %1018 = vst [vmem:[#allocation3 + $0x1c8] sm:$0xff] %v1010
      %1019 = vst [vmem:[#allocation3 + $0x1d0] sm:$0xff] %v1011
      %1020 = vst [vmem:[#allocation3 + $0x1d8] sm:$0xff] %v1012
      %1021 = vst [vmem:[#allocation3 + $0x1e0] sm:$0xff] %v1013
      %1022 = vst [vmem:[#allocation3 + $0x1e8] sm:$0xff] %v1014
      %1023 = vst [vmem:[#allocation3 + $0x1f0] sm:$0xff] %v1015
      %1024 = vst [vmem:[#allocation3 + $0x1f8] sm:$0xff] %v1016
      %1025 = vrot.lane.b32.xlu0 %v645, 111
      %v1026 = vpop.permute.xlu0 %1025
      %1027 = vrot.lane.b32.xlu0 %v647, 111
      %v1028 = vpop.permute.xlu0 %1027
      %1029 = vrot.lane.b32.xlu0 %v649, 111
      %v1030 = vpop.permute.xlu0 %1029
      %1031 = vrot.lane.b32.xlu0 %v651, 111
      %v1032 = vpop.permute.xlu0 %1031
      %1033 = vrot.lane.b32.xlu0 %v646, 111
      %v1034 = vpop.permute.xlu0 %1033
      %1035 = vrot.lane.b32.xlu0 %v648, 111
      %v1036 = vpop.permute.xlu0 %1035
      %1037 = vrot.lane.b32.xlu0 %v650, 111
      %v1038 = vpop.permute.xlu0 %1037
      %1039 = vrot.lane.b32.xlu0 %v652, 111
      %v1040 = vpop.permute.xlu0 %1039
      %v1041 = vsel %vm477, %v1026, %v1034
      %v1042 = vsel %vm477, %v1028, %v1036
      %v1043 = vsel %vm477, %v1030, %v1038
      %v1044 = vsel %vm477, %v1032, %v1040
      %v1045 = vsel %vm477, %v1034, %v1026
      %v1046 = vsel %vm477, %v1036, %v1028
      %v1047 = vsel %vm477, %v1038, %v1030
      %v1048 = vsel %vm477, %v1040, %v1032
      %v1049 = vld [vmem:[%s480] ss:$8 sm:$0x3]
      %v1051 = vlaneseq
      %v1052 = vshrl.u32 %v1051, 7
      %v1053 = vsub.s32 0, %v1052
      %v1054 = vrot.slane %v1049, %v1053
      %v1055 = vlaneseq
      %v1056 = vshrl.u32 %v1055, 7
      %v1057 = vsub.s32 1, %v1056
      %v1058 = vrot.slane %v1049, %v1057
      %v1061 = vmul.f32 %v1041, %v1054
      %v1062 = vmul.f32 %v1045, %v1058
      %v1063 = vmul.f32 %v1042, %v1054
      %v1064 = vmul.f32 %v1046, %v1058
      %v1065 = vmul.f32 %v1043, %v1054
      %v1066 = vmul.f32 %v1047, %v1058
      %v1067 = vmul.f32 %v1044, %v1054
      %v1068 = vmul.f32 %v1048, %v1058
      %1069 = vst [vmem:[#allocation3 + $0x200] sm:$0xff] %v1061
      %1070 = vst [vmem:[#allocation3 + $0x208] sm:$0xff] %v1062
      %1071 = vst [vmem:[#allocation3 + $0x210] sm:$0xff] %v1063
      %1072 = vst [vmem:[#allocation3 + $0x218] sm:$0xff] %v1064
      %1073 = vst [vmem:[#allocation3 + $0x220] sm:$0xff] %v1065
      %1074 = vst [vmem:[#allocation3 + $0x228] sm:$0xff] %v1066
      %1075 = vst [vmem:[#allocation3 + $0x230] sm:$0xff] %v1067
      %1076 = vst [vmem:[#allocation3 + $0x238] sm:$0xff] %v1068
      %v1077 = vld [vmem:[%s3] sm:$0xff]
      %v1078 = vld [vmem:[%s3 + $0x8] sm:$0xff]
      %v1079 = vld [vmem:[%s3 + $0x10] sm:$0xff]
      %v1080 = vld [vmem:[%s3 + $0x18] sm:$0xff]
      %v1081 = vld [vmem:[%s3 + $0x20] sm:$0xff]
      %v1082 = vld [vmem:[%s3 + $0x28] sm:$0xff]
      %v1083 = vld [vmem:[%s3 + $0x30] sm:$0xff]
      %v1084 = vld [vmem:[%s3 + $0x38] sm:$0xff]
      %v1085 = vld [vmem:[%s3 + $0x40] sm:$0xff]
      %v1086 = vld [vmem:[%s3 + $0x48] sm:$0xff]
      %v1087 = vld [vmem:[%s3 + $0x50] sm:$0xff]
      %v1088 = vld [vmem:[%s3 + $0x58] sm:$0xff]
      %v1089 = vld [vmem:[%s3 + $0x60] sm:$0xff]
      %v1090 = vld [vmem:[%s3 + $0x68] sm:$0xff]
      %v1091 = vld [vmem:[%s3 + $0x70] sm:$0xff]
      %v1092 = vld [vmem:[%s3 + $0x78] sm:$0xff]
      %v1093 = vld [vmem:[%s3 + $0x80] sm:$0xff]
      %v1094 = vld [vmem:[%s3 + $0x88] sm:$0xff]
      %v1095 = vld [vmem:[%s3 + $0x90] sm:$0xff]
      %v1096 = vld [vmem:[%s3 + $0x98] sm:$0xff]
      %v1097 = vld [vmem:[%s3 + $0xa0] sm:$0xff]
      %v1098 = vld [vmem:[%s3 + $0xa8] sm:$0xff]
      %v1099 = vld [vmem:[%s3 + $0xb0] sm:$0xff]
      %v1100 = vld [vmem:[%s3 + $0xb8] sm:$0xff]
      %v1101 = vld [vmem:[#allocation3] sm:$0xff]
      %v1102 = vld [vmem:[#allocation3 + $0x8] sm:$0xff]
      %v1103 = vld [vmem:[#allocation3 + $0x10] sm:$0xff]
      %v1104 = vld [vmem:[#allocation3 + $0x18] sm:$0xff]
      %v1105 = vld [vmem:[#allocation3 + $0x20] sm:$0xff]
      %v1106 = vld [vmem:[#allocation3 + $0x28] sm:$0xff]
      %v1107 = vld [vmem:[#allocation3 + $0x30] sm:$0xff]
      %v1108 = vld [vmem:[#allocation3 + $0x38] sm:$0xff]
      %v1109 = vld [vmem:[#allocation3 + $0x40] sm:$0xff]
      %v1110 = vld [vmem:[#allocation3 + $0x48] sm:$0xff]
      %v1111 = vld [vmem:[#allocation3 + $0x50] sm:$0xff]
      %v1112 = vld [vmem:[#allocation3 + $0x58] sm:$0xff]
      %v1113 = vld [vmem:[#allocation3 + $0x60] sm:$0xff]
      %v1114 = vld [vmem:[#allocation3 + $0x68] sm:$0xff]
      %v1115 = vld [vmem:[#allocation3 + $0x70] sm:$0xff]
      %v1116 = vld [vmem:[#allocation3 + $0x78] sm:$0xff]
      %v1117 = vld [vmem:[#allocation3 + $0x80] sm:$0xff]
      %v1118 = vld [vmem:[#allocation3 + $0x88] sm:$0xff]
      %v1119 = vld [vmem:[#allocation3 + $0x90] sm:$0xff]
      %v1120 = vld [vmem:[#allocation3 + $0x98] sm:$0xff]
      %v1121 = vld [vmem:[#allocation3 + $0xa0] sm:$0xff]
      %v1122 = vld [vmem:[#allocation3 + $0xa8] sm:$0xff]
      %v1123 = vld [vmem:[#allocation3 + $0xb0] sm:$0xff]
      %v1124 = vld [vmem:[#allocation3 + $0xb8] sm:$0xff]
      %v1125 = vld [vmem:[#allocation3 + $0xc0] sm:$0xff]
      %v1126 = vld [vmem:[#allocation3 + $0xc8] sm:$0xff]
      %v1127 = vld [vmem:[#allocation3 + $0xd0] sm:$0xff]
      %v1128 = vld [vmem:[#allocation3 + $0xd8] sm:$0xff]
      %v1129 = vld [vmem:[#allocation3 + $0xe0] sm:$0xff]
      %v1130 = vld [vmem:[#allocation3 + $0xe8] sm:$0xff]
      %v1131 = vld [vmem:[#allocation3 + $0xf0] sm:$0xff]
      %v1132 = vld [vmem:[#allocation3 + $0xf8] sm:$0xff]
      %v1133 = vld [vmem:[#allocation3 + $0x100] sm:$0xff]
      %v1134 = vld [vmem:[#allocation3 + $0x108] sm:$0xff]
      %v1135 = vld [vmem:[#allocation3 + $0x110] sm:$0xff]
      %v1136 = vld [vmem:[#allocation3 + $0x118] sm:$0xff]
      %v1137 = vld [vmem:[#allocation3 + $0x120] sm:$0xff]
      %v1138 = vld [vmem:[#allocation3 + $0x128] sm:$0xff]
      %v1139 = vld [vmem:[#allocation3 + $0x130] sm:$0xff]
      %v1140 = vld [vmem:[#allocation3 + $0x138] sm:$0xff]
      %v1141 = vld [vmem:[#allocation3 + $0x140] sm:$0xff]
      %v1142 = vld [vmem:[#allocation3 + $0x148] sm:$0xff]
      %v1143 = vld [vmem:[#allocation3 + $0x150] sm:$0xff]
      %v1144 = vld [vmem:[#allocation3 + $0x158] sm:$0xff]
      %v1145 = vld [vmem:[#allocation3 + $0x160] sm:$0xff]
      %v1146 = vld [vmem:[#allocation3 + $0x168] sm:$0xff]
      %v1147 = vld [vmem:[#allocation3 + $0x170] sm:$0xff]
      %v1148 = vld [vmem:[#allocation3 + $0x178] sm:$0xff]
      %v1149 = vld [vmem:[#allocation3 + $0x180] sm:$0xff]
      %v1150 = vld [vmem:[#allocation3 + $0x188] sm:$0xff]
      %v1151 = vld [vmem:[#allocation3 + $0x190] sm:$0xff]
      %v1152 = vld [vmem:[#allocation3 + $0x198] sm:$0xff]
      %v1153 = vld [vmem:[#allocation3 + $0x1a0] sm:$0xff]
      %v1154 = vld [vmem:[#allocation3 + $0x1a8] sm:$0xff]
      %v1155 = vld [vmem:[#allocation3 + $0x1b0] sm:$0xff]
      %v1156 = vld [vmem:[#allocation3 + $0x1b8] sm:$0xff]
      %v1157 = vld [vmem:[#allocation3 + $0x1c0] sm:$0xff]
      %v1158 = vld [vmem:[#allocation3 + $0x1c8] sm:$0xff]
      %v1159 = vld [vmem:[#allocation3 + $0x1d0] sm:$0xff]
      %v1160 = vld [vmem:[#allocation3 + $0x1d8] sm:$0xff]
      %v1161 = vld [vmem:[#allocation3 + $0x1e0] sm:$0xff]
      %v1162 = vld [vmem:[#allocation3 + $0x1e8] sm:$0xff]
      %v1163 = vld [vmem:[#allocation3 + $0x1f0] sm:$0xff]
      %v1164 = vld [vmem:[#allocation3 + $0x1f8] sm:$0xff]
      %v1165 = vld [vmem:[#allocation3 + $0x200] sm:$0xff]
      %v1166 = vld [vmem:[#allocation3 + $0x208] sm:$0xff]
      %v1167 = vld [vmem:[#allocation3 + $0x210] sm:$0xff]
      %v1168 = vld [vmem:[#allocation3 + $0x218] sm:$0xff]
      %v1169 = vld [vmem:[#allocation3 + $0x220] sm:$0xff]
      %v1170 = vld [vmem:[#allocation3 + $0x228] sm:$0xff]
      %v1171 = vld [vmem:[#allocation3 + $0x230] sm:$0xff]
      %v1172 = vld [vmem:[#allocation3 + $0x238] sm:$0xff]
      %v1173 = vld [vmem:[%s6 + $0x20] sm:$0xff]
      %v1174 = vld [vmem:[%s6 + $0x28] sm:$0xff]
      %v1175 = vld [vmem:[%s6 + $0x30] sm:$0xff]
      %v1176 = vld [vmem:[%s6 + $0x38] sm:$0xff]
      %v1177 = vld [vmem:[%s6 + $0x40] sm:$0xff]
      %v1178 = vld [vmem:[%s6 + $0x48] sm:$0xff]
      %v1179 = vld [vmem:[%s6 + $0x50] sm:$0xff]
      %v1180 = vld [vmem:[%s6 + $0x58] sm:$0xff]
      %1182 = vset.pattern.permute.xlu0 0
      %1183 = vperm.xlu0 %1182, %v1173
      %v1184 = vpop.permute.xlu0 %1183
      %1187 = vset.pattern.permute.xlu0 0
      %1188 = vperm.xlu0 %1187, %v1174
      %v1189 = vpop.permute.xlu0 %1188
      %1192 = vset.pattern.permute.xlu0 0
      %1193 = vperm.xlu0 %1192, %v1175
      %v1194 = vpop.permute.xlu0 %1193
      %1197 = vset.pattern.permute.xlu0 0
      %1198 = vperm.xlu0 %1197, %v1176
      %v1199 = vpop.permute.xlu0 %1198
      %1202 = vset.pattern.permute.xlu0 0
      %1203 = vperm.xlu0 %1202, %v1177
      %v1204 = vpop.permute.xlu0 %1203
      %1207 = vset.pattern.permute.xlu0 0
      %1208 = vperm.xlu0 %1207, %v1178
      %v1209 = vpop.permute.xlu0 %1208
      %1212 = vset.pattern.permute.xlu0 0
      %1213 = vperm.xlu0 %1212, %v1179
      %v1214 = vpop.permute.xlu0 %1213
      %1217 = vset.pattern.permute.xlu0 0
      %1218 = vperm.xlu0 %1217, %v1180
      %v1219 = vpop.permute.xlu0 %1218
      %vm1221 = vcmask 261120
      %v1223 = vsel %vm1221, %v1079, 0
      %v1226 = vsel %vm1221, %v1082, 0
      %v1229 = vsel %vm1221, %v1085, 0
      %v1232 = vsel %vm1221, %v1088, 0
      %v1235 = vsel %vm1221, %v1091, 0
      %v1238 = vsel %vm1221, %v1094, 0
      %v1241 = vsel %vm1221, %v1097, 0
      %v1244 = vsel %vm1221, %v1100, 0
      %1246 = vmatprep.subr.mxu0 %v1102
      %1247 = vmatpush1.msra.mxu0 %v1101
      %1248 = vmatprep.subr.mxu0 %v1104
      %1249 = vmatpush1.msra.mxu0 %v1103
      %1250 = vmatprep.subr.mxu0 %v1106
      %1251 = vmatpush1.msra.mxu0 %v1105
      %1252 = vmatprep.subr.mxu0 %v1108
      %1253 = vmatpush1.msra.mxu0 %v1107
      %1254 = vmatprep.subr.mxu0 %v1110
      %1255 = vmatpush1.msra.mxu0 %v1109
      %1256 = vmatprep.subr.mxu0 %v1112
      %1257 = vmatpush1.msra.mxu0 %v1111
      %1258 = vmatprep.subr.mxu0 %v1114
      %1259 = vmatpush1.msra.mxu0 %v1113
      %1260 = vmatprep.subr.mxu0 %v1116
      %1261 = vmatpush1.msra.mxu0 %v1115
      %1262 = vmatprep.subr.mxu0 %v1118
      %1263 = vmatpush1.msra.mxu0 %v1117
      %1264 = vmatprep.subr.mxu0 %v1120
      %1265 = vmatpush1.msra.mxu0 %v1119
      %1266 = vmatprep.subr.mxu0 %v1122
      %1267 = vmatpush1.msra.mxu0 %v1121
      %1268 = vmatprep.subr.mxu0 %v1124
      %1269 = vmatpush1.msra.mxu0 %v1123
      %1270 = vmatprep.subr.mxu0 %v1126
      %1271 = vmatpush1.msra.mxu0 %v1125
      %1272 = vmatprep.subr.mxu0 %v1128
      %1273 = vmatpush1.msra.mxu0 %v1127
      %1274 = vmatprep.subr.mxu0 %v1130
      %1275 = vmatpush1.msra.mxu0 %v1129
      %1276 = vmatprep.subr.mxu0 %v1132
      %1277 = vmatpush1.msra.mxu0 %v1131
      %1278 = vmatprep.subr.mxu0 %v1134
      %1279 = vmatpush1.msra.mxu0 %v1133
      %1280 = vmatprep.subr.mxu0 %v1136
      %1281 = vmatpush1.msra.mxu0 %v1135
      %1282 = vmatprep.subr.mxu0 %v1138
      %1283 = vmatpush1.msra.mxu0 %v1137
      %1284 = vmatprep.subr.mxu0 %v1140
      %1285 = vmatpush1.msra.mxu0 %v1139
      %1286 = vmatprep.subr.mxu0 %v1142
      %1287 = vmatpush1.msra.mxu0 %v1141
      %1288 = vmatprep.subr.mxu0 %v1144
      %1289 = vmatpush1.msra.mxu0 %v1143
      %1290 = vmatprep.subr.mxu0 %v1146
      %1291 = vmatpush1.msra.mxu0 %v1145
      %1292 = vmatprep.subr.mxu0 %v1148
      %1293 = vmatpush1.msra.mxu0 %v1147
      %1294 = vmatprep.subr.mxu0 %v1150
      %1295 = vmatpush1.msra.mxu0 %v1149
      %1296 = vmatprep.subr.mxu0 %v1152
      %1297 = vmatpush1.msra.mxu0 %v1151
      %1298 = vmatprep.subr.mxu0 %v1154
      %1299 = vmatpush1.msra.mxu0 %v1153
      %1300 = vmatprep.subr.mxu0 %v1156
      %1301 = vmatpush1.msra.mxu0 %v1155
      %1302 = vmatprep.subr.mxu0 %v1158
      %1303 = vmatpush1.msra.mxu0 %v1157
      %1304 = vmatprep.subr.mxu0 %v1160
      %1305 = vmatpush1.msra.mxu0 %v1159
      %1306 = vmatprep.subr.mxu0 %v1162
      %1307 = vmatpush1.msra.mxu0 %v1161
      %1308 = vmatprep.subr.mxu0 %v1164
      %1309 = vmatpush1.msra.mxu0 %v1163
      %1310 = vmatprep.mubr.f32.mxu0 %v1078
      %1311 = vmatmul.mubr.f32.gmra.mrb[0].mxu0 %v1077
      %v1312 = vpop.f32.mrb[0].mxu0
      %v1313 = vadd.f32 %v1184, %v1312
      %v1314 = vpop.f32.mrb[0].mxu0
      %v1315 = vadd.f32 %v1184, %v1314
      %1316 = vmatprep.mubr.f32.mxu0 %v1081
      %1317 = vmatmul.mubr.f32.gmra.mrb[0].mxu0 %v1080
      %v1318 = vpop.f32.mrb[0].mxu0
      %v1319 = vadd.f32 %v1189, %v1318
      %v1320 = vpop.f32.mrb[0].mxu0
      %v1321 = vadd.f32 %v1189, %v1320
      %1322 = vmatprep.mubr.f32.mxu0 %v1084
      %1323 = vmatmul.mubr.f32.gmra.mrb[0].mxu0 %v1083
      %v1324 = vpop.f32.mrb[0].mxu0
      %v1325 = vadd.f32 %v1194, %v1324
      %v1326 = vpop.f32.mrb[0].mxu0
      %v1327 = vadd.f32 %v1194, %v1326
      %1328 = vmatprep.mubr.f32.mxu0 %v1087
      %1329 = vmatmul.mubr.f32.gmra.mrb[0].mxu0 %v1086
      %v1330 = vpop.f32.mrb[0].mxu0
      %v1331 = vadd.f32 %v1199, %v1330
      %v1332 = vpop.f32.mrb[0].mxu0
      %v1333 = vadd.f32 %v1199, %v1332
      %1334 = vmatprep.mubr.f32.mxu0 %v1090
      %1335 = vmatmul.mubr.f32.gmra.mrb[0].mxu0 %v1089
      %v1336 = vpop.f32.mrb[0].mxu0
      %v1337 = vadd.f32 %v1204, %v1336
      %v1338 = vpop.f32.mrb[0].mxu0
      %v1339 = vadd.f32 %v1204, %v1338
      %1340 = vmatprep.mubr.f32.mxu0 %v1093
      %1341 = vmatmul.mubr.f32.gmra.mrb[0].mxu0 %v1092
      %v1342 = vpop.f32.mrb[0].mxu0
      %v1343 = vadd.f32 %v1209, %v1342
      %v1344 = vpop.f32.mrb[0].mxu0
      %v1345 = vadd.f32 %v1209, %v1344
      %1346 = vmatprep.mubr.f32.mxu0 %v1096
      %1347 = vmatmul.mubr.f32.gmra.mrb[0].mxu0 %v1095
      %v1348 = vpop.f32.mrb[0].mxu0
      %v1349 = vadd.f32 %v1214, %v1348
      %v1350 = vpop.f32.mrb[0].mxu0
      %v1351 = vadd.f32 %v1214, %v1350
      %1352 = vmatprep.mubr.f32.mxu0 %v1099
      %1353 = vmatmul.mubr.f32.gmra.mrb[0].mxu0 %v1098
      %v1354 = vpop.f32.mrb[0].mxu0
      %v1355 = vadd.f32 %v1219, %v1354
      %v1356 = vpop.f32.mrb[0].mxu0
      %v1357 = vadd.f32 %v1219, %v1356
      %1358 = vdwg.mxu0
      %1359 = vmatprep.subr.mxu0 %v1166
      %1360 = vmatpush1.msra.mxu0 %v1165
      %1361 = vmatprep.subr.mxu0 %v1168
      %1362 = vmatpush1.msra.mxu0 %v1167
      %1363 = vmatprep.subr.mxu0 %v1170
      %1364 = vmatpush1.msra.mxu0 %v1169
      %1365 = vmatprep.subr.mxu0 %v1172
      %1366 = vmatpush1.msra.mxu0 %v1171
      %1367 = vmatprep.subr.mxu0 0.0
      %1368 = vmatpush1.msra.mxu0 0.0
      %1369 = vmatprep.subr.mxu0 0.0
      %1370 = vmatpush1.msra.mxu0 0.0
      %1371 = vmatprep.subr.mxu0 0.0
      %1372 = vmatpush1.msra.mxu0 0.0
      %1373 = vmatprep.subr.mxu0 0.0
      %1374 = vmatpush1.msra.mxu0 0.0
      %1375 = vmatprep.subr.mxu0 0.0
      %1376 = vmatpush1.msra.mxu0 0.0
      %1377 = vmatprep.subr.mxu0 0.0
      %1378 = vmatpush1.msra.mxu0 0.0
      %1379 = vmatprep.subr.mxu0 0.0
      %1380 = vmatpush1.msra.mxu0 0.0
      %1381 = vmatprep.subr.mxu0 0.0
      %1382 = vmatpush1.msra.mxu0 0.0
      %1383 = vmatprep.subr.mxu0 0.0
      %1384 = vmatpush1.msra.mxu0 0.0
      %1385 = vmatprep.subr.mxu0 0.0
      %1386 = vmatpush1.msra.mxu0 0.0
      %1387 = vmatprep.subr.mxu0 0.0
      %1388 = vmatpush1.msra.mxu0 0.0
      %1389 = vmatprep.subr.mxu0 0.0
      %1390 = vmatpush1.msra.mxu0 0.0
      %1391 = vmatprep.subr.mxu0 0.0
      %1392 = vmatpush1.msra.mxu0 0.0
      %1393 = vmatprep.subr.mxu0 0.0
      %1394 = vmatpush1.msra.mxu0 0.0
      %1395 = vmatprep.subr.mxu0 0.0
      %1396 = vmatpush1.msra.mxu0 0.0
      %1397 = vmatprep.subr.mxu0 0.0
      %1398 = vmatpush1.msra.mxu0 0.0
      %1399 = vmatprep.subr.mxu0 0.0
      %1400 = vmatpush1.msra.mxu0 0.0
      %1401 = vmatprep.subr.mxu0 0.0
      %1402 = vmatpush1.msra.mxu0 0.0
      %1403 = vmatprep.subr.mxu0 0.0
      %1404 = vmatpush1.msra.mxu0 0.0
      %1405 = vmatprep.subr.mxu0 0.0
      %1406 = vmatpush1.msra.mxu0 0.0
      %1407 = vmatprep.subr.mxu0 0.0
      %1408 = vmatpush1.msra.mxu0 0.0
      %1409 = vmatprep.subr.mxu0 0.0
      %1410 = vmatpush1.msra.mxu0 0.0
      %1411 = vmatprep.subr.mxu0 0.0
      %1412 = vmatpush1.msra.mxu0 0.0
      %1413 = vmatprep.subr.mxu0 0.0
      %1414 = vmatpush1.msra.mxu0 0.0
      %1415 = vmatprep.subr.mxu0 0.0
      %1416 = vmatpush1.msra.mxu0 0.0
      %1417 = vmatprep.subr.mxu0 0.0
      %1418 = vmatpush1.msra.mxu0 0.0
      %1419 = vmatprep.subr.mxu0 0.0
      %1420 = vmatpush1.msra.mxu0 0.0
      %1421 = vmatprep.subr.mxu0 0.0
      %1422 = vmatpush1.msra.mxu0 0.0
      %1423 = vmatprep.mubr.f32.mxu0 0.0
      %1424 = vmatmul.mubr.f32.gmra.mrb[0].mxu0 %v1223
      %v1425 = vpop.f32.mrb[0].mxu0
      %v1426 = vadd.f32 %v1313, %v1425
      %v1427 = vpop.f32.mrb[0].mxu0
      %v1428 = vadd.f32 %v1315, %v1427
      %1429 = vmatprep.mubr.f32.mxu0 0.0
      %1430 = vmatmul.mubr.f32.gmra.mrb[0].mxu0 %v1226
      %v1431 = vpop.f32.mrb[0].mxu0
      %v1432 = vadd.f32 %v1319, %v1431
      %v1433 = vpop.f32.mrb[0].mxu0
      %v1434 = vadd.f32 %v1321, %v1433
      %1435 = vmatprep.mubr.f32.mxu0 0.0
      %1436 = vmatmul.mubr.f32.gmra.mrb[0].mxu0 %v1229
      %v1437 = vpop.f32.mrb[0].mxu0
      %v1438 = vadd.f32 %v1325, %v1437
      %v1439 = vpop.f32.mrb[0].mxu0
      %v1440 = vadd.f32 %v1327, %v1439
      %1441 = vmatprep.mubr.f32.mxu0 0.0
      %1442 = vmatmul.mubr.f32.gmra.mrb[0].mxu0 %v1232
      %v1443 = vpop.f32.mrb[0].mxu0
      %v1444 = vadd.f32 %v1331, %v1443
      %v1445 = vpop.f32.mrb[0].mxu0
      %v1446 = vadd.f32 %v1333, %v1445
      %1447 = vmatprep.mubr.f32.mxu0 0.0
      %1448 = vmatmul.mubr.f32.gmra.mrb[0].mxu0 %v1235
      %v1449 = vpop.f32.mrb[0].mxu0
      %v1450 = vadd.f32 %v1337, %v1449
      %v1451 = vpop.f32.mrb[0].mxu0
      %v1452 = vadd.f32 %v1339, %v1451
      %1453 = vmatprep.mubr.f32.mxu0 0.0
      %1454 = vmatmul.mubr.f32.gmra.mrb[0].mxu0 %v1238
      %v1455 = vpop.f32.mrb[0].mxu0
      %v1456 = vadd.f32 %v1343, %v1455
      %v1457 = vpop.f32.mrb[0].mxu0
      %v1458 = vadd.f32 %v1345, %v1457
      %1459 = vmatprep.mubr.f32.mxu0 0.0
      %1460 = vmatmul.mubr.f32.gmra.mrb[0].mxu0 %v1241
      %v1461 = vpop.f32.mrb[0].mxu0
      %v1462 = vadd.f32 %v1349, %v1461
      %v1463 = vpop.f32.mrb[0].mxu0
      %v1464 = vadd.f32 %v1351, %v1463
      %1465 = vmatprep.mubr.f32.mxu0 0.0
      %1466 = vmatmul.mubr.f32.gmra.mrb[0].mxu0 %v1244
      %v1467 = vpop.f32.mrb[0].mxu0
      %v1468 = vadd.f32 %v1355, %v1467
      %v1469 = vpop.f32.mrb[0].mxu0
      %v1470 = vadd.f32 %v1357, %v1469
      %1471 = vdwg.mxu0
      %v1472 = vmax.f32 %v1426, 0.0
      %v1473 = vmax.f32 %v1428, 0.0
      %v1474 = vmax.f32 %v1432, 0.0
      %v1475 = vmax.f32 %v1434, 0.0
      %v1476 = vmax.f32 %v1438, 0.0
      %v1477 = vmax.f32 %v1440, 0.0
      %v1478 = vmax.f32 %v1444, 0.0
      %v1479 = vmax.f32 %v1446, 0.0
      %v1480 = vmax.f32 %v1450, 0.0
      %v1481 = vmax.f32 %v1452, 0.0
      %v1482 = vmax.f32 %v1456, 0.0
      %v1483 = vmax.f32 %v1458, 0.0
      %v1484 = vmax.f32 %v1462, 0.0
      %v1485 = vmax.f32 %v1464, 0.0
      %v1486 = vmax.f32 %v1468, 0.0
      %v1487 = vmax.f32 %v1470, 0.0
      %1488 = vrot.lane.b32.xlu0 %v1472, 17
      %v1489 = vpop.permute.xlu0 %1488
      %1490 = vrot.lane.b32.xlu0 %v1474, 17
      %v1491 = vpop.permute.xlu0 %1490
      %1492 = vrot.lane.b32.xlu0 %v1476, 17
      %v1493 = vpop.permute.xlu0 %1492
      %1494 = vrot.lane.b32.xlu0 %v1478, 17
      %v1495 = vpop.permute.xlu0 %1494
      %1496 = vrot.lane.b32.xlu0 %v1480, 17
      %v1497 = vpop.permute.xlu0 %1496
      %1498 = vrot.lane.b32.xlu0 %v1482, 17
      %v1499 = vpop.permute.xlu0 %1498
      %1500 = vrot.lane.b32.xlu0 %v1484, 17
      %v1501 = vpop.permute.xlu0 %1500
      %1502 = vrot.lane.b32.xlu0 %v1486, 17
      %v1503 = vpop.permute.xlu0 %1502
      %1504 = vrot.lane.b32.xlu0 %v1473, 17
      %v1505 = vpop.permute.xlu0 %1504
      %1506 = vrot.lane.b32.xlu0 %v1475, 17
      %v1507 = vpop.permute.xlu0 %1506
      %1508 = vrot.lane.b32.xlu0 %v1477, 17
      %v1509 = vpop.permute.xlu0 %1508
      %1510 = vrot.lane.b32.xlu0 %v1479, 17
      %v1511 = vpop.permute.xlu0 %1510
      %1512 = vrot.lane.b32.xlu0 %v1481, 17
      %v1513 = vpop.permute.xlu0 %1512
      %1514 = vrot.lane.b32.xlu0 %v1483, 17
      %v1515 = vpop.permute.xlu0 %1514
      %1516 = vrot.lane.b32.xlu0 %v1485, 17
      %v1517 = vpop.permute.xlu0 %1516
      %1518 = vrot.lane.b32.xlu0 %v1487, 17
      %v1519 = vpop.permute.xlu0 %1518
      %v1520 = vsel %vm308, %v1489, %v1505
      %v1521 = vsel %vm308, %v1491, %v1507
      %v1522 = vsel %vm308, %v1493, %v1509
      %v1523 = vsel %vm308, %v1495, %v1511
      %v1524 = vsel %vm308, %v1497, %v1513
      %v1525 = vsel %vm308, %v1499, %v1515
      %v1526 = vsel %vm308, %v1501, %v1517
      %v1527 = vsel %vm308, %v1503, %v1519
      %v1528 = vsel %vm308, %v1505, %v1489
      %v1529 = vsel %vm308, %v1507, %v1491
      %v1530 = vsel %vm308, %v1509, %v1493
      %v1531 = vsel %vm308, %v1511, %v1495
      %v1532 = vsel %vm308, %v1513, %v1497
      %v1533 = vsel %vm308, %v1515, %v1499
      %v1534 = vsel %vm308, %v1517, %v1501
      %v1535 = vsel %vm308, %v1519, %v1503
      %v1536 = vld [vmem:[%s1] ss:$8 sm:$0x3]
      %v1538 = vlaneseq
      %v1539 = vshrl.u32 %v1538, 7
      %v1540 = vsub.s32 0, %v1539
      %v1541 = vrot.slane %v1536, %v1540
      %v1542 = vlaneseq
      %v1543 = vshrl.u32 %v1542, 7
      %v1544 = vsub.s32 1, %v1543
      %v1545 = vrot.slane %v1536, %v1544
      %v1548 = vmul.f32 %v1528, %v1541
      %v1549 = vmul.f32 %v1520, %v1545
      %v1550 = vmul.f32 %v1529, %v1541
      %v1551 = vmul.f32 %v1521, %v1545
      %v1552 = vmul.f32 %v1530, %v1541
      %v1553 = vmul.f32 %v1522, %v1545
      %v1554 = vmul.f32 %v1531, %v1541
      %v1555 = vmul.f32 %v1523, %v1545
      %v1556 = vmul.f32 %v1532, %v1541
      %v1557 = vmul.f32 %v1524, %v1545
      %v1558 = vmul.f32 %v1533, %v1541
      %v1559 = vmul.f32 %v1525, %v1545
      %v1560 = vmul.f32 %v1534, %v1541
      %v1561 = vmul.f32 %v1526, %v1545
      %v1562 = vmul.f32 %v1535, %v1541
      %v1563 = vmul.f32 %v1527, %v1545
      %1564 = vst [vmem:[#allocation3] sm:$0xff] %v1548
      %1565 = vst [vmem:[#allocation3 + $0x8] sm:$0xff] %v1549
      %1566 = vst [vmem:[#allocation3 + $0x10] sm:$0xff] %v1550
      %1567 = vst [vmem:[#allocation3 + $0x18] sm:$0xff] %v1551
      %1568 = vst [vmem:[#allocation3 + $0x20] sm:$0xff] %v1552
      %1569 = vst [vmem:[#allocation3 + $0x28] sm:$0xff] %v1553
      %1570 = vst [vmem:[#allocation3 + $0x30] sm:$0xff] %v1554
      %1571 = vst [vmem:[#allocation3 + $0x38] sm:$0xff] %v1555
      %1572 = vst [vmem:[#allocation3 + $0x40] sm:$0xff] %v1556
      %1573 = vst [vmem:[#allocation3 + $0x48] sm:$0xff] %v1557
      %1574 = vst [vmem:[#allocation3 + $0x50] sm:$0xff] %v1558
      %1575 = vst [vmem:[#allocation3 + $0x58] sm:$0xff] %v1559
      %1576 = vst [vmem:[#allocation3 + $0x60] sm:$0xff] %v1560
      %1577 = vst [vmem:[#allocation3 + $0x68] sm:$0xff] %v1561
      %1578 = vst [vmem:[#allocation3 + $0x70] sm:$0xff] %v1562
      %1579 = vst [vmem:[#allocation3 + $0x78] sm:$0xff] %v1563
      %1580 = vrot.lane.b32.xlu0 %v1472, 16
      %v1581 = vpop.permute.xlu0 %1580
      %1582 = vrot.lane.b32.xlu0 %v1474, 16
      %v1583 = vpop.permute.xlu0 %1582
      %1584 = vrot.lane.b32.xlu0 %v1476, 16
      %v1585 = vpop.permute.xlu0 %1584
      %1586 = vrot.lane.b32.xlu0 %v1478, 16
      %v1587 = vpop.permute.xlu0 %1586
      %1588 = vrot.lane.b32.xlu0 %v1480, 16
      %v1589 = vpop.permute.xlu0 %1588
      %1590 = vrot.lane.b32.xlu0 %v1482, 16
      %v1591 = vpop.permute.xlu0 %1590
      %1592 = vrot.lane.b32.xlu0 %v1484, 16
      %v1593 = vpop.permute.xlu0 %1592
      %1594 = vrot.lane.b32.xlu0 %v1486, 16
      %v1595 = vpop.permute.xlu0 %1594
      %1596 = vrot.lane.b32.xlu0 %v1473, 16
      %v1597 = vpop.permute.xlu0 %1596
      %1598 = vrot.lane.b32.xlu0 %v1475, 16
      %v1599 = vpop.permute.xlu0 %1598
      %1600 = vrot.lane.b32.xlu0 %v1477, 16
      %v1601 = vpop.permute.xlu0 %1600
      %1602 = vrot.lane.b32.xlu0 %v1479, 16
      %v1603 = vpop.permute.xlu0 %1602
      %1604 = vrot.lane.b32.xlu0 %v1481, 16
      %v1605 = vpop.permute.xlu0 %1604
      %1606 = vrot.lane.b32.xlu0 %v1483, 16
      %v1607 = vpop.permute.xlu0 %1606
      %1608 = vrot.lane.b32.xlu0 %v1485, 16
      %v1609 = vpop.permute.xlu0 %1608
      %1610 = vrot.lane.b32.xlu0 %v1487, 16
      %v1611 = vpop.permute.xlu0 %1610
      %v1612 = vsel %vm331, %v1581, %v1597
      %v1613 = vsel %vm331, %v1583, %v1599
      %v1614 = vsel %vm331, %v1585, %v1601
      %v1615 = vsel %vm331, %v1587, %v1603
      %v1616 = vsel %vm331, %v1589, %v1605
      %v1617 = vsel %vm331, %v1591, %v1607
      %v1618 = vsel %vm331, %v1593, %v1609
      %v1619 = vsel %vm331, %v1595, %v1611
      %v1620 = vsel %vm331, %v1597, %v1581
      %v1621 = vsel %vm331, %v1599, %v1583
      %v1622 = vsel %vm331, %v1601, %v1585
      %v1623 = vsel %vm331, %v1603, %v1587
      %v1624 = vsel %vm331, %v1605, %v1589
      %v1625 = vsel %vm331, %v1607, %v1591
      %v1626 = vsel %vm331, %v1609, %v1593
      %v1627 = vsel %vm331, %v1611, %v1595
      %v1628 = vld [vmem:[%s334] ss:$8 sm:$0x3]
      %v1630 = vlaneseq
      %v1631 = vshrl.u32 %v1630, 7
      %v1632 = vsub.s32 0, %v1631
      %v1633 = vrot.slane %v1628, %v1632
      %v1634 = vlaneseq
      %v1635 = vshrl.u32 %v1634, 7
      %v1636 = vsub.s32 1, %v1635
      %v1637 = vrot.slane %v1628, %v1636
      %v1640 = vmul.f32 %v1620, %v1633
      %v1641 = vmul.f32 %v1612, %v1637
      %v1642 = vmul.f32 %v1621, %v1633
      %v1643 = vmul.f32 %v1613, %v1637
      %v1644 = vmul.f32 %v1622, %v1633
      %v1645 = vmul.f32 %v1614, %v1637
      %v1646 = vmul.f32 %v1623, %v1633
      %v1647 = vmul.f32 %v1615, %v1637
      %v1648 = vmul.f32 %v1624, %v1633
      %v1649 = vmul.f32 %v1616, %v1637
      %v1650 = vmul.f32 %v1625, %v1633
      %v1651 = vmul.f32 %v1617, %v1637
      %v1652 = vmul.f32 %v1626, %v1633
      %v1653 = vmul.f32 %v1618, %v1637
      %v1654 = vmul.f32 %v1627, %v1633
      %v1655 = vmul.f32 %v1619, %v1637
      %1656 = vst [vmem:[#allocation3 + $0x80] sm:$0xff] %v1640
      %1657 = vst [vmem:[#allocation3 + $0x88] sm:$0xff] %v1641
      %1658 = vst [vmem:[#allocation3 + $0x90] sm:$0xff] %v1642
      %1659 = vst [vmem:[#allocation3 + $0x98] sm:$0xff] %v1643
      %1660 = vst [vmem:[#allocation3 + $0xa0] sm:$0xff] %v1644
      %1661 = vst [vmem:[#allocation3 + $0xa8] sm:$0xff] %v1645
      %1662 = vst [vmem:[#allocation3 + $0xb0] sm:$0xff] %v1646
      %1663 = vst [vmem:[#allocation3 + $0xb8] sm:$0xff] %v1647
      %1664 = vst [vmem:[#allocation3 + $0xc0] sm:$0xff] %v1648
      %1665 = vst [vmem:[#allocation3 + $0xc8] sm:$0xff] %v1649
      %1666 = vst [vmem:[#allocation3 + $0xd0] sm:$0xff] %v1650
      %1667 = vst [vmem:[#allocation3 + $0xd8] sm:$0xff] %v1651
      %1668 = vst [vmem:[#allocation3 + $0xe0] sm:$0xff] %v1652
      %1669 = vst [vmem:[#allocation3 + $0xe8] sm:$0xff] %v1653
      %1670 = vst [vmem:[#allocation3 + $0xf0] sm:$0xff] %v1654
      %1671 = vst [vmem:[#allocation3 + $0xf8] sm:$0xff] %v1655
      %1672 = vrot.lane.b32.xlu0 %v1472, 15
      %v1673 = vpop.permute.xlu0 %1672
      %1674 = vrot.lane.b32.xlu0 %v1474, 15
      %v1675 = vpop.permute.xlu0 %1674
      %1676 = vrot.lane.b32.xlu0 %v1476, 15
      %v1677 = vpop.permute.xlu0 %1676
      %1678 = vrot.lane.b32.xlu0 %v1478, 15
      %v1679 = vpop.permute.xlu0 %1678
      %1680 = vrot.lane.b32.xlu0 %v1480, 15
      %v1681 = vpop.permute.xlu0 %1680
      %1682 = vrot.lane.b32.xlu0 %v1482, 15
      %v1683 = vpop.permute.xlu0 %1682
      %1684 = vrot.lane.b32.xlu0 %v1484, 15
      %v1685 = vpop.permute.xlu0 %1684
      %1686 = vrot.lane.b32.xlu0 %v1486, 15
      %v1687 = vpop.permute.xlu0 %1686
      %1688 = vrot.lane.b32.xlu0 %v1473, 15
      %v1689 = vpop.permute.xlu0 %1688
      %1690 = vrot.lane.b32.xlu0 %v1475, 15
      %v1691 = vpop.permute.xlu0 %1690
      %1692 = vrot.lane.b32.xlu0 %v1477, 15
      %v1693 = vpop.permute.xlu0 %1692
      %1694 = vrot.lane.b32.xlu0 %v1479, 15
      %v1695 = vpop.permute.xlu0 %1694
      %1696 = vrot.lane.b32.xlu0 %v1481, 15
      %v1697 = vpop.permute.xlu0 %1696
      %1698 = vrot.lane.b32.xlu0 %v1483, 15
      %v1699 = vpop.permute.xlu0 %1698
      %1700 = vrot.lane.b32.xlu0 %v1485, 15
      %v1701 = vpop.permute.xlu0 %1700
      %1702 = vrot.lane.b32.xlu0 %v1487, 15
      %v1703 = vpop.permute.xlu0 %1702
      %v1704 = vsel %vm355, %v1673, %v1689
      %v1705 = vsel %vm355, %v1675, %v1691
      %v1706 = vsel %vm355, %v1677, %v1693
      %v1707 = vsel %vm355, %v1679, %v1695
      %v1708 = vsel %vm355, %v1681, %v1697
      %v1709 = vsel %vm355, %v1683, %v1699
      %v1710 = vsel %vm355, %v1685, %v1701
      %v1711 = vsel %vm355, %v1687, %v1703
      %v1712 = vsel %vm355, %v1689, %v1673
      %v1713 = vsel %vm355, %v1691, %v1675
      %v1714 = vsel %vm355, %v1693, %v1677
      %v1715 = vsel %vm355, %v1695, %v1679
      %v1716 = vsel %vm355, %v1697, %v1681
      %v1717 = vsel %vm355, %v1699, %v1683
      %v1718 = vsel %vm355, %v1701, %v1685
      %v1719 = vsel %vm355, %v1703, %v1687
      %v1720 = vld [vmem:[%s358] ss:$8 sm:$0x3]
      %v1722 = vlaneseq
      %v1723 = vshrl.u32 %v1722, 7
      %v1724 = vsub.s32 0, %v1723
      %v1725 = vrot.slane %v1720, %v1724
      %v1726 = vlaneseq
      %v1727 = vshrl.u32 %v1726, 7
      %v1728 = vsub.s32 1, %v1727
      %v1729 = vrot.slane %v1720, %v1728
      %v1732 = vmul.f32 %v1712, %v1725
      %v1733 = vmul.f32 %v1704, %v1729
      %v1734 = vmul.f32 %v1713, %v1725
      %v1735 = vmul.f32 %v1705, %v1729
      %v1736 = vmul.f32 %v1714, %v1725
      %v1737 = vmul.f32 %v1706, %v1729
      %v1738 = vmul.f32 %v1715, %v1725
      %v1739 = vmul.f32 %v1707, %v1729
      %v1740 = vmul.f32 %v1716, %v1725
      %v1741 = vmul.f32 %v1708, %v1729
      %v1742 = vmul.f32 %v1717, %v1725
      %v1743 = vmul.f32 %v1709, %v1729
      %v1744 = vmul.f32 %v1718, %v1725
      %v1745 = vmul.f32 %v1710, %v1729
      %v1746 = vmul.f32 %v1719, %v1725
      %v1747 = vmul.f32 %v1711, %v1729
      %1748 = vst [vmem:[#allocation3 + $0x100] sm:$0xff] %v1732
      %1749 = vst [vmem:[#allocation3 + $0x108] sm:$0xff] %v1733
      %1750 = vst [vmem:[#allocation3 + $0x110] sm:$0xff] %v1734
      %1751 = vst [vmem:[#allocation3 + $0x118] sm:$0xff] %v1735
      %1752 = vst [vmem:[#allocation3 + $0x120] sm:$0xff] %v1736
      %1753 = vst [vmem:[#allocation3 + $0x128] sm:$0xff] %v1737
      %1754 = vst [vmem:[#allocation3 + $0x130] sm:$0xff] %v1738
      %1755 = vst [vmem:[#allocation3 + $0x138] sm:$0xff] %v1739
      %1756 = vst [vmem:[#allocation3 + $0x140] sm:$0xff] %v1740
      %1757 = vst [vmem:[#allocation3 + $0x148] sm:$0xff] %v1741
      %1758 = vst [vmem:[#allocation3 + $0x150] sm:$0xff] %v1742
      %1759 = vst [vmem:[#allocation3 + $0x158] sm:$0xff] %v1743
      %1760 = vst [vmem:[#allocation3 + $0x160] sm:$0xff] %v1744
      %1761 = vst [vmem:[#allocation3 + $0x168] sm:$0xff] %v1745
      %1762 = vst [vmem:[#allocation3 + $0x170] sm:$0xff] %v1746
      %1763 = vst [vmem:[#allocation3 + $0x178] sm:$0xff] %v1747
      %1764 = vrot.lane.b32.xlu0 %v1472, 1
      %v1765 = vpop.permute.xlu0 %1764
      %1766 = vrot.lane.b32.xlu0 %v1474, 1
      %v1767 = vpop.permute.xlu0 %1766
      %1768 = vrot.lane.b32.xlu0 %v1476, 1
      %v1769 = vpop.permute.xlu0 %1768
      %1770 = vrot.lane.b32.xlu0 %v1478, 1
      %v1771 = vpop.permute.xlu0 %1770
      %1772 = vrot.lane.b32.xlu0 %v1480, 1
      %v1773 = vpop.permute.xlu0 %1772
      %1774 = vrot.lane.b32.xlu0 %v1482, 1
      %v1775 = vpop.permute.xlu0 %1774
      %1776 = vrot.lane.b32.xlu0 %v1484, 1
      %v1777 = vpop.permute.xlu0 %1776
      %1778 = vrot.lane.b32.xlu0 %v1486, 1
      %v1779 = vpop.permute.xlu0 %1778
      %1780 = vrot.lane.b32.xlu0 %v1473, 1
      %v1781 = vpop.permute.xlu0 %1780
      %1782 = vrot.lane.b32.xlu0 %v1475, 1
      %v1783 = vpop.permute.xlu0 %1782
      %1784 = vrot.lane.b32.xlu0 %v1477, 1
      %v1785 = vpop.permute.xlu0 %1784
      %1786 = vrot.lane.b32.xlu0 %v1479, 1
      %v1787 = vpop.permute.xlu0 %1786
      %1788 = vrot.lane.b32.xlu0 %v1481, 1
      %v1789 = vpop.permute.xlu0 %1788
      %1790 = vrot.lane.b32.xlu0 %v1483, 1
      %v1791 = vpop.permute.xlu0 %1790
      %1792 = vrot.lane.b32.xlu0 %v1485, 1
      %v1793 = vpop.permute.xlu0 %1792
      %1794 = vrot.lane.b32.xlu0 %v1487, 1
      %v1795 = vpop.permute.xlu0 %1794
      %v1796 = vsel %vm379, %v1765, %v1781
      %v1797 = vsel %vm379, %v1767, %v1783
      %v1798 = vsel %vm379, %v1769, %v1785
      %v1799 = vsel %vm379, %v1771, %v1787
      %v1800 = vsel %vm379, %v1773, %v1789
      %v1801 = vsel %vm379, %v1775, %v1791
      %v1802 = vsel %vm379, %v1777, %v1793
      %v1803 = vsel %vm379, %v1779, %v1795
      %v1804 = vsel %vm379, %v1781, %v1765
      %v1805 = vsel %vm379, %v1783, %v1767
      %v1806 = vsel %vm379, %v1785, %v1769
      %v1807 = vsel %vm379, %v1787, %v1771
      %v1808 = vsel %vm379, %v1789, %v1773
      %v1809 = vsel %vm379, %v1791, %v1775
      %v1810 = vsel %vm379, %v1793, %v1777
      %v1811 = vsel %vm379, %v1795, %v1779
      %v1812 = vld [vmem:[%s382] ss:$8 sm:$0x3]
      %v1814 = vlaneseq
      %v1815 = vshrl.u32 %v1814, 7
      %v1816 = vsub.s32 0, %v1815
      %v1817 = vrot.slane %v1812, %v1816
      %v1818 = vlaneseq
      %v1819 = vshrl.u32 %v1818, 7
      %v1820 = vsub.s32 1, %v1819
      %v1821 = vrot.slane %v1812, %v1820
      %v1824 = vmul.f32 %v1804, %v1817
      %v1825 = vmul.f32 %v1796, %v1821
      %v1826 = vmul.f32 %v1805, %v1817
      %v1827 = vmul.f32 %v1797, %v1821
      %v1828 = vmul.f32 %v1806, %v1817
      %v1829 = vmul.f32 %v1798, %v1821
      %v1830 = vmul.f32 %v1807, %v1817
      %v1831 = vmul.f32 %v1799, %v1821
      %v1832 = vmul.f32 %v1808, %v1817
      %v1833 = vmul.f32 %v1800, %v1821
      %v1834 = vmul.f32 %v1809, %v1817
      %v1835 = vmul.f32 %v1801, %v1821
      %v1836 = vmul.f32 %v1810, %v1817
      %v1837 = vmul.f32 %v1802, %v1821
      %v1838 = vmul.f32 %v1811, %v1817
      %v1839 = vmul.f32 %v1803, %v1821
      %1840 = vst [vmem:[#allocation3 + $0x180] sm:$0xff] %v1824
      %1841 = vst [vmem:[#allocation3 + $0x188] sm:$0xff] %v1825
      %1842 = vst [vmem:[#allocation3 + $0x190] sm:$0xff] %v1826
      %1843 = vst [vmem:[#allocation3 + $0x198] sm:$0xff] %v1827
      %1844 = vst [vmem:[#allocation3 + $0x1a0] sm:$0xff] %v1828
      %1845 = vst [vmem:[#allocation3 + $0x1a8] sm:$0xff] %v1829
      %1846 = vst [vmem:[#allocation3 + $0x1b0] sm:$0xff] %v1830
      %1847 = vst [vmem:[#allocation3 + $0x1b8] sm:$0xff] %v1831
      %1848 = vst [vmem:[#allocation3 + $0x1c0] sm:$0xff] %v1832
      %1849 = vst [vmem:[#allocation3 + $0x1c8] sm:$0xff] %v1833
      %1850 = vst [vmem:[#allocation3 + $0x1d0] sm:$0xff] %v1834
      %1851 = vst [vmem:[#allocation3 + $0x1d8] sm:$0xff] %v1835
      %1852 = vst [vmem:[#allocation3 + $0x1e0] sm:$0xff] %v1836
      %1853 = vst [vmem:[#allocation3 + $0x1e8] sm:$0xff] %v1837
      %1854 = vst [vmem:[#allocation3 + $0x1f0] sm:$0xff] %v1838
      %1855 = vst [vmem:[#allocation3 + $0x1f8] sm:$0xff] %v1839
      %1856 = vst [vmem:[#allocation3 + $0x200] sm:$0xff] %v1472
      %1857 = vst [vmem:[#allocation3 + $0x208] sm:$0xff] %v1473
      %1858 = vst [vmem:[#allocation3 + $0x210] sm:$0xff] %v1474
      %1859 = vst [vmem:[#allocation3 + $0x218] sm:$0xff] %v1475
      %1860 = vst [vmem:[#allocation3 + $0x220] sm:$0xff] %v1476
      %1861 = vst [vmem:[#allocation3 + $0x228] sm:$0xff] %v1477
      %1862 = vst [vmem:[#allocation3 + $0x230] sm:$0xff] %v1478
      %1863 = vst [vmem:[#allocation3 + $0x238] sm:$0xff] %v1479
      %1864 = vst [vmem:[#allocation3 + $0x240] sm:$0xff] %v1480
      %1865 = vst [vmem:[#allocation3 + $0x248] sm:$0xff] %v1481
      %1866 = vst [vmem:[#allocation3 + $0x250] sm:$0xff] %v1482
      %1867 = vst [vmem:[#allocation3 + $0x258] sm:$0xff] %v1483
      %1868 = vst [vmem:[#allocation3 + $0x260] sm:$0xff] %v1484
      %1869 = vst [vmem:[#allocation3 + $0x268] sm:$0xff] %v1485
      %1870 = vst [vmem:[#allocation3 + $0x270] sm:$0xff] %v1486
      %1871 = vst [vmem:[#allocation3 + $0x278] sm:$0xff] %v1487
      %1872 = vrot.lane.b32.xlu0 %v1472, 127
      %v1873 = vpop.permute.xlu0 %1872
      %1874 = vrot.lane.b32.xlu0 %v1474, 127
      %v1875 = vpop.permute.xlu0 %1874
      %1876 = vrot.lane.b32.xlu0 %v1476, 127
      %v1877 = vpop.permute.xlu0 %1876
      %1878 = vrot.lane.b32.xlu0 %v1478, 127
      %v1879 = vpop.permute.xlu0 %1878
      %1880 = vrot.lane.b32.xlu0 %v1480, 127
      %v1881 = vpop.permute.xlu0 %1880
      %1882 = vrot.lane.b32.xlu0 %v1482, 127
      %v1883 = vpop.permute.xlu0 %1882
      %1884 = vrot.lane.b32.xlu0 %v1484, 127
      %v1885 = vpop.permute.xlu0 %1884
      %1886 = vrot.lane.b32.xlu0 %v1486, 127
      %v1887 = vpop.permute.xlu0 %1886
      %1888 = vrot.lane.b32.xlu0 %v1473, 127
      %v1889 = vpop.permute.xlu0 %1888
      %1890 = vrot.lane.b32.xlu0 %v1475, 127
      %v1891 = vpop.permute.xlu0 %1890
      %1892 = vrot.lane.b32.xlu0 %v1477, 127
      %v1893 = vpop.permute.xlu0 %1892
      %1894 = vrot.lane.b32.xlu0 %v1479, 127
      %v1895 = vpop.permute.xlu0 %1894
      %1896 = vrot.lane.b32.xlu0 %v1481, 127
      %v1897 = vpop.permute.xlu0 %1896
      %1898 = vrot.lane.b32.xlu0 %v1483, 127
      %v1899 = vpop.permute.xlu0 %1898
      %1900 = vrot.lane.b32.xlu0 %v1485, 127
      %v1901 = vpop.permute.xlu0 %1900
      %1902 = vrot.lane.b32.xlu0 %v1487, 127
      %v1903 = vpop.permute.xlu0 %1902
      %v1904 = vsel %vm405, %v1873, %v1889
      %v1905 = vsel %vm405, %v1875, %v1891
      %v1906 = vsel %vm405, %v1877, %v1893
      %v1907 = vsel %vm405, %v1879, %v1895
      %v1908 = vsel %vm405, %v1881, %v1897
      %v1909 = vsel %vm405, %v1883, %v1899
      %v1910 = vsel %vm405, %v1885, %v1901
      %v1911 = vsel %vm405, %v1887, %v1903
      %v1912 = vsel %vm405, %v1889, %v1873
      %v1913 = vsel %vm405, %v1891, %v1875
      %v1914 = vsel %vm405, %v1893, %v1877
      %v1915 = vsel %vm405, %v1895, %v1879
      %v1916 = vsel %vm405, %v1897, %v1881
      %v1917 = vsel %vm405, %v1899, %v1883
      %v1918 = vsel %vm405, %v1901, %v1885
      %v1919 = vsel %vm405, %v1903, %v1887
      %v1920 = vld [vmem:[%s408] ss:$8 sm:$0x3]
      %v1922 = vlaneseq
      %v1923 = vshrl.u32 %v1922, 7
      %v1924 = vsub.s32 0, %v1923
      %v1925 = vrot.slane %v1920, %v1924
      %v1926 = vlaneseq
      %v1927 = vshrl.u32 %v1926, 7
      %v1928 = vsub.s32 1, %v1927
      %v1929 = vrot.slane %v1920, %v1928
      %v1932 = vmul.f32 %v1904, %v1925
      %v1933 = vmul.f32 %v1912, %v1929
      %v1934 = vmul.f32 %v1905, %v1925
      %v1935 = vmul.f32 %v1913, %v1929
      %v1936 = vmul.f32 %v1906, %v1925
      %v1937 = vmul.f32 %v1914, %v1929
      %v1938 = vmul.f32 %v1907, %v1925
      %v1939 = vmul.f32 %v1915, %v1929
      %v1940 = vmul.f32 %v1908, %v1925
      %v1941 = vmul.f32 %v1916, %v1929
      %v1942 = vmul.f32 %v1909, %v1925
      %v1943 = vmul.f32 %v1917, %v1929
      %v1944 = vmul.f32 %v1910, %v1925
      %v1945 = vmul.f32 %v1918, %v1929
      %v1946 = vmul.f32 %v1911, %v1925
      %v1947 = vmul.f32 %v1919, %v1929
      %1948 = vst [vmem:[#allocation3 + $0x280] sm:$0xff] %v1932
      %1949 = vst [vmem:[#allocation3 + $0x288] sm:$0xff] %v1933
      %1950 = vst [vmem:[#allocation3 + $0x290] sm:$0xff] %v1934
      %1951 = vst [vmem:[#allocation3 + $0x298] sm:$0xff] %v1935
      %1952 = vst [vmem:[#allocation3 + $0x2a0] sm:$0xff] %v1936
      %1953 = vst [vmem:[#allocation3 + $0x2a8] sm:$0xff] %v1937
      %1954 = vst [vmem:[#allocation3 + $0x2b0] sm:$0xff] %v1938
      %1955 = vst [vmem:[#allocation3 + $0x2b8] sm:$0xff] %v1939
      %1956 = vst [vmem:[#allocation3 + $0x2c0] sm:$0xff] %v1940
      %1957 = vst [vmem:[#allocation3 + $0x2c8] sm:$0xff] %v1941
      %1958 = vst [vmem:[#allocation3 + $0x2d0] sm:$0xff] %v1942
      %1959 = vst [vmem:[#allocation3 + $0x2d8] sm:$0xff] %v1943
      %1960 = vst [vmem:[#allocation3 + $0x2e0] sm:$0xff] %v1944
      %1961 = vst [vmem:[#allocation3 + $0x2e8] sm:$0xff] %v1945
      %1962 = vst [vmem:[#allocation3 + $0x2f0] sm:$0xff] %v1946
      %1963 = vst [vmem:[#allocation3 + $0x2f8] sm:$0xff] %v1947
      %1964 = vrot.lane.b32.xlu0 %v1472, 113
      %v1965 = vpop.permute.xlu0 %1964
      %1966 = vrot.lane.b32.xlu0 %v1474, 113
      %v1967 = vpop.permute.xlu0 %1966
      %1968 = vrot.lane.b32.xlu0 %v1476, 113
      %v1969 = vpop.permute.xlu0 %1968
      %1970 = vrot.lane.b32.xlu0 %v1478, 113
      %v1971 = vpop.permute.xlu0 %1970
      %1972 = vrot.lane.b32.xlu0 %v1480, 113
      %v1973 = vpop.permute.xlu0 %1972
      %1974 = vrot.lane.b32.xlu0 %v1482, 113
      %v1975 = vpop.permute.xlu0 %1974
      %1976 = vrot.lane.b32.xlu0 %v1484, 113
      %v1977 = vpop.permute.xlu0 %1976
      %1978 = vrot.lane.b32.xlu0 %v1486, 113
      %v1979 = vpop.permute.xlu0 %1978
      %1980 = vrot.lane.b32.xlu0 %v1473, 113
      %v1981 = vpop.permute.xlu0 %1980
      %1982 = vrot.lane.b32.xlu0 %v1475, 113
      %v1983 = vpop.permute.xlu0 %1982
      %1984 = vrot.lane.b32.xlu0 %v1477, 113
      %v1985 = vpop.permute.xlu0 %1984
      %1986 = vrot.lane.b32.xlu0 %v1479, 113
      %v1987 = vpop.permute.xlu0 %1986
      %1988 = vrot.lane.b32.xlu0 %v1481, 113
      %v1989 = vpop.permute.xlu0 %1988
      %1990 = vrot.lane.b32.xlu0 %v1483, 113
      %v1991 = vpop.permute.xlu0 %1990
      %1992 = vrot.lane.b32.xlu0 %v1485, 113
      %v1993 = vpop.permute.xlu0 %1992
      %1994 = vrot.lane.b32.xlu0 %v1487, 113
      %v1995 = vpop.permute.xlu0 %1994
      %v1996 = vsel %vm429, %v1965, %v1981
      %v1997 = vsel %vm429, %v1967, %v1983
      %v1998 = vsel %vm429, %v1969, %v1985
      %v1999 = vsel %vm429, %v1971, %v1987
      %v2000 = vsel %vm429, %v1973, %v1989
      %v2001 = vsel %vm429, %v1975, %v1991
      %v2002 = vsel %vm429, %v1977, %v1993
      %v2003 = vsel %vm429, %v1979, %v1995
      %v2004 = vsel %vm429, %v1981, %v1965
      %v2005 = vsel %vm429, %v1983, %v1967
      %v2006 = vsel %vm429, %v1985, %v1969
      %v2007 = vsel %vm429, %v1987, %v1971
      %v2008 = vsel %vm429, %v1989, %v1973
      %v2009 = vsel %vm429, %v1991, %v1975
      %v2010 = vsel %vm429, %v1993, %v1977
      %v2011 = vsel %vm429, %v1995, %v1979
      %v2012 = vld [vmem:[%s432] ss:$8 sm:$0x3]
      %v2014 = vlaneseq
      %v2015 = vshrl.u32 %v2014, 7
      %v2016 = vsub.s32 0, %v2015
      %v2017 = vrot.slane %v2012, %v2016
      %v2018 = vlaneseq
      %v2019 = vshrl.u32 %v2018, 7
      %v2020 = vsub.s32 1, %v2019
      %v2021 = vrot.slane %v2012, %v2020
      %v2024 = vmul.f32 %v1996, %v2017
      %v2025 = vmul.f32 %v2004, %v2021
      %v2026 = vmul.f32 %v1997, %v2017
      %v2027 = vmul.f32 %v2005, %v2021
      %v2028 = vmul.f32 %v1998, %v2017
      %v2029 = vmul.f32 %v2006, %v2021
      %v2030 = vmul.f32 %v1999, %v2017
      %v2031 = vmul.f32 %v2007, %v2021
      %v2032 = vmul.f32 %v2000, %v2017
      %v2033 = vmul.f32 %v2008, %v2021
      %v2034 = vmul.f32 %v2001, %v2017
      %v2035 = vmul.f32 %v2009, %v2021
      %v2036 = vmul.f32 %v2002, %v2017
      %v2037 = vmul.f32 %v2010, %v2021
      %v2038 = vmul.f32 %v2003, %v2017
      %v2039 = vmul.f32 %v2011, %v2021
      %2040 = vst [vmem:[#allocation3 + $0x300] sm:$0xff] %v2024
      %2041 = vst [vmem:[#allocation3 + $0x308] sm:$0xff] %v2025
      %2042 = vst [vmem:[#allocation3 + $0x310] sm:$0xff] %v2026
      %2043 = vst [vmem:[#allocation3 + $0x318] sm:$0xff] %v2027
      %2044 = vst [vmem:[#allocation3 + $0x320] sm:$0xff] %v2028
      %2045 = vst [vmem:[#allocation3 + $0x328] sm:$0xff] %v2029
      %2046 = vst [vmem:[#allocation3 + $0x330] sm:$0xff] %v2030
      %2047 = vst [vmem:[#allocation3 + $0x338] sm:$0xff] %v2031
      %2048 = vst [vmem:[#allocation3 + $0x340] sm:$0xff] %v2032
      %2049 = vst [vmem:[#allocation3 + $0x348] sm:$0xff] %v2033
      %2050 = vst [vmem:[#allocation3 + $0x350] sm:$0xff] %v2034
      %2051 = vst [vmem:[#allocation3 + $0x358] sm:$0xff] %v2035
      %2052 = vst [vmem:[#allocation3 + $0x360] sm:$0xff] %v2036
      %2053 = vst [vmem:[#allocation3 + $0x368] sm:$0xff] %v2037
      %2054 = vst [vmem:[#allocation3 + $0x370] sm:$0xff] %v2038
      %2055 = vst [vmem:[#allocation3 + $0x378] sm:$0xff] %v2039
      %2056 = vrot.lane.b32.xlu0 %v1472, 112
      %v2057 = vpop.permute.xlu0 %2056
      %2058 = vrot.lane.b32.xlu0 %v1474, 112
      %v2059 = vpop.permute.xlu0 %2058
      %2060 = vrot.lane.b32.xlu0 %v1476, 112
      %v2061 = vpop.permute.xlu0 %2060
      %2062 = vrot.lane.b32.xlu0 %v1478, 112
      %v2063 = vpop.permute.xlu0 %2062
      %2064 = vrot.lane.b32.xlu0 %v1480, 112
      %v2065 = vpop.permute.xlu0 %2064
      %2066 = vrot.lane.b32.xlu0 %v1482, 112
      %v2067 = vpop.permute.xlu0 %2066
      %2068 = vrot.lane.b32.xlu0 %v1484, 112
      %v2069 = vpop.permute.xlu0 %2068
      %2070 = vrot.lane.b32.xlu0 %v1486, 112
      %v2071 = vpop.permute.xlu0 %2070
      %2072 = vrot.lane.b32.xlu0 %v1473, 112
      %v2073 = vpop.permute.xlu0 %2072
      %2074 = vrot.lane.b32.xlu0 %v1475, 112
      %v2075 = vpop.permute.xlu0 %2074
      %2076 = vrot.lane.b32.xlu0 %v1477, 112
      %v2077 = vpop.permute.xlu0 %2076
      %2078 = vrot.lane.b32.xlu0 %v1479, 112
      %v2079 = vpop.permute.xlu0 %2078
      %2080 = vrot.lane.b32.xlu0 %v1481, 112
      %v2081 = vpop.permute.xlu0 %2080
      %2082 = vrot.lane.b32.xlu0 %v1483, 112
      %v2083 = vpop.permute.xlu0 %2082
      %2084 = vrot.lane.b32.xlu0 %v1485, 112
      %v2085 = vpop.permute.xlu0 %2084
      %2086 = vrot.lane.b32.xlu0 %v1487, 112
      %v2087 = vpop.permute.xlu0 %2086
      %v2088 = vsel %vm453, %v2057, %v2073
      %v2089 = vsel %vm453, %v2059, %v2075
      %v2090 = vsel %vm453, %v2061, %v2077
      %v2091 = vsel %vm453, %v2063, %v2079
      %v2092 = vsel %vm453, %v2065, %v2081
      %v2093 = vsel %vm453, %v2067, %v2083
      %v2094 = vsel %vm453, %v2069, %v2085
      %v2095 = vsel %vm453, %v2071, %v2087
      %v2096 = vsel %vm453, %v2073, %v2057
      %v2097 = vsel %vm453, %v2075, %v2059
      %v2098 = vsel %vm453, %v2077, %v2061
      %v2099 = vsel %vm453, %v2079, %v2063
      %v2100 = vsel %vm453, %v2081, %v2065
      %v2101 = vsel %vm453, %v2083, %v2067
      %v2102 = vsel %vm453, %v2085, %v2069
      %v2103 = vsel %vm453, %v2087, %v2071
      %v2104 = vld [vmem:[%s456] ss:$8 sm:$0x3]
      %v2106 = vlaneseq
      %v2107 = vshrl.u32 %v2106, 7
      %v2108 = vsub.s32 0, %v2107
      %v2109 = vrot.slane %v2104, %v2108
      %v2110 = vlaneseq
      %v2111 = vshrl.u32 %v2110, 7
      %v2112 = vsub.s32 1, %v2111
      %v2113 = vrot.slane %v2104, %v2112
      %v2116 = vmul.f32 %v2088, %v2109
      %v2117 = vmul.f32 %v2096, %v2113
      %v2118 = vmul.f32 %v2089, %v2109
      %v2119 = vmul.f32 %v2097, %v2113
      %v2120 = vmul.f32 %v2090, %v2109
      %v2121 = vmul.f32 %v2098, %v2113
      %v2122 = vmul.f32 %v2091, %v2109
      %v2123 = vmul.f32 %v2099, %v2113
      %v2124 = vmul.f32 %v2092, %v2109
      %v2125 = vmul.f32 %v2100, %v2113
      %v2126 = vmul.f32 %v2093, %v2109
      %v2127 = vmul.f32 %v2101, %v2113
      %v2128 = vmul.f32 %v2094, %v2109
      %v2129 = vmul.f32 %v2102, %v2113
      %v2130 = vmul.f32 %v2095, %v2109
      %v2131 = vmul.f32 %v2103, %v2113
      %2132 = vst [vmem:[#allocation3 + $0x380] sm:$0xff] %v2116
      %2133 = vst [vmem:[#allocation3 + $0x388] sm:$0xff] %v2117
      %2134 = vst [vmem:[#allocation3 + $0x390] sm:$0xff] %v2118
      %2135 = vst [vmem:[#allocation3 + $0x398] sm:$0xff] %v2119
      %2136 = vst [vmem:[#allocation3 + $0x3a0] sm:$0xff] %v2120
      %2137 = vst [vmem:[#allocation3 + $0x3a8] sm:$0xff] %v2121
      %2138 = vst [vmem:[#allocation3 + $0x3b0] sm:$0xff] %v2122
      %2139 = vst [vmem:[#allocation3 + $0x3b8] sm:$0xff] %v2123
      %2140 = vst [vmem:[#allocation3 + $0x3c0] sm:$0xff] %v2124
      %2141 = vst [vmem:[#allocation3 + $0x3c8] sm:$0xff] %v2125
      %2142 = vst [vmem:[#allocation3 + $0x3d0] sm:$0xff] %v2126
      %2143 = vst [vmem:[#allocation3 + $0x3d8] sm:$0xff] %v2127
      %2144 = vst [vmem:[#allocation3 + $0x3e0] sm:$0xff] %v2128
      %2145 = vst [vmem:[#allocation3 + $0x3e8] sm:$0xff] %v2129
      %2146 = vst [vmem:[#allocation3 + $0x3f0] sm:$0xff] %v2130
      %2147 = vst [vmem:[#allocation3 + $0x3f8] sm:$0xff] %v2131
      %2148 = vrot.lane.b32.xlu0 %v1472, 111
      %v2149 = vpop.permute.xlu0 %2148
      %2150 = vrot.lane.b32.xlu0 %v1474, 111
      %v2151 = vpop.permute.xlu0 %2150
      %2152 = vrot.lane.b32.xlu0 %v1476, 111
      %v2153 = vpop.permute.xlu0 %2152
      %2154 = vrot.lane.b32.xlu0 %v1478, 111
      %v2155 = vpop.permute.xlu0 %2154
      %2156 = vrot.lane.b32.xlu0 %v1480, 111
      %v2157 = vpop.permute.xlu0 %2156
      %2158 = vrot.lane.b32.xlu0 %v1482, 111
      %v2159 = vpop.permute.xlu0 %2158
      %2160 = vrot.lane.b32.xlu0 %v1484, 111
      %v2161 = vpop.permute.xlu0 %2160
      %2162 = vrot.lane.b32.xlu0 %v1486, 111
      %v2163 = vpop.permute.xlu0 %2162
      %2164 = vrot.lane.b32.xlu0 %v1473, 111
      %v2165 = vpop.permute.xlu0 %2164
      %2166 = vrot.lane.b32.xlu0 %v1475, 111
      %v2167 = vpop.permute.xlu0 %2166
      %2168 = vrot.lane.b32.xlu0 %v1477, 111
      %v2169 = vpop.permute.xlu0 %2168
      %2170 = vrot.lane.b32.xlu0 %v1479, 111
      %v2171 = vpop.permute.xlu0 %2170
      %2172 = vrot.lane.b32.xlu0 %v1481, 111
      %v2173 = vpop.permute.xlu0 %2172
      %2174 = vrot.lane.b32.xlu0 %v1483, 111
      %v2175 = vpop.permute.xlu0 %2174
      %2176 = vrot.lane.b32.xlu0 %v1485, 111
      %v2177 = vpop.permute.xlu0 %2176
      %2178 = vrot.lane.b32.xlu0 %v1487, 111
      %v2179 = vpop.permute.xlu0 %2178
      %v2180 = vsel %vm477, %v2149, %v2165
      %v2181 = vsel %vm477, %v2151, %v2167
      %v2182 = vsel %vm477, %v2153, %v2169
      %v2183 = vsel %vm477, %v2155, %v2171
      %v2184 = vsel %vm477, %v2157, %v2173
      %v2185 = vsel %vm477, %v2159, %v2175
      %v2186 = vsel %vm477, %v2161, %v2177
      %v2187 = vsel %vm477, %v2163, %v2179
      %v2188 = vsel %vm477, %v2165, %v2149
      %v2189 = vsel %vm477, %v2167, %v2151
      %v2190 = vsel %vm477, %v2169, %v2153
      %v2191 = vsel %vm477, %v2171, %v2155
      %v2192 = vsel %vm477, %v2173, %v2157
      %v2193 = vsel %vm477, %v2175, %v2159
      %v2194 = vsel %vm477, %v2177, %v2161
      %v2195 = vsel %vm477, %v2179, %v2163
      %v2196 = vld [vmem:[%s480] ss:$8 sm:$0x3]
      %v2198 = vlaneseq
      %v2199 = vshrl.u32 %v2198, 7
      %v2200 = vsub.s32 0, %v2199
      %v2201 = vrot.slane %v2196, %v2200
      %v2202 = vlaneseq
      %v2203 = vshrl.u32 %v2202, 7
      %v2204 = vsub.s32 1, %v2203
      %v2205 = vrot.slane %v2196, %v2204
      %v2208 = vmul.f32 %v2180, %v2201
      %v2209 = vmul.f32 %v2188, %v2205
      %v2210 = vmul.f32 %v2181, %v2201
      %v2211 = vmul.f32 %v2189, %v2205
      %v2212 = vmul.f32 %v2182, %v2201
      %v2213 = vmul.f32 %v2190, %v2205
      %v2214 = vmul.f32 %v2183, %v2201
      %v2215 = vmul.f32 %v2191, %v2205
      %v2216 = vmul.f32 %v2184, %v2201
      %v2217 = vmul.f32 %v2192, %v2205
      %v2218 = vmul.f32 %v2185, %v2201
      %v2219 = vmul.f32 %v2193, %v2205
      %v2220 = vmul.f32 %v2186, %v2201
      %v2221 = vmul.f32 %v2194, %v2205
      %v2222 = vmul.f32 %v2187, %v2201
      %v2223 = vmul.f32 %v2195, %v2205
      %2224 = vst [vmem:[#allocation3 + $0x400] sm:$0xff] %v2208
      %2225 = vst [vmem:[#allocation3 + $0x408] sm:$0xff] %v2209
      %2226 = vst [vmem:[#allocation3 + $0x410] sm:$0xff] %v2210
      %2227 = vst [vmem:[#allocation3 + $0x418] sm:$0xff] %v2211
      %2228 = vst [vmem:[#allocation3 + $0x420] sm:$0xff] %v2212
      %2229 = vst [vmem:[#allocation3 + $0x428] sm:$0xff] %v2213
      %2230 = vst [vmem:[#allocation3 + $0x430] sm:$0xff] %v2214
      %2231 = vst [vmem:[#allocation3 + $0x438] sm:$0xff] %v2215
      %2232 = vst [vmem:[#allocation3 + $0x440] sm:$0xff] %v2216
      %2233 = vst [vmem:[#allocation3 + $0x448] sm:$0xff] %v2217
      %2234 = vst [vmem:[#allocation3 + $0x450] sm:$0xff] %v2218
      %2235 = vst [vmem:[#allocation3 + $0x458] sm:$0xff] %v2219
      %2236 = vst [vmem:[#allocation3 + $0x460] sm:$0xff] %v2220
      %2237 = vst [vmem:[#allocation3 + $0x468] sm:$0xff] %v2221
      %2238 = vst [vmem:[#allocation3 + $0x470] sm:$0xff] %v2222
      %2239 = vst [vmem:[#allocation3 + $0x478] sm:$0xff] %v2223
      %v2240 = vld [vmem:[%s4] sm:$0xff]
      %v2241 = vld [vmem:[%s4 + $0x8] sm:$0xff]
      %v2242 = vld [vmem:[%s4 + $0x10] sm:$0xff]
      %v2243 = vld [vmem:[%s4 + $0x18] sm:$0xff]
      %v2244 = vld [vmem:[%s4 + $0x20] sm:$0xff]
      %v2245 = vld [vmem:[%s4 + $0x28] sm:$0xff]
      %v2246 = vld [vmem:[%s4 + $0x30] sm:$0xff]
      %v2247 = vld [vmem:[%s4 + $0x38] sm:$0xff]
      %v2248 = vld [vmem:[%s4 + $0x40] sm:$0xff]
      %v2249 = vld [vmem:[%s4 + $0x48] sm:$0xff]
      %v2250 = vld [vmem:[%s4 + $0x50] sm:$0xff]
      %v2251 = vld [vmem:[%s4 + $0x58] sm:$0xff]
      %v2252 = vld [vmem:[%s4 + $0x60] sm:$0xff]
      %v2253 = vld [vmem:[%s4 + $0x68] sm:$0xff]
      %v2254 = vld [vmem:[%s4 + $0x70] sm:$0xff]
      %v2255 = vld [vmem:[%s4 + $0x78] sm:$0xff]
      %v2256 = vld [vmem:[%s4 + $0x80] sm:$0xff]
      %v2257 = vld [vmem:[%s4 + $0x88] sm:$0xff]
      %v2258 = vld [vmem:[%s4 + $0x90] sm:$0xff]
      %v2259 = vld [vmem:[%s4 + $0x98] sm:$0xff]
      %v2260 = vld [vmem:[#allocation3] sm:$0xff]
      %v2261 = vld [vmem:[#allocation3 + $0x8] sm:$0xff]
      %v2262 = vld [vmem:[#allocation3 + $0x10] sm:$0xff]
      %v2263 = vld [vmem:[#allocation3 + $0x18] sm:$0xff]
      %v2264 = vld [vmem:[#allocation3 + $0x20] sm:$0xff]
      %v2265 = vld [vmem:[#allocation3 + $0x28] sm:$0xff]
      %v2266 = vld [vmem:[#allocation3 + $0x30] sm:$0xff]
      %v2267 = vld [vmem:[#allocation3 + $0x38] sm:$0xff]
      %v2268 = vld [vmem:[#allocation3 + $0x40] sm:$0xff]
      %v2269 = vld [vmem:[#allocation3 + $0x48] sm:$0xff]
      %v2270 = vld [vmem:[#allocation3 + $0x50] sm:$0xff]
      %v2271 = vld [vmem:[#allocation3 + $0x58] sm:$0xff]
      %v2272 = vld [vmem:[#allocation3 + $0x60] sm:$0xff]
      %v2273 = vld [vmem:[#allocation3 + $0x68] sm:$0xff]
      %v2274 = vld [vmem:[#allocation3 + $0x70] sm:$0xff]
      %v2275 = vld [vmem:[#allocation3 + $0x78] sm:$0xff]
      %v2276 = vld [vmem:[#allocation3 + $0x80] sm:$0xff]
      %v2277 = vld [vmem:[#allocation3 + $0x88] sm:$0xff]
      %v2278 = vld [vmem:[#allocation3 + $0x90] sm:$0xff]
      %v2279 = vld [vmem:[#allocation3 + $0x98] sm:$0xff]
      %v2280 = vld [vmem:[#allocation3 + $0xa0] sm:$0xff]
      %v2281 = vld [vmem:[#allocation3 + $0xa8] sm:$0xff]
      %v2282 = vld [vmem:[#allocation3 + $0xb0] sm:$0xff]
      %v2283 = vld [vmem:[#allocation3 + $0xb8] sm:$0xff]
      %v2284 = vld [vmem:[#allocation3 + $0xc0] sm:$0xff]
      %v2285 = vld [vmem:[#allocation3 + $0xc8] sm:$0xff]
      %v2286 = vld [vmem:[#allocation3 + $0xd0] sm:$0xff]
      %v2287 = vld [vmem:[#allocation3 + $0xd8] sm:$0xff]
      %v2288 = vld [vmem:[#allocation3 + $0xe0] sm:$0xff]
      %v2289 = vld [vmem:[#allocation3 + $0xe8] sm:$0xff]
      %v2290 = vld [vmem:[#allocation3 + $0xf0] sm:$0xff]
      %v2291 = vld [vmem:[#allocation3 + $0xf8] sm:$0xff]
      %v2292 = vld [vmem:[#allocation3 + $0x100] sm:$0xff]
      %v2293 = vld [vmem:[#allocation3 + $0x108] sm:$0xff]
      %v2294 = vld [vmem:[#allocation3 + $0x110] sm:$0xff]
      %v2295 = vld [vmem:[#allocation3 + $0x118] sm:$0xff]
      %v2296 = vld [vmem:[#allocation3 + $0x120] sm:$0xff]
      %v2297 = vld [vmem:[#allocation3 + $0x128] sm:$0xff]
      %v2298 = vld [vmem:[#allocation3 + $0x130] sm:$0xff]
      %v2299 = vld [vmem:[#allocation3 + $0x138] sm:$0xff]
      %v2300 = vld [vmem:[#allocation3 + $0x140] sm:$0xff]
      %v2301 = vld [vmem:[#allocation3 + $0x148] sm:$0xff]
      %v2302 = vld [vmem:[#allocation3 + $0x150] sm:$0xff]
      %v2303 = vld [vmem:[#allocation3 + $0x158] sm:$0xff]
      %v2304 = vld [vmem:[#allocation3 + $0x160] sm:$0xff]
      %v2305 = vld [vmem:[#allocation3 + $0x168] sm:$0xff]
      %v2306 = vld [vmem:[#allocation3 + $0x170] sm:$0xff]
      %v2307 = vld [vmem:[#allocation3 + $0x178] sm:$0xff]
      %v2308 = vld [vmem:[#allocation3 + $0x180] sm:$0xff]
      %v2309 = vld [vmem:[#allocation3 + $0x188] sm:$0xff]
      %v2310 = vld [vmem:[#allocation3 + $0x190] sm:$0xff]
      %v2311 = vld [vmem:[#allocation3 + $0x198] sm:$0xff]
      %v2312 = vld [vmem:[#allocation3 + $0x1a0] sm:$0xff]
      %v2313 = vld [vmem:[#allocation3 + $0x1a8] sm:$0xff]
      %v2314 = vld [vmem:[#allocation3 + $0x1b0] sm:$0xff]
      %v2315 = vld [vmem:[#allocation3 + $0x1b8] sm:$0xff]
      %v2316 = vld [vmem:[#allocation3 + $0x1c0] sm:$0xff]
      %v2317 = vld [vmem:[#allocation3 + $0x1c8] sm:$0xff]
      %v2318 = vld [vmem:[#allocation3 + $0x1d0] sm:$0xff]
      %v2319 = vld [vmem:[#allocation3 + $0x1d8] sm:$0xff]
      %v2320 = vld [vmem:[#allocation3 + $0x1e0] sm:$0xff]
      %v2321 = vld [vmem:[#allocation3 + $0x1e8] sm:$0xff]
      %v2322 = vld [vmem:[#allocation3 + $0x1f0] sm:$0xff]
      %v2323 = vld [vmem:[#allocation3 + $0x1f8] sm:$0xff]
      %v2324 = vld [vmem:[#allocation3 + $0x200] sm:$0xff]
      %v2325 = vld [vmem:[#allocation3 + $0x208] sm:$0xff]
      %v2326 = vld [vmem:[#allocation3 + $0x210] sm:$0xff]
      %v2327 = vld [vmem:[#allocation3 + $0x218] sm:$0xff]
      %v2328 = vld [vmem:[#allocation3 + $0x220] sm:$0xff]
      %v2329 = vld [vmem:[#allocation3 + $0x228] sm:$0xff]
      %v2330 = vld [vmem:[#allocation3 + $0x230] sm:$0xff]
      %v2331 = vld [vmem:[#allocation3 + $0x238] sm:$0xff]
      %v2332 = vld [vmem:[#allocation3 + $0x240] sm:$0xff]
      %v2333 = vld [vmem:[#allocation3 + $0x248] sm:$0xff]
      %v2334 = vld [vmem:[#allocation3 + $0x250] sm:$0xff]
      %v2335 = vld [vmem:[#allocation3 + $0x258] sm:$0xff]
      %v2336 = vld [vmem:[#allocation3 + $0x260] sm:$0xff]
      %v2337 = vld [vmem:[#allocation3 + $0x268] sm:$0xff]
      %v2338 = vld [vmem:[#allocation3 + $0x270] sm:$0xff]
      %v2339 = vld [vmem:[#allocation3 + $0x278] sm:$0xff]
      %v2340 = vld [vmem:[#allocation3 + $0x280] sm:$0xff]
      %v2341 = vld [vmem:[#allocation3 + $0x288] sm:$0xff]
      %v2342 = vld [vmem:[#allocation3 + $0x290] sm:$0xff]
      %v2343 = vld [vmem:[#allocation3 + $0x298] sm:$0xff]
      %v2344 = vld [vmem:[#allocation3 + $0x2a0] sm:$0xff]
      %v2345 = vld [vmem:[#allocation3 + $0x2a8] sm:$0xff]
      %v2346 = vld [vmem:[#allocation3 + $0x2b0] sm:$0xff]
      %v2347 = vld [vmem:[#allocation3 + $0x2b8] sm:$0xff]
      %v2348 = vld [vmem:[#allocation3 + $0x2c0] sm:$0xff]
      %v2349 = vld [vmem:[#allocation3 + $0x2c8] sm:$0xff]
      %v2350 = vld [vmem:[#allocation3 + $0x2d0] sm:$0xff]
      %v2351 = vld [vmem:[#allocation3 + $0x2d8] sm:$0xff]
      %v2352 = vld [vmem:[#allocation3 + $0x2e0] sm:$0xff]
      %v2353 = vld [vmem:[#allocation3 + $0x2e8] sm:$0xff]
      %v2354 = vld [vmem:[#allocation3 + $0x2f0] sm:$0xff]
      %v2355 = vld [vmem:[#allocation3 + $0x2f8] sm:$0xff]
      %v2356 = vld [vmem:[#allocation3 + $0x300] sm:$0xff]
      %v2357 = vld [vmem:[#allocation3 + $0x308] sm:$0xff]
      %v2358 = vld [vmem:[#allocation3 + $0x310] sm:$0xff]
      %v2359 = vld [vmem:[#allocation3 + $0x318] sm:$0xff]
      %v2360 = vld [vmem:[#allocation3 + $0x320] sm:$0xff]
      %v2361 = vld [vmem:[#allocation3 + $0x328] sm:$0xff]
      %v2362 = vld [vmem:[#allocation3 + $0x330] sm:$0xff]
      %v2363 = vld [vmem:[#allocation3 + $0x338] sm:$0xff]
      %v2364 = vld [vmem:[#allocation3 + $0x340] sm:$0xff]
      %v2365 = vld [vmem:[#allocation3 + $0x348] sm:$0xff]
      %v2366 = vld [vmem:[#allocation3 + $0x350] sm:$0xff]
      %v2367 = vld [vmem:[#allocation3 + $0x358] sm:$0xff]
      %v2368 = vld [vmem:[#allocation3 + $0x360] sm:$0xff]
      %v2369 = vld [vmem:[#allocation3 + $0x368] sm:$0xff]
      %v2370 = vld [vmem:[#allocation3 + $0x370] sm:$0xff]
      %v2371 = vld [vmem:[#allocation3 + $0x378] sm:$0xff]
      %v2372 = vld [vmem:[#allocation3 + $0x380] sm:$0xff]
      %v2373 = vld [vmem:[#allocation3 + $0x388] sm:$0xff]
      %v2374 = vld [vmem:[#allocation3 + $0x390] sm:$0xff]
      %v2375 = vld [vmem:[#allocation3 + $0x398] sm:$0xff]
      %v2376 = vld [vmem:[#allocation3 + $0x3a0] sm:$0xff]
      %v2377 = vld [vmem:[#allocation3 + $0x3a8] sm:$0xff]
      %v2378 = vld [vmem:[#allocation3 + $0x3b0] sm:$0xff]
      %v2379 = vld [vmem:[#allocation3 + $0x3b8] sm:$0xff]
      %v2380 = vld [vmem:[#allocation3 + $0x3c0] sm:$0xff]
      %v2381 = vld [vmem:[#allocation3 + $0x3c8] sm:$0xff]
      %v2382 = vld [vmem:[#allocation3 + $0x3d0] sm:$0xff]
      %v2383 = vld [vmem:[#allocation3 + $0x3d8] sm:$0xff]
      %v2384 = vld [vmem:[#allocation3 + $0x3e0] sm:$0xff]
      %v2385 = vld [vmem:[#allocation3 + $0x3e8] sm:$0xff]
      %v2386 = vld [vmem:[#allocation3 + $0x3f0] sm:$0xff]
      %v2387 = vld [vmem:[#allocation3 + $0x3f8] sm:$0xff]
      %v2388 = vld [vmem:[#allocation3 + $0x400] sm:$0xff]
      %v2389 = vld [vmem:[#allocation3 + $0x408] sm:$0xff]
      %v2390 = vld [vmem:[#allocation3 + $0x410] sm:$0xff]
      %v2391 = vld [vmem:[#allocation3 + $0x418] sm:$0xff]
      %v2392 = vld [vmem:[#allocation3 + $0x420] sm:$0xff]
      %v2393 = vld [vmem:[#allocation3 + $0x428] sm:$0xff]
      %v2394 = vld [vmem:[#allocation3 + $0x430] sm:$0xff]
      %v2395 = vld [vmem:[#allocation3 + $0x438] sm:$0xff]
      %v2396 = vld [vmem:[#allocation3 + $0x440] sm:$0xff]
      %v2397 = vld [vmem:[#allocation3 + $0x448] sm:$0xff]
      %v2398 = vld [vmem:[#allocation3 + $0x450] sm:$0xff]
      %v2399 = vld [vmem:[#allocation3 + $0x458] sm:$0xff]
      %v2400 = vld [vmem:[#allocation3 + $0x460] sm:$0xff]
      %v2401 = vld [vmem:[#allocation3 + $0x468] sm:$0xff]
      %v2402 = vld [vmem:[#allocation3 + $0x470] sm:$0xff]
      %v2403 = vld [vmem:[#allocation3 + $0x478] sm:$0xff]
      %v2404 = vld [vmem:[%s6 + $0x60] sm:$0xff]
      %v2405 = vld [vmem:[%s6 + $0x68] sm:$0xff]
      %v2406 = vld [vmem:[%s6 + $0x70] sm:$0xff]
      %v2407 = vld [vmem:[%s6 + $0x78] sm:$0xff]
      %2409 = vset.pattern.permute.xlu0 0
      %2410 = vperm.xlu0 %2409, %v2404
      %v2411 = vpop.permute.xlu0 %2410
      %2414 = vset.pattern.permute.xlu0 0
      %2415 = vperm.xlu0 %2414, %v2405
      %v2416 = vpop.permute.xlu0 %2415
      %2419 = vset.pattern.permute.xlu0 0
      %2420 = vperm.xlu0 %2419, %v2406
      %v2421 = vpop.permute.xlu0 %2420
      %2424 = vset.pattern.permute.xlu0 0
      %2425 = vperm.xlu0 %2424, %v2407
      %v2426 = vpop.permute.xlu0 %2425
      %vm2428 = vcmask 523264
      %v2430 = vsel %vm2428, %v2244, 0
      %v2433 = vsel %vm2428, %v2249, 0
      %v2436 = vsel %vm2428, %v2254, 0
      %v2439 = vsel %vm2428, %v2259, 0
      %2441 = vmatprep.subr.mxu0 %v2261
      %2442 = vmatpush1.msra.mxu0 %v2260
      %2443 = vmatprep.subr.mxu0 %v2263
      %2444 = vmatpush1.msra.mxu0 %v2262
      %2445 = vmatprep.subr.mxu0 %v2265
      %2446 = vmatpush1.msra.mxu0 %v2264
      %2447 = vmatprep.subr.mxu0 %v2267
      %2448 = vmatpush1.msra.mxu0 %v2266
      %2449 = vmatprep.subr.mxu0 %v2269
      %2450 = vmatpush1.msra.mxu0 %v2268
      %2451 = vmatprep.subr.mxu0 %v2271
      %2452 = vmatpush1.msra.mxu0 %v2270
      %2453 = vmatprep.subr.mxu0 %v2273
      %2454 = vmatpush1.msra.mxu0 %v2272
      %2455 = vmatprep.subr.mxu0 %v2275
      %2456 = vmatpush1.msra.mxu0 %v2274
      %2457 = vmatprep.subr.mxu0 %v2277
      %2458 = vmatpush1.msra.mxu0 %v2276
      %2459 = vmatprep.subr.mxu0 %v2279
      %2460 = vmatpush1.msra.mxu0 %v2278
      %2461 = vmatprep.subr.mxu0 %v2281
      %2462 = vmatpush1.msra.mxu0 %v2280
      %2463 = vmatprep.subr.mxu0 %v2283
      %2464 = vmatpush1.msra.mxu0 %v2282
      %2465 = vmatprep.subr.mxu0 %v2285
      %2466 = vmatpush1.msra.mxu0 %v2284
      %2467 = vmatprep.subr.mxu0 %v2287
      %2468 = vmatpush1.msra.mxu0 %v2286
      %2469 = vmatprep.subr.mxu0 %v2289
      %2470 = vmatpush1.msra.mxu0 %v2288
      %2471 = vmatprep.subr.mxu0 %v2291
      %2472 = vmatpush1.msra.mxu0 %v2290
      %2473 = vmatprep.subr.mxu0 %v2293
      %2474 = vmatpush1.msra.mxu0 %v2292
      %2475 = vmatprep.subr.mxu0 %v2295
      %2476 = vmatpush1.msra.mxu0 %v2294
      %2477 = vmatprep.subr.mxu0 %v2297
      %2478 = vmatpush1.msra.mxu0 %v2296
      %2479 = vmatprep.subr.mxu0 %v2299
      %2480 = vmatpush1.msra.mxu0 %v2298
      %2481 = vmatprep.subr.mxu0 %v2301
      %2482 = vmatpush1.msra.mxu0 %v2300
      %2483 = vmatprep.subr.mxu0 %v2303
      %2484 = vmatpush1.msra.mxu0 %v2302
      %2485 = vmatprep.subr.mxu0 %v2305
      %2486 = vmatpush1.msra.mxu0 %v2304
      %2487 = vmatprep.subr.mxu0 %v2307
      %2488 = vmatpush1.msra.mxu0 %v2306
      %2489 = vmatprep.subr.mxu0 %v2309
      %2490 = vmatpush1.msra.mxu0 %v2308
      %2491 = vmatprep.subr.mxu0 %v2311
      %2492 = vmatpush1.msra.mxu0 %v2310
      %2493 = vmatprep.subr.mxu0 %v2313
      %2494 = vmatpush1.msra.mxu0 %v2312
      %2495 = vmatprep.subr.mxu0 %v2315
      %2496 = vmatpush1.msra.mxu0 %v2314
      %2497 = vmatprep.subr.mxu0 %v2317
      %2498 = vmatpush1.msra.mxu0 %v2316
      %2499 = vmatprep.subr.mxu0 %v2319
      %2500 = vmatpush1.msra.mxu0 %v2318
      %2501 = vmatprep.subr.mxu0 %v2321
      %2502 = vmatpush1.msra.mxu0 %v2320
      %2503 = vmatprep.subr.mxu0 %v2323
      %2504 = vmatpush1.msra.mxu0 %v2322
      %2505 = vmatprep.mubr.f32.mxu0 %v2241
      %2506 = vmatmul.mubr.f32.gmra.mrb[0].mxu0 %v2240
      %v2507 = vpop.f32.mrb[0].mxu0
      %v2508 = vadd.f32 %v2411, %v2507
      %v2509 = vpop.f32.mrb[0].mxu0
      %v2510 = vadd.f32 %v2411, %v2509
      %2511 = vmatprep.mubr.f32.mxu0 %v2246
      %2512 = vmatmul.mubr.f32.gmra.mrb[0].mxu0 %v2245
      %v2513 = vpop.f32.mrb[0].mxu0
      %v2514 = vadd.f32 %v2416, %v2513
      %v2515 = vpop.f32.mrb[0].mxu0
      %v2516 = vadd.f32 %v2416, %v2515
      %2517 = vmatprep.mubr.f32.mxu0 %v2251
      %2518 = vmatmul.mubr.f32.gmra.mrb[0].mxu0 %v2250
      %v2519 = vpop.f32.mrb[0].mxu0
      %v2520 = vadd.f32 %v2421, %v2519
      %v2521 = vpop.f32.mrb[0].mxu0
      %v2522 = vadd.f32 %v2421, %v2521
      %2523 = vmatprep.mubr.f32.mxu0 %v2256
      %2524 = vmatmul.mubr.f32.gmra.mrb[0].mxu0 %v2255
      %v2525 = vpop.f32.mrb[0].mxu0
      %v2526 = vadd.f32 %v2426, %v2525
      %v2527 = vpop.f32.mrb[0].mxu0
      %v2528 = vadd.f32 %v2426, %v2527
      %2529 = vdwg.mxu0
      %2530 = vmatprep.subr.mxu0 %v2325
      %2531 = vmatpush1.msra.mxu0 %v2324
      %2532 = vmatprep.subr.mxu0 %v2327
      %2533 = vmatpush1.msra.mxu0 %v2326
      %2534 = vmatprep.subr.mxu0 %v2329
      %2535 = vmatpush1.msra.mxu0 %v2328
      %2536 = vmatprep.subr.mxu0 %v2331
      %2537 = vmatpush1.msra.mxu0 %v2330
      %2538 = vmatprep.subr.mxu0 %v2333
      %2539 = vmatpush1.msra.mxu0 %v2332
      %2540 = vmatprep.subr.mxu0 %v2335
      %2541 = vmatpush1.msra.mxu0 %v2334
      %2542 = vmatprep.subr.mxu0 %v2337
      %2543 = vmatpush1.msra.mxu0 %v2336
      %2544 = vmatprep.subr.mxu0 %v2339
      %2545 = vmatpush1.msra.mxu0 %v2338
      %2546 = vmatprep.subr.mxu0 %v2341
      %2547 = vmatpush1.msra.mxu0 %v2340
      %2548 = vmatprep.subr.mxu0 %v2343
      %2549 = vmatpush1.msra.mxu0 %v2342
      %2550 = vmatprep.subr.mxu0 %v2345
      %2551 = vmatpush1.msra.mxu0 %v2344
      %2552 = vmatprep.subr.mxu0 %v2347
      %2553 = vmatpush1.msra.mxu0 %v2346
      %2554 = vmatprep.subr.mxu0 %v2349
      %2555 = vmatpush1.msra.mxu0 %v2348
      %2556 = vmatprep.subr.mxu0 %v2351
      %2557 = vmatpush1.msra.mxu0 %v2350
      %2558 = vmatprep.subr.mxu0 %v2353
      %2559 = vmatpush1.msra.mxu0 %v2352
      %2560 = vmatprep.subr.mxu0 %v2355
      %2561 = vmatpush1.msra.mxu0 %v2354
      %2562 = vmatprep.subr.mxu0 %v2357
      %2563 = vmatpush1.msra.mxu0 %v2356
      %2564 = vmatprep.subr.mxu0 %v2359
      %2565 = vmatpush1.msra.mxu0 %v2358
      %2566 = vmatprep.subr.mxu0 %v2361
      %2567 = vmatpush1.msra.mxu0 %v2360
      %2568 = vmatprep.subr.mxu0 %v2363
      %2569 = vmatpush1.msra.mxu0 %v2362
      %2570 = vmatprep.subr.mxu0 %v2365
      %2571 = vmatpush1.msra.mxu0 %v2364
      %2572 = vmatprep.subr.mxu0 %v2367
      %2573 = vmatpush1.msra.mxu0 %v2366
      %2574 = vmatprep.subr.mxu0 %v2369
      %2575 = vmatpush1.msra.mxu0 %v2368
      %2576 = vmatprep.subr.mxu0 %v2371
      %2577 = vmatpush1.msra.mxu0 %v2370
      %2578 = vmatprep.subr.mxu0 %v2373
      %2579 = vmatpush1.msra.mxu0 %v2372
      %2580 = vmatprep.subr.mxu0 %v2375
      %2581 = vmatpush1.msra.mxu0 %v2374
      %2582 = vmatprep.subr.mxu0 %v2377
      %2583 = vmatpush1.msra.mxu0 %v2376
      %2584 = vmatprep.subr.mxu0 %v2379
      %2585 = vmatpush1.msra.mxu0 %v2378
      %2586 = vmatprep.subr.mxu0 %v2381
      %2587 = vmatpush1.msra.mxu0 %v2380
      %2588 = vmatprep.subr.mxu0 %v2383
      %2589 = vmatpush1.msra.mxu0 %v2382
      %2590 = vmatprep.subr.mxu0 %v2385
      %2591 = vmatpush1.msra.mxu0 %v2384
      %2592 = vmatprep.subr.mxu0 %v2387
      %2593 = vmatpush1.msra.mxu0 %v2386
      %2594 = vmatprep.mubr.f32.mxu0 %v2243
      %2595 = vmatmul.mubr.f32.gmra.mrb[0].mxu0 %v2242
      %v2596 = vpop.f32.mrb[0].mxu0
      %v2597 = vadd.f32 %v2508, %v2596
      %v2598 = vpop.f32.mrb[0].mxu0
      %v2599 = vadd.f32 %v2510, %v2598
      %2600 = vmatprep.mubr.f32.mxu0 %v2248
      %2601 = vmatmul.mubr.f32.gmra.mrb[0].mxu0 %v2247
      %v2602 = vpop.f32.mrb[0].mxu0
      %v2603 = vadd.f32 %v2514, %v2602
      %v2604 = vpop.f32.mrb[0].mxu0
      %v2605 = vadd.f32 %v2516, %v2604
      %2606 = vmatprep.mubr.f32.mxu0 %v2253
      %2607 = vmatmul.mubr.f32.gmra.mrb[0].mxu0 %v2252
      %v2608 = vpop.f32.mrb[0].mxu0
      %v2609 = vadd.f32 %v2520, %v2608
      %v2610 = vpop.f32.mrb[0].mxu0
      %v2611 = vadd.f32 %v2522, %v2610
      %2612 = vmatprep.mubr.f32.mxu0 %v2258
      %2613 = vmatmul.mubr.f32.gmra.mrb[0].mxu0 %v2257
      %v2614 = vpop.f32.mrb[0].mxu0
      %v2615 = vadd.f32 %v2526, %v2614
      %v2616 = vpop.f32.mrb[0].mxu0
      %v2617 = vadd.f32 %v2528, %v2616
      %2618 = vdwg.mxu0
      %2619 = vmatprep.subr.mxu0 %v2389
      %2620 = vmatpush1.msra.mxu0 %v2388
      %2621 = vmatprep.subr.mxu0 %v2391
      %2622 = vmatpush1.msra.mxu0 %v2390
      %2623 = vmatprep.subr.mxu0 %v2393
      %2624 = vmatpush1.msra.mxu0 %v2392
      %2625 = vmatprep.subr.mxu0 %v2395
      %2626 = vmatpush1.msra.mxu0 %v2394
      %2627 = vmatprep.subr.mxu0 %v2397
      %2628 = vmatpush1.msra.mxu0 %v2396
      %2629 = vmatprep.subr.mxu0 %v2399
      %2630 = vmatpush1.msra.mxu0 %v2398
      %2631 = vmatprep.subr.mxu0 %v2401
      %2632 = vmatpush1.msra.mxu0 %v2400
      %2633 = vmatprep.subr.mxu0 %v2403
      %2634 = vmatpush1.msra.mxu0 %v2402
      %2635 = vmatprep.subr.mxu0 0.0
      %2636 = vmatpush1.msra.mxu0 0.0
      %2637 = vmatprep.subr.mxu0 0.0
      %2638 = vmatpush1.msra.mxu0 0.0
      %2639 = vmatprep.subr.mxu0 0.0
      %2640 = vmatpush1.msra.mxu0 0.0
      %2641 = vmatprep.subr.mxu0 0.0
      %2642 = vmatpush1.msra.mxu0 0.0
      %2643 = vmatprep.subr.mxu0 0.0
      %2644 = vmatpush1.msra.mxu0 0.0
      %2645 = vmatprep.subr.mxu0 0.0
      %2646 = vmatpush1.msra.mxu0 0.0
      %2647 = vmatprep.subr.mxu0 0.0
      %2648 = vmatpush1.msra.mxu0 0.0
      %2649 = vmatprep.subr.mxu0 0.0
      %2650 = vmatpush1.msra.mxu0 0.0
      %2651 = vmatprep.subr.mxu0 0.0
      %2652 = vmatpush1.msra.mxu0 0.0
      %2653 = vmatprep.subr.mxu0 0.0
      %2654 = vmatpush1.msra.mxu0 0.0
      %2655 = vmatprep.subr.mxu0 0.0
      %2656 = vmatpush1.msra.mxu0 0.0
      %2657 = vmatprep.subr.mxu0 0.0
      %2658 = vmatpush1.msra.mxu0 0.0
      %2659 = vmatprep.subr.mxu0 0.0
      %2660 = vmatpush1.msra.mxu0 0.0
      %2661 = vmatprep.subr.mxu0 0.0
      %2662 = vmatpush1.msra.mxu0 0.0
      %2663 = vmatprep.subr.mxu0 0.0
      %2664 = vmatpush1.msra.mxu0 0.0
      %2665 = vmatprep.subr.mxu0 0.0
      %2666 = vmatpush1.msra.mxu0 0.0
      %2667 = vmatprep.subr.mxu0 0.0
      %2668 = vmatpush1.msra.mxu0 0.0
      %2669 = vmatprep.subr.mxu0 0.0
      %2670 = vmatpush1.msra.mxu0 0.0
      %2671 = vmatprep.subr.mxu0 0.0
      %2672 = vmatpush1.msra.mxu0 0.0
      %2673 = vmatprep.subr.mxu0 0.0
      %2674 = vmatpush1.msra.mxu0 0.0
      %2675 = vmatprep.subr.mxu0 0.0
      %2676 = vmatpush1.msra.mxu0 0.0
      %2677 = vmatprep.subr.mxu0 0.0
      %2678 = vmatpush1.msra.mxu0 0.0
      %2679 = vmatprep.subr.mxu0 0.0
      %2680 = vmatpush1.msra.mxu0 0.0
      %2681 = vmatprep.subr.mxu0 0.0
      %2682 = vmatpush1.msra.mxu0 0.0
      %2683 = vmatprep.mubr.f32.mxu0 0.0
      %2684 = vmatmul.mubr.f32.gmra.mrb[0].mxu0 %v2430
      %v2685 = vpop.f32.mrb[0].mxu0
      %v2686 = vadd.f32 %v2597, %v2685
      %v2687 = vpop.f32.mrb[0].mxu0
      %v2688 = vadd.f32 %v2599, %v2687
      %2689 = vmatprep.mubr.f32.mxu0 0.0
      %2690 = vmatmul.mubr.f32.gmra.mrb[0].mxu0 %v2433
      %v2691 = vpop.f32.mrb[0].mxu0
      %v2692 = vadd.f32 %v2603, %v2691
      %v2693 = vpop.f32.mrb[0].mxu0
      %v2694 = vadd.f32 %v2605, %v2693
      %2695 = vmatprep.mubr.f32.mxu0 0.0
      %2696 = vmatmul.mubr.f32.gmra.mrb[0].mxu0 %v2436
      %v2697 = vpop.f32.mrb[0].mxu0
      %v2698 = vadd.f32 %v2609, %v2697
      %v2699 = vpop.f32.mrb[0].mxu0
      %v2700 = vadd.f32 %v2611, %v2699
      %2701 = vmatprep.mubr.f32.mxu0 0.0
      %2702 = vmatmul.mubr.f32.gmra.mrb[0].mxu0 %v2439
      %v2703 = vpop.f32.mrb[0].mxu0
      %v2704 = vadd.f32 %v2615, %v2703
      %v2705 = vpop.f32.mrb[0].mxu0
      %v2706 = vadd.f32 %v2617, %v2705
      %2707 = vdwg.mxu0
      %v2708 = vmax.f32 %v2686, 0.0
      %v2709 = vmax.f32 %v2688, 0.0
      %v2710 = vmax.f32 %v2692, 0.0
      %v2711 = vmax.f32 %v2694, 0.0
      %v2712 = vmax.f32 %v2698, 0.0
      %v2713 = vmax.f32 %v2700, 0.0
      %v2714 = vmax.f32 %v2704, 0.0
      %v2715 = vmax.f32 %v2706, 0.0
      %v2716 = vld [vmem:[%s5] sm:$0x1]
      %v2717 = vld [vmem:[%s6 + $0x80] sm:$0x1]
      %2719 = vset.pattern.permute.xlu0 0
      %2720 = vperm.xlu0 %2719, %v2717
      %v2721 = vpop.permute.xlu0 %2720
      %v2724 = vsel %vm1221, %v2716, 0
      %2726 = vmatprep.subr.mxu0 %v2709
      %2727 = vmatpush1.msra.mxu0 %v2708
      %2728 = vmatprep.subr.mxu0 %v2711
      %2729 = vmatpush1.msra.mxu0 %v2710
      %2730 = vmatprep.subr.mxu0 %v2713
      %2731 = vmatpush1.msra.mxu0 %v2712
      %2732 = vmatprep.subr.mxu0 %v2715
      %2733 = vmatpush1.msra.mxu0 %v2714
      %2734 = vmatprep.subr.mxu0 0.0
      %2735 = vmatpush1.msra.mxu0 0.0
      %2736 = vmatprep.subr.mxu0 0.0
      %2737 = vmatpush1.msra.mxu0 0.0
      %2738 = vmatprep.subr.mxu0 0.0
      %2739 = vmatpush1.msra.mxu0 0.0
      %2740 = vmatprep.subr.mxu0 0.0
      %2741 = vmatpush1.msra.mxu0 0.0
      %2742 = vmatprep.subr.mxu0 0.0
      %2743 = vmatpush1.msra.mxu0 0.0
      %2744 = vmatprep.subr.mxu0 0.0
      %2745 = vmatpush1.msra.mxu0 0.0
      %2746 = vmatprep.subr.mxu0 0.0
      %2747 = vmatpush1.msra.mxu0 0.0
      %2748 = vmatprep.subr.mxu0 0.0
      %2749 = vmatpush1.msra.mxu0 0.0
      %2750 = vmatprep.subr.mxu0 0.0
      %2751 = vmatpush1.msra.mxu0 0.0
      %2752 = vmatprep.subr.mxu0 0.0
      %2753 = vmatpush1.msra.mxu0 0.0
      %2754 = vmatprep.subr.mxu0 0.0
      %2755 = vmatpush1.msra.mxu0 0.0
      %2756 = vmatprep.subr.mxu0 0.0
      %2757 = vmatpush1.msra.mxu0 0.0
      %2758 = vmatprep.subr.mxu0 0.0
      %2759 = vmatpush1.msra.mxu0 0.0
      %2760 = vmatprep.subr.mxu0 0.0
      %2761 = vmatpush1.msra.mxu0 0.0
      %2762 = vmatprep.subr.mxu0 0.0
      %2763 = vmatpush1.msra.mxu0 0.0
      %2764 = vmatprep.subr.mxu0 0.0
      %2765 = vmatpush1.msra.mxu0 0.0
      %2766 = vmatprep.subr.mxu0 0.0
      %2767 = vmatpush1.msra.mxu0 0.0
      %2768 = vmatprep.subr.mxu0 0.0
      %2769 = vmatpush1.msra.mxu0 0.0
      %2770 = vmatprep.subr.mxu0 0.0
      %2771 = vmatpush1.msra.mxu0 0.0
      %2772 = vmatprep.subr.mxu0 0.0
      %2773 = vmatpush1.msra.mxu0 0.0
      %2774 = vmatprep.subr.mxu0 0.0
      %2775 = vmatpush1.msra.mxu0 0.0
      %2776 = vmatprep.subr.mxu0 0.0
      %2777 = vmatpush1.msra.mxu0 0.0
      %2778 = vmatprep.subr.mxu0 0.0
      %2779 = vmatpush1.msra.mxu0 0.0
      %2780 = vmatprep.subr.mxu0 0.0
      %2781 = vmatpush1.msra.mxu0 0.0
      %2782 = vmatprep.subr.mxu0 0.0
      %2783 = vmatpush1.msra.mxu0 0.0
      %2784 = vmatprep.subr.mxu0 0.0
      %2785 = vmatpush1.msra.mxu0 0.0
      %2786 = vmatprep.subr.mxu0 0.0
      %2787 = vmatpush1.msra.mxu0 0.0
      %2788 = vmatprep.subr.mxu0 0.0
      %2789 = vmatpush1.msra.mxu0 0.0
      %2790 = vmatprep.mubr.f32.mxu0 0.0
      %2791 = vmatmul.mubr.f32.gmra.mrb[0].mxu0 %v2724
      %v2792 = vpop.f32.mrb[0].mxu0
      %v2793 = vadd.f32 %v2721, %v2792
      %v2794 = vpop.f32.mrb[0].mxu0
      %v2795 = vadd.f32 %v2721, %v2794
      %2796 = vdwg.mxu0
      %v2799 = vcombine.low %v2793, %v2795
      %v2801 = vunpack.c.l.s4 1966171168
      %v2802 = vunpack.c.0.s8 %v2801
      %v2803 = vlaneseq
      %v2804 = vshrl.u32 %v2803, 7
      %v2805 = vsub.s32 %v2802, %v2804
      %v2806 = vrot.slane %v2799, %v2805
      %v2808 = vunpack.c.l.s4 1966171168
      %v2809 = vunpack.c.0.s8 %v2808
      %v2810 = vlaneseq
      %v2811 = vshrl.u32 %v2810, 7
      %v2812 = vsub.s32 %v2809, %v2811
      %v2813 = vrot.slane %v2806, %v2812
      %v2815 = vlaneseq
      %vm2816 = vcmp.ge.s32.totalorder %v2815, 0
      %vm2817 = vcmp.lt.s32.totalorder %v2815, 256
      %vm2818 = vmand %vm2816, %vm2817
      %2819 = vst.msk [vmem:[%s278] sm:$0x3] %vm2818, %v2813
      %s2820 = smul.u32 2, %s18
      %p2821 = scmp.lt.s32.totalorder %s2820, 3
      %s2822 = scalar_select %p2821, %s2820, 3
      %s2823 = scalar_lea.vmem %s7, %s2822
      // Predicated region
      $region49: #{mini_unet_forward.1} parent=47 // pred_check
        %p2824 = pneg %p188
      $region50: #{mini_unet_forward.1} parent=47 // pred_check_branch
        %2826 = sbr.rel (%p2824) target = $region52
      $region51: #{mini_unet_forward.1} parent=47 // pred_region
        %s2827 = smul.u32 2, %s18
      $region52: #{mini_unet_forward.1} parent=47 // pred_fallthru
        _
    $region48: #{mini_unet_forward.1} parent=5 // pred_fallthru
      _
    %p2828 = scmp.le.s32.totalorder 2, %s13
    // Predicated region
    $region53: #{mini_unet_forward.1} parent=5 // pred_check
      %p2829 = pneg %p2828
    $region54: #{mini_unet_forward.1} parent=5 // pred_check_branch
      %2831 = sbr.rel (%p2829) target = $region56
    $region55: #{mini_unet_forward.1} parent=5 // pred_region
      %s2832 = ssub.s32 %s13, 2
      // Predicated region
      $region57: #{mini_unet_forward.1} parent=55 // pred_check
        %p2833 = pneg %p194
      $region58: #{mini_unet_forward.1} parent=55 // pred_check_branch
        %2835 = sbr.rel (%p2833) target = $region60
      $region59: #{mini_unet_forward.1} parent=55 // pred_region
        %s2836 = smul.u32 2, %s19
        %p2837 = scmp.lt.s32.totalorder %s2836, 3
        %s2838 = scalar_select %p2837, %s2836, 3
        %s2839 = scalar_lea.vmem %s7, %s2838
      $region60: #{mini_unet_forward.1} parent=55 // pred_fallthru
        _
    $region56: #{mini_unet_forward.1} parent=5 // pred_fallthru
      _
  $region6: #{mini_unet_forward.1} parent=0 // loop_footer
    %s17 = sadd.s32 1, %s13
  $region7: #{mini_unet_forward.1} parent=0 // loop_footer_branch
    %12 = sbr.rel target = $region3
  $region8: #{mini_unet_forward.1} parent=0 // loop_exit
    _

</llo_original>
